<compile_context>
chip_gen: v5e
topology: v5e:2x2
jax: 0.10.0
libtpu: 0.0.40
codegen_flags: <defaults>
</compile_context>

<pallas_src>
import jax
import jax.numpy as jnp
from jax.experimental import pallas as pl
from jax.experimental.pallas import tpu as pltpu

EPS = 1e-5  # BatchNorm2d / BatchScale2d default eps


def _vmem_limit_bytes():
    """Generation-aware scoped-VMEM cap (v7x: 64 MiB physical per TC)."""
    try:
        cap = pltpu.get_tpu_info().vmem_capacity_bytes
        return int(min(cap // 2, 64 * 1024 * 1024))
    except Exception:
        return 32 * 1024 * 1024


def _pick_row_tile(H, W, Cin, Cout, KH, KW, pad, budget_bytes):
    """Largest TH dividing H (multiple of 2*pad for the halo block), whose
    double-buffered pipeline footprint fits the budget; prefer >=2 tiles/image
    so the pipeline has steps to overlap (matters on single-TC v5e/v6e)."""
    step = 2 * pad
    K = KH * KW * Cin
    Wp = W + 2 * (KW // 2)

    def footprint(th):
        body = th * Wp * Cin * 2
        halo = step * Wp * Cin * 2
        outb = th * W * Cout * 4
        xrow = (th + step) * Wp * Cin * 2
        lhs = th * W * max(K, 128) * 2
        conv = th * W * max(Cout, 128) * 4
        return 2 * (body + halo + outb) + xrow + lhs + 2 * conv

    cands = [t for t in range(step, H + 1, step)
             if H % t == 0 and footprint(t) <= budget_bytes]
    if not cands:
        raise ValueError("No feasible row tile for the VMEM budget; "
                         "reduce W/Cin or raise the VMEM limit.")
    multi = [t for t in cands if H // t >= 2]
    return max(multi) if multi else max(cands)


def _conv_tile(body_ref, halo_ref, w_ref, xrow_ref, lhs_ref, TH, W, KH, KW):
    """Conv of one (TH x W) row tile as ONE MXU matmul.

    body_ref: (1, TH,   Wp, Cin) bf16   padded rows [t*TH, t*TH+TH)
    halo_ref: (1, 2p,   Wp, Cin) bf16   padded rows [t*TH+TH, t*TH+TH+2p)
    w_ref:    (KH*KW*Cin, Cout)  bf16   taps packed along the contraction axis
    xrow_ref: (TH+2p, Wp, Cin)   bf16   VMEM scratch (stitched window)
    lhs_ref:  (TH*W, KH*KW*Cin)  bf16   VMEM scratch (packed LHS)
    returns:  (TH*W, Cout) f32 conv (no bias)
    """
    cin = body_ref.shape[-1]
    halo = 2 * (KH // 2)
    # stitch body + bottom halo rows into one window (VMEM-only copies, tiny)
    xrow_ref[0:TH] = body_ref[0]
    xrow_ref[TH:TH + halo] = halo_ref[0]
    # pack (kh, kw, ci) into the contraction lanes of the LHS
    for kh in range(KH):
        for kw in range(KW):
            c0 = (kh * KW + kw) * cin
            lhs_ref[:, c0:c0 + cin] = (
                xrow_ref[kh:kh + TH, kw:kw + W, :].reshape(TH * W, cin))
    # one fat-K matmul, f32 accumulation in a value (no output-ref RMW)
    return jnp.dot(lhs_ref[...], w_ref[...], preferred_element_type=jnp.float32)


def _make_stats_kernel(TH, W, KH, KW):
    """Pass 1: per-tile channel sum + mean-centered M2 (no conv to HBM)."""
    def kernel(body_ref, halo_ref, w_ref, s_ref, m2_ref, xrow_ref, lhs_ref):
        conv = _conv_tile(body_ref, halo_ref, w_ref, xrow_ref, lhs_ref,
                          TH, W, KH, KW)                       # (TH*W, Cout) f32
        s = jnp.sum(conv, axis=0, keepdims=True)               # (1, Cout)
        mean = s * (1.0 / (TH * W))
        d = conv - mean
        m2 = jnp.sum(d * d, axis=0, keepdims=True)             # (1, Cout)
        s_ref[...] = s.reshape(s_ref.shape)
        m2_ref[...] = m2.reshape(m2_ref.shape)
    return kernel


def _make_conv_scale_kernel(TH, W, KH, KW):
    """Pass 2: recompute conv for the tile and emit the final scaled output."""
    def kernel(body_ref, halo_ref, w_ref, scale_ref, shift_ref, out_ref,
               xrow_ref, lhs_ref):
        conv = _conv_tile(body_ref, halo_ref, w_ref, xrow_ref, lhs_ref,
                          TH, W, KH, KW)                       # (TH*W, Cout) f32
        # out = (conv + bias) * scale  ==  conv*scale + bias*scale
        y = conv * scale_ref[...] + shift_ref[...]
        out_ref[...] = y.reshape(out_ref.shape).astype(out_ref.dtype)
    return kernel


@jax.jit
def rescale_layer_forward(x_nchw, conv_w, conv_b, gamma, running_var,
                          momentum=0.1):
    """Forward of RescaleLayer (training mode, track_running_stats=True).

    x_nchw: [N, Cin, H, W] f32 ; conv_w: [Cout, Cin, KH, KW] OIHW, 'same', stride 1
    Returns (y_nchw f32, new_running_var).
    """
    N, Cin, H, W = x_nchw.shape
    Cout, _, KH, KW = conv_w.shape
    ph, pw = KH // 2, KW // 2
    assert KH % 2 == 1 and KW % 2 == 1 and ph >= 1, \
        "odd 'same' conv with K >= 3 expected"  # TODO(synk): 1x1 conv path
    assert W % 8 == 0, "W must be a multiple of 8 (sublane tiling)"
    assert H % (2 * ph) == 0, "H must be a multiple of 2*pad for halo tiling"

    Hp, Wp = H + 2 * ph, W + 2 * pw
    M = N * H * W
    K = KH * KW * Cin

    vmem_limit = _vmem_limit_bytes()
    TH = _pick_row_tile(H, W, Cin, Cout, KH, KW, ph, vmem_limit // 2)
    nT = H // TH
    halo_rows = 2 * ph
    halo_step = TH // halo_rows            # halo block index stride (TH % 2p == 0)

    # ---- glue: NHWC + zero pad, bf16 MXU feeds, taps packed along K ----------
    # TODO(synk): bf16 operands (f32 accumulate) differ from a pure-fp32 torch
    # conv; switch to an fp32 (3-pass) matmul if exact fp32 parity is required.
    xp = jnp.transpose(x_nchw, (0, 2, 3, 1))
    xp = jnp.pad(xp, ((0, 0), (ph, ph), (pw, pw), (0, 0))).astype(jnp.bfloat16)
    w_cat = jnp.transpose(conv_w, (2, 3, 1, 0)).reshape(K, Cout).astype(jnp.bfloat16)

    body_spec = pl.BlockSpec((1, TH, Wp, Cin), lambda n, t: (n, t, 0, 0))
    halo_spec = pl.BlockSpec((1, halo_rows, Wp, Cin),
                             lambda n, t: (n, (t + 1) * halo_step, 0, 0))
    w_spec = pl.BlockSpec((K, Cout), lambda n, t: (0, 0))
    scratches = [pltpu.VMEM((TH + halo_rows, Wp, Cin), jnp.bfloat16),
                 pltpu.VMEM((TH * W, K), jnp.bfloat16)]
    cparams = pltpu.CompilerParams(
        dimension_semantics=("parallel", "parallel"),
        vmem_limit_bytes=vmem_limit)

    # ---- pass 1: stats only (conv intermediate never touches HBM) ------------
    s_t, m2_t = pl.pallas_call(
        _make_stats_kernel(TH, W, KH, KW),
        out_shape=(jax.ShapeDtypeStruct((N, nT, 1, Cout), jnp.float32),
                   jax.ShapeDtypeStruct((N, nT, 1, Cout), jnp.float32)),
        grid=(N, nT),
        in_specs=[body_spec, halo_spec, w_spec],
        out_specs=(pl.BlockSpec((1, 1, 1, Cout), lambda n, t: (n, t, 0, 0)),
                   pl.BlockSpec((1, 1, 1, Cout), lambda n, t: (n, t, 0, 0))),
        scratch_shapes=scratches,
        compiler_params=cparams,
    )(xp, xp, w_cat)

    # ---- tiny Chan combine -> exact global UNBIASED variance (torch .var) ----
    cnt = TH * W
    s_i = s_t.reshape(N * nT, Cout)
    m2_i = m2_t.reshape(N * nT, Cout)
    mean_i = s_i * (1.0 / cnt)
    gmean = jnp.sum(s_i, axis=0) * (1.0 / M)
    m2 = jnp.sum(m2_i, axis=0) + cnt * jnp.sum((mean_i - gmean) ** 2, axis=0)
    var = m2 * (1.0 / (M - 1))             # BatchScale2d uses input.var(...) (unbiased)
    scale = jax.lax.rsqrt(var + EPS) * gamma
    shift = conv_b * scale                 # bias folded into the epilogue
    scale2d = scale.reshape(1, Cout).astype(jnp.float32)
    shift2d = shift.reshape(1, Cout).astype(jnp.float32)

    # ---- pass 2: recompute conv per tile, write final scaled NHWC output -----
    vec_spec = pl.BlockSpec((1, Cout), lambda n, t: (0, 0))
    y_nhwc = pl.pallas_call(
        _make_conv_scale_kernel(TH, W, KH, KW),
        out_shape=jax.ShapeDtypeStruct((N, H, W, Cout), jnp.float32),
        grid=(N, nT),
        in_specs=[body_spec, halo_spec, w_spec, vec_spec, vec_spec],
        out_specs=pl.BlockSpec((1, TH, W, Cout), lambda n, t: (n, t, 0, 0)),
        scratch_shapes=scratches,
        compiler_params=cparams,
    )(xp, xp, w_cat, scale2d, shift2d)

    y = jnp.transpose(y_nhwc, (0, 3, 1, 2))            # NCHW, minimal-size buffer

    # stateful BatchNorm buffer update (EMA), returned functionally.
    # TODO(synk): num_batches_tracked increment is Python-side bookkeeping.
    new_running_var = (1.0 - momentum) * running_var + momentum * var
    return y, new_running_var


if __name__ == "__main__":
    key = jax.random.PRNGKey(0)
    k_x, k_w, k_b, k_g = jax.random.split(key, 4)

    N, Cin, H, W = 2, 4, 16, 16
    Cout, KH, KW = 8, 3, 3

    x = jax.random.normal(k_x, (N, Cin, H, W), dtype=jnp.float32)
    conv_w = jax.random.normal(k_w, (Cout, Cin, KH, KW), dtype=jnp.float32) * 0.1
    conv_b = jax.random.normal(k_b, (Cout,), dtype=jnp.float32) * 0.1
    gamma = jnp.abs(jax.random.normal(k_g, (Cout,), dtype=jnp.float32)) + 0.5
    running_var = jnp.ones((Cout,), dtype=jnp.float32)

    y, new_rv = rescale_layer_forward(x, conv_w, conv_b, gamma, running_var)
    y = jax.block_until_ready(y)
    new_rv = jax.block_until_ready(new_rv)

    # pure-JAX reference; mirror the kernel's bf16 input quantization so the
    # only difference is f32 accumulation order.
    xq = x.astype(jnp.bfloat16).astype(jnp.float32)
    wq = conv_w.astype(jnp.bfloat16).astype(jnp.float32)
    conv_ref = jax.lax.conv_general_dilated(
        xq, wq, window_strides=(1, 1), padding="SAME",
        dimension_numbers=("NCHW", "OIHW", "NCHW"),
        precision=jax.lax.Precision.HIGHEST,
    ) + conv_b[None, :, None, None]
    var_ref = jnp.var(conv_ref, axis=(0, 2, 3), ddof=1)       # unbiased, like torch
    y_ref = conv_ref / jnp.sqrt(var_ref[None, :, None, None] + EPS) \
        * gamma[None, :, None, None]
    rv_ref = 0.9 * running_var + 0.1 * var_ref

    assert jnp.allclose(y, y_ref, atol=2e-4, rtol=2e-4), "output mismatch"
    assert jnp.allclose(new_rv, rv_ref, atol=2e-4, rtol=2e-4), "running_var mismatch"

    print("KERNEL_OK")
</pallas_src>

<mosaic_0001>
module attributes {stable_mosaic.version = 11 : i64} {
  func.func @kernel(%arg0: i32, %arg1: i32, %arg2: memref<1x8x18x4xbf16, #tpu.memory_space<vmem>>, %arg3: memref<1x2x18x4xbf16, #tpu.memory_space<vmem>>, %arg4: memref<36x8xbf16, #tpu.memory_space<vmem>>, %arg5: memref<1x1x1x8xf32, #tpu.memory_space<vmem>>, %arg6: memref<1x1x1x8xf32, #tpu.memory_space<vmem>>, %arg7: memref<10x18x4xbf16, #tpu.memory_space<vmem>>, %arg8: memref<128x36xbf16, #tpu.memory_space<vmem>>) attributes {dimension_semantics = [#tpu.dimension_semantics<parallel>, #tpu.dimension_semantics<parallel>], iteration_bounds = array<i64: 2, 2>, scalar_prefetch = 0 : i64, scratch_operands = 2 : i64, tpu.core_type = #tpu.core_type<tc>, window_params = [{transform_indices = @transform_0, window_bounds = array<i64: 1, 8, 18, 4>}, {transform_indices = @transform_1, window_bounds = array<i64: 1, 2, 18, 4>}, {pipeline_mode = #tpu.pipeline_mode<synchronous>, transform_indices = @transform_2, window_bounds = array<i64: 36, 8>}, {transform_indices = @transform_3, window_bounds = array<i64: 1, 1, 1, 8>}, {transform_indices = @transform_4, window_bounds = array<i64: 1, 1, 1, 8>}]} {
    %c0 = arith.constant 0 : index
    %c0_0 = arith.constant 0 : index
    %c0_1 = arith.constant 0 : index
    %c0_2 = arith.constant 0 : index
    %0 = vector.load %arg2[%c0, %c0_0, %c0_1, %c0_2] : memref<1x8x18x4xbf16, #tpu.memory_space<vmem>>, vector<1x8x18x4xbf16>
    %1 = vector.shape_cast %0 : vector<1x8x18x4xbf16> to vector<8x18x4xbf16>
    %c0_3 = arith.constant 0 : index
    %c0_4 = arith.constant 0 : index
    %c0_5 = arith.constant 0 : index
    %2 = vector.load %arg7[%c0_3, %c0_4, %c0_5] : memref<10x18x4xbf16, #tpu.memory_space<vmem>>, vector<8x18x4xbf16>
    tpu.vector_store %arg7[%c0_3, %c0_4, %c0_5], %1 {strides = array<i32>} : memref<10x18x4xbf16, #tpu.memory_space<vmem>>, vector<8x18x4xbf16>,
    %c0_6 = arith.constant 0 : index
    %c0_7 = arith.constant 0 : index
    %c0_8 = arith.constant 0 : index
    %c0_9 = arith.constant 0 : index
    %3 = vector.load %arg3[%c0_6, %c0_7, %c0_8, %c0_9] : memref<1x2x18x4xbf16, #tpu.memory_space<vmem>>, vector<1x2x18x4xbf16>
    %4 = vector.shape_cast %3 : vector<1x2x18x4xbf16> to vector<2x18x4xbf16>
    %c8 = arith.constant 8 : index
    %c0_10 = arith.constant 0 : index
    %c0_11 = arith.constant 0 : index
    %5 = vector.load %arg7[%c8, %c0_10, %c0_11] : memref<10x18x4xbf16, #tpu.memory_space<vmem>>, vector<2x18x4xbf16>
    tpu.vector_store %arg7[%c8, %c0_10, %c0_11], %4 {strides = array<i32>} : memref<10x18x4xbf16, #tpu.memory_space<vmem>>, vector<2x18x4xbf16>,
    %c0_12 = arith.constant 0 : index
    %c0_13 = arith.constant 0 : index
    %c0_14 = arith.constant 0 : index
    %6 = vector.load %arg7[%c0_12, %c0_13, %c0_14] : memref<10x18x4xbf16, #tpu.memory_space<vmem>>, vector<8x16x4xbf16>
    %7 = vector.shape_cast %6 : vector<8x16x4xbf16> to vector<128x4xbf16>
    %c0_15 = arith.constant 0 : index
    %c0_16 = arith.constant 0 : index
    %8 = vector.load %arg8[%c0_15, %c0_16] : memref<128x36xbf16, #tpu.memory_space<vmem>>, vector<128x4xbf16>
    tpu.vector_store %arg8[%c0_15, %c0_16], %7 {strides = array<i32>} : memref<128x36xbf16, #tpu.memory_space<vmem>>, vector<128x4xbf16>,
    %c0_17 = arith.constant 0 : index
    %c1 = arith.constant 1 : index
    %c0_18 = arith.constant 0 : index
    %9 = vector.load %arg7[%c0_17, %c1, %c0_18] : memref<10x18x4xbf16, #tpu.memory_space<vmem>>, vector<8x16x4xbf16>
    %10 = vector.shape_cast %9 : vector<8x16x4xbf16> to vector<128x4xbf16>
    %c0_19 = arith.constant 0 : index
    %c4 = arith.constant 4 : index
    %11 = vector.load %arg8[%c0_19, %c4] : memref<128x36xbf16, #tpu.memory_space<vmem>>, vector<128x4xbf16>
    tpu.vector_store %arg8[%c0_19, %c4], %10 {strides = array<i32>} : memref<128x36xbf16, #tpu.memory_space<vmem>>, vector<128x4xbf16>,
    %c0_20 = arith.constant 0 : index
    %c2 = arith.constant 2 : index
    %c0_21 = arith.constant 0 : index
    %12 = vector.load %arg7[%c0_20, %c2, %c0_21] : memref<10x18x4xbf16, #tpu.memory_space<vmem>>, vector<8x16x4xbf16>
    %13 = vector.shape_cast %12 : vector<8x16x4xbf16> to vector<128x4xbf16>
    %c0_22 = arith.constant 0 : index
    %c8_23 = arith.constant 8 : index
    %14 = vector.load %arg8[%c0_22, %c8_23] : memref<128x36xbf16, #tpu.memory_space<vmem>>, vector<128x4xbf16>
    tpu.vector_store %arg8[%c0_22, %c8_23], %13 {strides = array<i32>} : memref<128x36xbf16, #tpu.memory_space<vmem>>, vector<128x4xbf16>,
    %c1_24 = arith.constant 1 : index
    %c0_25 = arith.constant 0 : index
    %c0_26 = arith.constant 0 : index
    %15 = vector.load %arg7[%c1_24, %c0_25, %c0_26] : memref<10x18x4xbf16, #tpu.memory_space<vmem>>, vector<8x16x4xbf16>
    %16 = vector.shape_cast %15 : vector<8x16x4xbf16> to vector<128x4xbf16>
    %c0_27 = arith.constant 0 : index
    %c12 = arith.constant 12 : index
    %17 = vector.load %arg8[%c0_27, %c12] : memref<128x36xbf16, #tpu.memory_space<vmem>>, vector<128x4xbf16>
    tpu.vector_store %arg8[%c0_27, %c12], %16 {strides = array<i32>} : memref<128x36xbf16, #tpu.memory_space<vmem>>, vector<128x4xbf16>,
    %c1_28 = arith.constant 1 : index
    %c1_29 = arith.constant 1 : index
    %c0_30 = arith.constant 0 : index
    %18 = vector.load %arg7[%c1_28, %c1_29, %c0_30] : memref<10x18x4xbf16, #tpu.memory_space<vmem>>, vector<8x16x4xbf16>
    %19 = vector.shape_cast %18 : vector<8x16x4xbf16> to vector<128x4xbf16>
    %c0_31 = arith.constant 0 : index
    %c16 = arith.constant 16 : index
    %20 = vector.load %arg8[%c0_31, %c16] : memref<128x36xbf16, #tpu.memory_space<vmem>>, vector<128x4xbf16>
    tpu.vector_store %arg8[%c0_31, %c16], %19 {strides = array<i32>} : memref<128x36xbf16, #tpu.memory_space<vmem>>, vector<128x4xbf16>,
    %c1_32 = arith.constant 1 : index
    %c2_33 = arith.constant 2 : index
    %c0_34 = arith.constant 0 : index
    %21 = vector.load %arg7[%c1_32, %c2_33, %c0_34] : memref<10x18x4xbf16, #tpu.memory_space<vmem>>, vector<8x16x4xbf16>
    %22 = vector.shape_cast %21 : vector<8x16x4xbf16> to vector<128x4xbf16>
    %c0_35 = arith.constant 0 : index
    %c20 = arith.constant 20 : index
    %23 = vector.load %arg8[%c0_35, %c20] : memref<128x36xbf16, #tpu.memory_space<vmem>>, vector<128x4xbf16>
    tpu.vector_store %arg8[%c0_35, %c20], %22 {strides = array<i32>} : memref<128x36xbf16, #tpu.memory_space<vmem>>, vector<128x4xbf16>,
    %c2_36 = arith.constant 2 : index
    %c0_37 = arith.constant 0 : index
    %c0_38 = arith.constant 0 : index
    %24 = vector.load %arg7[%c2_36, %c0_37, %c0_38] : memref<10x18x4xbf16, #tpu.memory_space<vmem>>, vector<8x16x4xbf16>
    %25 = vector.shape_cast %24 : vector<8x16x4xbf16> to vector<128x4xbf16>
    %c0_39 = arith.constant 0 : index
    %c24 = arith.constant 24 : index
    %26 = vector.load %arg8[%c0_39, %c24] : memref<128x36xbf16, #tpu.memory_space<vmem>>, vector<128x4xbf16>
    tpu.vector_store %arg8[%c0_39, %c24], %25 {strides = array<i32>} : memref<128x36xbf16, #tpu.memory_space<vmem>>, vector<128x4xbf16>,
    %c2_40 = arith.constant 2 : index
    %c1_41 = arith.constant 1 : index
    %c0_42 = arith.constant 0 : index
    %27 = vector.load %arg7[%c2_40, %c1_41, %c0_42] : memref<10x18x4xbf16, #tpu.memory_space<vmem>>, vector<8x16x4xbf16>
    %28 = vector.shape_cast %27 : vector<8x16x4xbf16> to vector<128x4xbf16>
    %c0_43 = arith.constant 0 : index
    %c28 = arith.constant 28 : index
    %29 = vector.load %arg8[%c0_43, %c28] : memref<128x36xbf16, #tpu.memory_space<vmem>>, vector<128x4xbf16>
    tpu.vector_store %arg8[%c0_43, %c28], %28 {strides = array<i32>} : memref<128x36xbf16, #tpu.memory_space<vmem>>, vector<128x4xbf16>,
    %c2_44 = arith.constant 2 : index
    %c2_45 = arith.constant 2 : index
    %c0_46 = arith.constant 0 : index
    %30 = vector.load %arg7[%c2_44, %c2_45, %c0_46] : memref<10x18x4xbf16, #tpu.memory_space<vmem>>, vector<8x16x4xbf16>
    %31 = vector.shape_cast %30 : vector<8x16x4xbf16> to vector<128x4xbf16>
    %c0_47 = arith.constant 0 : index
    %c32 = arith.constant 32 : index
    %32 = vector.load %arg8[%c0_47, %c32] : memref<128x36xbf16, #tpu.memory_space<vmem>>, vector<128x4xbf16>
    tpu.vector_store %arg8[%c0_47, %c32], %31 {strides = array<i32>} : memref<128x36xbf16, #tpu.memory_space<vmem>>, vector<128x4xbf16>,
    %c0_48 = arith.constant 0 : index
    %c0_49 = arith.constant 0 : index
    %33 = vector.load %arg8[%c0_48, %c0_49] : memref<128x36xbf16, #tpu.memory_space<vmem>>, vector<128x36xbf16>
    %c0_50 = arith.constant 0 : index
    %c0_51 = arith.constant 0 : index
    %34 = vector.load %arg4[%c0_50, %c0_51] : memref<36x8xbf16, #tpu.memory_space<vmem>>, vector<36x8xbf16>
    %cst = arith.constant dense<0.000000e+00> : vector<128x8xf32>
    %35 = tpu.matmul %33, %34, %cst {dimension_numbers = #tpu.dot_dimension_numbers<[1], [0], [0], [1], [0, 0, 1, 1], [], []>} : vector<128x36xbf16>, vector<36x8xbf16>, vector<128x8xf32> -> vector<128x8xf32>
    %cst_52 = arith.constant dense<0.000000e+00> : vector<8xf32>
    %36 = vector.multi_reduction <add>, %35, %cst_52 [0] : vector<128x8xf32> to vector<8xf32>
    %37 = vector.shape_cast %36 : vector<8xf32> to vector<1x8xf32>
    %cst_53 = arith.constant 7.812500e-03 : f32
    %38 = vector.broadcast %cst_53 : f32 to vector<1x8xf32>
    %39 = arith.mulf %37, %38 : vector<1x8xf32>
    %40 = vector.broadcast %39 : vector<1x8xf32> to vector<128x8xf32>
    %41 = arith.subf %35, %40 : vector<128x8xf32>
    %42 = arith.mulf %41, %41 : vector<128x8xf32>
    %cst_54 = arith.constant dense<0.000000e+00> : vector<8xf32>
    %43 = vector.multi_reduction <add>, %42, %cst_54 [0] : vector<128x8xf32> to vector<8xf32>
    %44 = vector.shape_cast %43 : vector<8xf32> to vector<1x8xf32>
    %45 = vector.shape_cast %37 : vector<1x8xf32> to vector<1x1x1x8xf32>
    %c0_55 = arith.constant 0 : index
    %c0_56 = arith.constant 0 : index
    %c0_57 = arith.constant 0 : index
    %c0_58 = arith.constant 0 : index
    %46 = vector.load %arg5[%c0_55, %c0_56, %c0_57, %c0_58] : memref<1x1x1x8xf32, #tpu.memory_space<vmem>>, vector<1x1x1x8xf32>
    tpu.vector_store %arg5[%c0_55, %c0_56, %c0_57, %c0_58], %45 {strides = array<i32>} : memref<1x1x1x8xf32, #tpu.memory_space<vmem>>, vector<1x1x1x8xf32>,
    %47 = vector.shape_cast %44 : vector<1x8xf32> to vector<1x1x1x8xf32>
    %c0_59 = arith.constant 0 : index
    %c0_60 = arith.constant 0 : index
    %c0_61 = arith.constant 0 : index
    %c0_62 = arith.constant 0 : index
    %48 = vector.load %arg6[%c0_59, %c0_60, %c0_61, %c0_62] : memref<1x1x1x8xf32, #tpu.memory_space<vmem>>, vector<1x1x1x8xf32>
    tpu.vector_store %arg6[%c0_59, %c0_60, %c0_61, %c0_62], %47 {strides = array<i32>} : memref<1x1x1x8xf32, #tpu.memory_space<vmem>>, vector<1x1x1x8xf32>,
    return
  }
  func.func @transform_0(%arg0: i32, %arg1: i32) -> (i32, i32, i32, i32) {
    %c0_i32 = arith.constant 0 : i32
    %c0_i32_0 = arith.constant 0 : i32
    %c0_i32_1 = arith.constant 0 : i32
    return %arg0, %arg1, %c0_i32, %c0_i32_0 : i32, i32, i32, i32
  }
  func.func @transform_1(%arg0: i32, %arg1: i32) -> (i32, i32, i32, i32) {
    %c1_i32 = arith.constant 1 : i32
    %0 = arith.addi %arg1, %c1_i32 : i32
    %c4_i32 = arith.constant 4 : i32
    %1 = arith.muli %0, %c4_i32 : i32
    %c0_i32 = arith.constant 0 : i32
    %c0_i32_0 = arith.constant 0 : i32
    %c0_i32_1 = arith.constant 0 : i32
    return %arg0, %1, %c0_i32, %c0_i32_0 : i32, i32, i32, i32
  }
  func.func @transform_2(%arg0: i32, %arg1: i32) -> (i32, i32) {
    %c0_i32 = arith.constant 0 : i32
    %c0_i32_0 = arith.constant 0 : i32
    %c0_i32_1 = arith.constant 0 : i32
    return %c0_i32, %c0_i32_0 : i32, i32
  }
  func.func @transform_3(%arg0: i32, %arg1: i32) -> (i32, i32, i32, i32) {
    %c0_i32 = arith.constant 0 : i32
    %c0_i32_0 = arith.constant 0 : i32
    %c0_i32_1 = arith.constant 0 : i32
    return %arg0, %arg1, %c0_i32, %c0_i32_0 : i32, i32, i32, i32
  }
  func.func @transform_4(%arg0: i32, %arg1: i32) -> (i32, i32, i32, i32) {
    %c0_i32 = arith.constant 0 : i32
    %c0_i32_0 = arith.constant 0 : i32
    %c0_i32_1 = arith.constant 0 : i32
    return %arg0, %arg1, %c0_i32, %c0_i32_0 : i32, i32, i32, i32
  }
}

module attributes {stable_mosaic.version = 11 : i64} {
  func.func @kernel(%arg0: i32, %arg1: i32, %arg2: memref<1x8x18x4xbf16, #tpu.memory_space<vmem>>, %arg3: memref<1x2x18x4xbf16, #tpu.memory_space<vmem>>, %arg4: memref<36x8xbf16, #tpu.memory_space<vmem>>, %arg5: memref<1x8xf32, #tpu.memory_space<vmem>>, %arg6: memref<1x8xf32, #tpu.memory_space<vmem>>, %arg7: memref<1x8x16x8xf32, #tpu.memory_space<vmem>>, %arg8: memref<10x18x4xbf16, #tpu.memory_space<vmem>>, %arg9: memref<128x36xbf16, #tpu.memory_space<vmem>>) attributes {dimension_semantics = [#tpu.dimension_semantics<parallel>, #tpu.dimension_semantics<parallel>], iteration_bounds = array<i64: 2, 2>, scalar_prefetch = 0 : i64, scratch_operands = 2 : i64, tpu.core_type = #tpu.core_type<tc>, window_params = [{transform_indices = @transform_0, window_bounds = array<i64: 1, 8, 18, 4>}, {transform_indices = @transform_1, window_bounds = array<i64: 1, 2, 18, 4>}, {pipeline_mode = #tpu.pipeline_mode<synchronous>, transform_indices = @transform_2, window_bounds = array<i64: 36, 8>}, {pipeline_mode = #tpu.pipeline_mode<synchronous>, transform_indices = @transform_3, window_bounds = array<i64: 1, 8>}, {pipeline_mode = #tpu.pipeline_mode<synchronous>, transform_indices = @transform_4, window_bounds = array<i64: 1, 8>}, {transform_indices = @transform_5, window_bounds = array<i64: 1, 8, 16, 8>}]} {
    %c0 = arith.constant 0 : index
    %c0_0 = arith.constant 0 : index
    %c0_1 = arith.constant 0 : index
    %c0_2 = arith.constant 0 : index
    %0 = vector.load %arg2[%c0, %c0_0, %c0_1, %c0_2] : memref<1x8x18x4xbf16, #tpu.memory_space<vmem>>, vector<1x8x18x4xbf16>
    %1 = vector.shape_cast %0 : vector<1x8x18x4xbf16> to vector<8x18x4xbf16>
    %c0_3 = arith.constant 0 : index
    %c0_4 = arith.constant 0 : index
    %c0_5 = arith.constant 0 : index
    %2 = vector.load %arg8[%c0_3, %c0_4, %c0_5] : memref<10x18x4xbf16, #tpu.memory_space<vmem>>, vector<8x18x4xbf16>
    tpu.vector_store %arg8[%c0_3, %c0_4, %c0_5], %1 {strides = array<i32>} : memref<10x18x4xbf16, #tpu.memory_space<vmem>>, vector<8x18x4xbf16>,
    %c0_6 = arith.constant 0 : index
    %c0_7 = arith.constant 0 : index
    %c0_8 = arith.constant 0 : index
    %c0_9 = arith.constant 0 : index
    %3 = vector.load %arg3[%c0_6, %c0_7, %c0_8, %c0_9] : memref<1x2x18x4xbf16, #tpu.memory_space<vmem>>, vector<1x2x18x4xbf16>
    %4 = vector.shape_cast %3 : vector<1x2x18x4xbf16> to vector<2x18x4xbf16>
    %c8 = arith.constant 8 : index
    %c0_10 = arith.constant 0 : index
    %c0_11 = arith.constant 0 : index
    %5 = vector.load %arg8[%c8, %c0_10, %c0_11] : memref<10x18x4xbf16, #tpu.memory_space<vmem>>, vector<2x18x4xbf16>
    tpu.vector_store %arg8[%c8, %c0_10, %c0_11], %4 {strides = array<i32>} : memref<10x18x4xbf16, #tpu.memory_space<vmem>>, vector<2x18x4xbf16>,
    %c0_12 = arith.constant 0 : index
    %c0_13 = arith.constant 0 : index
    %c0_14 = arith.constant 0 : index
    %6 = vector.load %arg8[%c0_12, %c0_13, %c0_14] : memref<10x18x4xbf16, #tpu.memory_space<vmem>>, vector<8x16x4xbf16>
    %7 = vector.shape_cast %6 : vector<8x16x4xbf16> to vector<128x4xbf16>
    %c0_15 = arith.constant 0 : index
    %c0_16 = arith.constant 0 : index
    %8 = vector.load %arg9[%c0_15, %c0_16] : memref<128x36xbf16, #tpu.memory_space<vmem>>, vector<128x4xbf16>
    tpu.vector_store %arg9[%c0_15, %c0_16], %7 {strides = array<i32>} : memref<128x36xbf16, #tpu.memory_space<vmem>>, vector<128x4xbf16>,
    %c0_17 = arith.constant 0 : index
    %c1 = arith.constant 1 : index
    %c0_18 = arith.constant 0 : index
    %9 = vector.load %arg8[%c0_17, %c1, %c0_18] : memref<10x18x4xbf16, #tpu.memory_space<vmem>>, vector<8x16x4xbf16>
    %10 = vector.shape_cast %9 : vector<8x16x4xbf16> to vector<128x4xbf16>
    %c0_19 = arith.constant 0 : index
    %c4 = arith.constant 4 : index
    %11 = vector.load %arg9[%c0_19, %c4] : memref<128x36xbf16, #tpu.memory_space<vmem>>, vector<128x4xbf16>
    tpu.vector_store %arg9[%c0_19, %c4], %10 {strides = array<i32>} : memref<128x36xbf16, #tpu.memory_space<vmem>>, vector<128x4xbf16>,
    %c0_20 = arith.constant 0 : index
    %c2 = arith.constant 2 : index
    %c0_21 = arith.constant 0 : index
    %12 = vector.load %arg8[%c0_20, %c2, %c0_21] : memref<10x18x4xbf16, #tpu.memory_space<vmem>>, vector<8x16x4xbf16>
    %13 = vector.shape_cast %12 : vector<8x16x4xbf16> to vector<128x4xbf16>
    %c0_22 = arith.constant 0 : index
    %c8_23 = arith.constant 8 : index
    %14 = vector.load %arg9[%c0_22, %c8_23] : memref<128x36xbf16, #tpu.memory_space<vmem>>, vector<128x4xbf16>
    tpu.vector_store %arg9[%c0_22, %c8_23], %13 {strides = array<i32>} : memref<128x36xbf16, #tpu.memory_space<vmem>>, vector<128x4xbf16>,
    %c1_24 = arith.constant 1 : index
    %c0_25 = arith.constant 0 : index
    %c0_26 = arith.constant 0 : index
    %15 = vector.load %arg8[%c1_24, %c0_25, %c0_26] : memref<10x18x4xbf16, #tpu.memory_space<vmem>>, vector<8x16x4xbf16>
    %16 = vector.shape_cast %15 : vector<8x16x4xbf16> to vector<128x4xbf16>
    %c0_27 = arith.constant 0 : index
    %c12 = arith.constant 12 : index
    %17 = vector.load %arg9[%c0_27, %c12] : memref<128x36xbf16, #tpu.memory_space<vmem>>, vector<128x4xbf16>
    tpu.vector_store %arg9[%c0_27, %c12], %16 {strides = array<i32>} : memref<128x36xbf16, #tpu.memory_space<vmem>>, vector<128x4xbf16>,
    %c1_28 = arith.constant 1 : index
    %c1_29 = arith.constant 1 : index
    %c0_30 = arith.constant 0 : index
    %18 = vector.load %arg8[%c1_28, %c1_29, %c0_30] : memref<10x18x4xbf16, #tpu.memory_space<vmem>>, vector<8x16x4xbf16>
    %19 = vector.shape_cast %18 : vector<8x16x4xbf16> to vector<128x4xbf16>
    %c0_31 = arith.constant 0 : index
    %c16 = arith.constant 16 : index
    %20 = vector.load %arg9[%c0_31, %c16] : memref<128x36xbf16, #tpu.memory_space<vmem>>, vector<128x4xbf16>
    tpu.vector_store %arg9[%c0_31, %c16], %19 {strides = array<i32>} : memref<128x36xbf16, #tpu.memory_space<vmem>>, vector<128x4xbf16>,
    %c1_32 = arith.constant 1 : index
    %c2_33 = arith.constant 2 : index
    %c0_34 = arith.constant 0 : index
    %21 = vector.load %arg8[%c1_32, %c2_33, %c0_34] : memref<10x18x4xbf16, #tpu.memory_space<vmem>>, vector<8x16x4xbf16>
    %22 = vector.shape_cast %21 : vector<8x16x4xbf16> to vector<128x4xbf16>
    %c0_35 = arith.constant 0 : index
    %c20 = arith.constant 20 : index
    %23 = vector.load %arg9[%c0_35, %c20] : memref<128x36xbf16, #tpu.memory_space<vmem>>, vector<128x4xbf16>
    tpu.vector_store %arg9[%c0_35, %c20], %22 {strides = array<i32>} : memref<128x36xbf16, #tpu.memory_space<vmem>>, vector<128x4xbf16>,
    %c2_36 = arith.constant 2 : index
    %c0_37 = arith.constant 0 : index
    %c0_38 = arith.constant 0 : index
    %24 = vector.load %arg8[%c2_36, %c0_37, %c0_38] : memref<10x18x4xbf16, #tpu.memory_space<vmem>>, vector<8x16x4xbf16>
    %25 = vector.shape_cast %24 : vector<8x16x4xbf16> to vector<128x4xbf16>
    %c0_39 = arith.constant 0 : index
    %c24 = arith.constant 24 : index
    %26 = vector.load %arg9[%c0_39, %c24] : memref<128x36xbf16, #tpu.memory_space<vmem>>, vector<128x4xbf16>
    tpu.vector_store %arg9[%c0_39, %c24], %25 {strides = array<i32>} : memref<128x36xbf16, #tpu.memory_space<vmem>>, vector<128x4xbf16>,
    %c2_40 = arith.constant 2 : index
    %c1_41 = arith.constant 1 : index
    %c0_42 = arith.constant 0 : index
    %27 = vector.load %arg8[%c2_40, %c1_41, %c0_42] : memref<10x18x4xbf16, #tpu.memory_space<vmem>>, vector<8x16x4xbf16>
    %28 = vector.shape_cast %27 : vector<8x16x4xbf16> to vector<128x4xbf16>
    %c0_43 = arith.constant 0 : index
    %c28 = arith.constant 28 : index
    %29 = vector.load %arg9[%c0_43, %c28] : memref<128x36xbf16, #tpu.memory_space<vmem>>, vector<128x4xbf16>
    tpu.vector_store %arg9[%c0_43, %c28], %28 {strides = array<i32>} : memref<128x36xbf16, #tpu.memory_space<vmem>>, vector<128x4xbf16>,
    %c2_44 = arith.constant 2 : index
    %c2_45 = arith.constant 2 : index
    %c0_46 = arith.constant 0 : index
    %30 = vector.load %arg8[%c2_44, %c2_45, %c0_46] : memref<10x18x4xbf16, #tpu.memory_space<vmem>>, vector<8x16x4xbf16>
    %31 = vector.shape_cast %30 : vector<8x16x4xbf16> to vector<128x4xbf16>
    %c0_47 = arith.constant 0 : index
    %c32 = arith.constant 32 : index
    %32 = vector.load %arg9[%c0_47, %c32] : memref<128x36xbf16, #tpu.memory_space<vmem>>, vector<128x4xbf16>
    tpu.vector_store %arg9[%c0_47, %c32], %31 {strides = array<i32>} : memref<128x36xbf16, #tpu.memory_space<vmem>>, vector<128x4xbf16>,
    %c0_48 = arith.constant 0 : index
    %c0_49 = arith.constant 0 : index
    %33 = vector.load %arg9[%c0_48, %c0_49] : memref<128x36xbf16, #tpu.memory_space<vmem>>, vector<128x36xbf16>
    %c0_50 = arith.constant 0 : index
    %c0_51 = arith.constant 0 : index
    %34 = vector.load %arg4[%c0_50, %c0_51] : memref<36x8xbf16, #tpu.memory_space<vmem>>, vector<36x8xbf16>
    %cst = arith.constant dense<0.000000e+00> : vector<128x8xf32>
    %35 = tpu.matmul %33, %34, %cst {dimension_numbers = #tpu.dot_dimension_numbers<[1], [0], [0], [1], [0, 0, 1, 1], [], []>} : vector<128x36xbf16>, vector<36x8xbf16>, vector<128x8xf32> -> vector<128x8xf32>
    %c0_52 = arith.constant 0 : index
    %c0_53 = arith.constant 0 : index
    %36 = vector.load %arg5[%c0_52, %c0_53] : memref<1x8xf32, #tpu.memory_space<vmem>>, vector<1x8xf32>
    %37 = vector.broadcast %36 : vector<1x8xf32> to vector<128x8xf32>
    %38 = arith.mulf %35, %37 : vector<128x8xf32>
    %c0_54 = arith.constant 0 : index
    %c0_55 = arith.constant 0 : index
    %39 = vector.load %arg6[%c0_54, %c0_55] : memref<1x8xf32, #tpu.memory_space<vmem>>, vector<1x8xf32>
    %40 = vector.broadcast %39 : vector<1x8xf32> to vector<128x8xf32>
    %41 = arith.addf %38, %40 : vector<128x8xf32>
    %42 = vector.shape_cast %41 : vector<128x8xf32> to vector<1x8x16x8xf32>
    %c0_56 = arith.constant 0 : index
    %c0_57 = arith.constant 0 : index
    %c0_58 = arith.constant 0 : index
    %c0_59 = arith.constant 0 : index
    %43 = vector.load %arg7[%c0_56, %c0_57, %c0_58, %c0_59] : memref<1x8x16x8xf32, #tpu.memory_space<vmem>>, vector<1x8x16x8xf32>
    tpu.vector_store %arg7[%c0_56, %c0_57, %c0_58, %c0_59], %42 {strides = array<i32>} : memref<1x8x16x8xf32, #tpu.memory_space<vmem>>, vector<1x8x16x8xf32>,
    return
  }
  func.func @transform_0(%arg0: i32, %arg1: i32) -> (i32, i32, i32, i32) {
    %c0_i32 = arith.constant 0 : i32
    %c0_i32_0 = arith.constant 0 : i32
    %c0_i32_1 = arith.constant 0 : i32
    return %arg0, %arg1, %c0_i32, %c0_i32_0 : i32, i32, i32, i32
  }
  func.func @transform_1(%arg0: i32, %arg1: i32) -> (i32, i32, i32, i32) {
    %c1_i32 = arith.constant 1 : i32
    %0 = arith.addi %arg1, %c1_i32 : i32
    %c4_i32 = arith.constant 4 : i32
    %1 = arith.muli %0, %c4_i32 : i32
    %c0_i32 = arith.constant 0 : i32
    %c0_i32_0 = arith.constant 0 : i32
    %c0_i32_1 = arith.constant 0 : i32
    return %arg0, %1, %c0_i32, %c0_i32_0 : i32, i32, i32, i32
  }
  func.func @transform_2(%arg0: i32, %arg1: i32) -> (i32, i32) {
    %c0_i32 = arith.constant 0 : i32
    %c0_i32_0 = arith.constant 0 : i32
    %c0_i32_1 = arith.constant 0 : i32
    return %c0_i32, %c0_i32_0 : i32, i32
  }
  func.func @transform_3(%arg0: i32, %arg1: i32) -> (i32, i32) {
    %c0_i32 = arith.constant 0 : i32
    %c0_i32_0 = arith.constant 0 : i32
    %c0_i32_1 = arith.constant 0 : i32
    return %c0_i32, %c0_i32_0 : i32, i32
  }
  func.func @transform_4(%arg0: i32, %arg1: i32) -> (i32, i32) {
    %c0_i32 = arith.constant 0 : i32
    %c0_i32_0 = arith.constant 0 : i32
    %c0_i32_1 = arith.constant 0 : i32
    return %c0_i32, %c0_i32_0 : i32, i32
  }
  func.func @transform_5(%arg0: i32, %arg1: i32) -> (i32, i32, i32, i32) {
    %c0_i32 = arith.constant 0 : i32
    %c0_i32_0 = arith.constant 0 : i32
    %c0_i32_1 = arith.constant 0 : i32
    return %arg0, %arg1, %c0_i32, %c0_i32_0 : i32, i32, i32, i32
  }
}

</mosaic_0001>

<llo_original>
// kernel: rescale_layer_forward.2
$region0: #{rescale_layer_forward.2}
  #allocation0 [shape = 'u32[]', space=smem, size = 0x4, offset = 0x4, fixed_abs, tag = 'smem constant byte address 0x4 - core index']
  #allocation1 [shape = 'u32[72,128]{1,0:T(1,128)}', space=vmem, size = 0x9000, scoped, tag = 'internal scratch']
  #allocation2 [shape = 'bf16[10,18,4]{2,1,0:T(8,128)(2,1)}', space=vmem, size = 0xf000, scoped, tag = 'scratch operand']
  #allocation3 [shape = 'bf16[128,36]{1,0:T(8,128)(2,1)}', space=vmem, size = 0x8000, scoped, tag = 'scratch operand']
  %s0 = inlined_call_operand.vmem [shape: bf16[2,18,18,4], index: 0, kind: input, shape index: {}, may-alias: {0,1}]
  %s1 = inlined_call_operand.vmem [shape: bf16[2,18,18,4], index: 1, kind: input, shape index: {}, may-alias: {0,1}]
  %s2 = inlined_call_operand.vmem [shape: bf16[36,8], index: 2, kind: input, shape index: {}]
  %s3 = inlined_call_operand.vmem [shape: f32[2,2,1,8], index: 3, kind: output, shape index: {0}]
  %s4 = inlined_call_operand.vmem [shape: f32[2,2,1,8], index: 4, kind: output, shape index: {1}]
  %5 = xla_tuple %s3, %s4
  %s6 = sld [smem:[#allocation0]]
  $region53: #{rescale_layer_forward.2} parent=0
    _
  %s8 = ssub.s32 1, %s6
  %s9 = scalar_select 0, %s8, %s6
  loop: start=0, step=1, limit=6
  $region2: #{rescale_layer_forward.2} parent=0 // loop_pre_header
    _
  $region3: #{rescale_layer_forward.2} parent=0 // loop_header
    %s11 = sphi 0, %s15
    %p12 = scmp.ge.s32.totalorder %s11, 6
    %s18 = sphi 0, %s30
    %s19 = sphi 0, %s26
    %s20 = sphi 0, %s18
    %s21 = sphi 0, %s19
    %s22 = sphi 0, %s20
    %s23 = sphi 0, %s21
    %s35 = sphi 0, %s37
    %s38 = sphi 0, %s35
    %s39 = sphi 0, %s38
    %s55 = sphi 0, %s39
    %s67 = sphi 0, %s69
    %s70 = sphi 0, %s67
    %s71 = sphi 0, %s70
    %s87 = sphi 0, %s71
    %s91 = sphi 0, %s91
    %s93 = sphi 0, %s91
    %s94 = sphi 0, %s93
    %s108 = sphi 0, %s94
    %s116 = sphi 0, %s118
    %s119 = sphi 0, %s116
    %s120 = sphi 0, %s119
    %s136 = sphi 0, %s120
    %s144 = sphi 0, %s146
    %s147 = sphi 0, %s144
    %s148 = sphi 0, %s147
    %s164 = sphi 0, %s148
  $region4: #{rescale_layer_forward.2} parent=0 // loop_header_branch
    %14 = sbr.rel (%p12) target = $region8
  $region5: #{rescale_layer_forward.2} parent=0 // loop_body
    %s16 = ssub.s32 %s11, 1
    %s17 = ssub.s32 %s11, 2
    %s24 = sadd.s32 1, %s19
    %p25 = scmp.ge.s32.totalorder %s24, 2
    %s26 = scalar_select %p25, 0, %s24
    %s27 = sadd.s32 1, %s18
    %s28 = scalar_select %p25, %s27, %s18
    %p29 = scmp.ge.s32.totalorder %s28, 2
    %s30 = scalar_select %p29, 0, %s28
    %s31 = ssub.s32 %s18, %s30
    %s32 = ssub.s32 %s19, %s26
    %s33 = sor.u32 %s31, %s32
    %p34 = scmp.eq.s32.totalorder %s33, 0
    %s36 = sadd.s32 %s35, 1
    %s37 = scalar_select %p34, %s35, %s36
    %p40 = pneg %p34
    %p41 = scmp.eq.s32.totalorder %s11, 3
    %p42 = por %p40, %p41
    %p43 = scmp.ne.s32.totalorder %s35, %s38
    %p44 = scmp.eq.s32.totalorder %s11, 0
    %p45 = por %p43, %p44
    %p46 = scmp.ne.s32.totalorder %s35, %s38
    %p47 = scmp.eq.s32.totalorder %s16, 3
    %p48 = por %p46, %p47
    %p49 = scmp.ne.s32.totalorder %s38, %s39
    %p50 = scmp.eq.s32.totalorder %s16, 0
    %p51 = por %p49, %p50
    %p52 = scmp.ne.s32.totalorder %s38, %s39
    %p53 = scmp.eq.s32.totalorder %s17, 3
    %p54 = por %p52, %p53
    %p56 = scmp.ne.s32.totalorder %s39, %s55
    %p57 = scmp.eq.s32.totalorder %s17, 0
    %p58 = por %p56, %p57
    %s59 = sadd.s32 %s19, 1
    %s60 = smul.u32 %s59, 4
    %s61 = sadd.s32 %s26, 1
    %s62 = smul.u32 %s61, 4
    %s63 = ssub.s32 %s18, %s30
    %s64 = ssub.s32 %s60, %s62
    %s65 = sor.u32 %s63, %s64
    %p66 = scmp.eq.s32.totalorder %s65, 0
    %s68 = sadd.s32 %s67, 1
    %s69 = scalar_select %p66, %s67, %s68
    %p72 = pneg %p66
    %p73 = scmp.eq.s32.totalorder %s11, 3
    %p74 = por %p72, %p73
    %p75 = scmp.ne.s32.totalorder %s67, %s70
    %p76 = scmp.eq.s32.totalorder %s11, 0
    %p77 = por %p75, %p76
    %p78 = scmp.ne.s32.totalorder %s67, %s70
    %p79 = scmp.eq.s32.totalorder %s16, 3
    %p80 = por %p78, %p79
    %p81 = scmp.ne.s32.totalorder %s70, %s71
    %p82 = scmp.eq.s32.totalorder %s16, 0
    %p83 = por %p81, %p82
    %p84 = scmp.ne.s32.totalorder %s70, %s71
    %p85 = scmp.eq.s32.totalorder %s17, 3
    %p86 = por %p84, %p85
    %p88 = scmp.ne.s32.totalorder %s71, %s87
    %p89 = scmp.eq.s32.totalorder %s17, 0
    %p90 = por %p88, %p89
    %s92 = sadd.s32 %s91, 1
    %p95 = scmp.eq.s32.totalorder %s11, 3
    %p96 = scmp.ne.s32.totalorder %s91, %s93
    %p97 = scmp.eq.s32.totalorder %s11, 0
    %p98 = por %p96, %p97
    %p99 = scmp.ne.s32.totalorder %s91, %s93
    %p100 = scmp.eq.s32.totalorder %s16, 3
    %p101 = por %p99, %p100
    %p102 = scmp.ne.s32.totalorder %s93, %s94
    %p103 = scmp.eq.s32.totalorder %s16, 0
    %p104 = por %p102, %p103
    %p105 = scmp.ne.s32.totalorder %s93, %s94
    %p106 = scmp.eq.s32.totalorder %s17, 3
    %p107 = por %p105, %p106
    %p109 = scmp.ne.s32.totalorder %s94, %s108
    %p110 = scmp.eq.s32.totalorder %s17, 0
    %p111 = por %p109, %p110
    %s112 = ssub.s32 %s18, %s30
    %s113 = ssub.s32 %s19, %s26
    %s114 = sor.u32 %s112, %s113
    %p115 = scmp.eq.s32.totalorder %s114, 0
    %s117 = sadd.s32 %s116, 1
    %s118 = scalar_select %p115, %s116, %s117
    %p121 = pneg %p115
    %p122 = scmp.eq.s32.totalorder %s11, 3
    %p123 = por %p121, %p122
    %p124 = scmp.ne.s32.totalorder %s116, %s119
    %p125 = scmp.eq.s32.totalorder %s11, 0
    %p126 = por %p124, %p125
    %p127 = scmp.ne.s32.totalorder %s116, %s119
    %p128 = scmp.eq.s32.totalorder %s16, 3
    %p129 = por %p127, %p128
    %p130 = scmp.ne.s32.totalorder %s119, %s120
    %p131 = scmp.eq.s32.totalorder %s16, 0
    %p132 = por %p130, %p131
    %p133 = scmp.ne.s32.totalorder %s119, %s120
    %p134 = scmp.eq.s32.totalorder %s17, 3
    %p135 = por %p133, %p134
    %p137 = scmp.ne.s32.totalorder %s120, %s136
    %p138 = scmp.eq.s32.totalorder %s17, 0
    %p139 = por %p137, %p138
    %s140 = ssub.s32 %s18, %s30
    %s141 = ssub.s32 %s19, %s26
    %s142 = sor.u32 %s140, %s141
    %p143 = scmp.eq.s32.totalorder %s142, 0
    %s145 = sadd.s32 %s144, 1
    %s146 = scalar_select %p143, %s144, %s145
    %p149 = pneg %p143
    %p150 = scmp.eq.s32.totalorder %s11, 3
    %p151 = por %p149, %p150
    %p152 = scmp.ne.s32.totalorder %s144, %s147
    %p153 = scmp.eq.s32.totalorder %s11, 0
    %p154 = por %p152, %p153
    %p155 = scmp.ne.s32.totalorder %s144, %s147
    %p156 = scmp.eq.s32.totalorder %s16, 3
    %p157 = por %p155, %p156
    %p158 = scmp.ne.s32.totalorder %s147, %s148
    %p159 = scmp.eq.s32.totalorder %s16, 0
    %p160 = por %p158, %p159
    %p161 = scmp.ne.s32.totalorder %s147, %s148
    %p162 = scmp.eq.s32.totalorder %s17, 3
    %p163 = por %p161, %p162
    %p165 = scmp.ne.s32.totalorder %s148, %s164
    %p166 = scmp.eq.s32.totalorder %s17, 0
    %p167 = por %p165, %p166
    %p168 = scmp.le.s32.totalorder 1, %s11
    %p169 = scmp.lt.s32.totalorder %s11, 5
    %p170 = pnand %p168, %p169
    %p171 = pneg %p170
    // Predicated region
    $region9: #{rescale_layer_forward.2} parent=5 // pred_check
      _
    $region10: #{rescale_layer_forward.2} parent=5 // pred_check_branch
      %173 = sbr.rel (%p170) target = $region12
    $region11: #{rescale_layer_forward.2} parent=5 // pred_region
      %s174 = ssub.s32 %s11, 1
      // Predicated region
      $region13: #{rescale_layer_forward.2} parent=11 // pred_check
        %p175 = pneg %p104
      $region14: #{rescale_layer_forward.2} parent=11 // pred_check_branch
        %177 = sbr.rel (%p175) target = $region16
      $region15: #{rescale_layer_forward.2} parent=11 // pred_region
        _
      $region16: #{rescale_layer_forward.2} parent=11 // pred_fallthru
        _
    $region12: #{rescale_layer_forward.2} parent=5 // pred_fallthru
      _
    %p178 = scmp.lt.s32.totalorder %s11, 4
    // Predicated region
    $region17: #{rescale_layer_forward.2} parent=5 // pred_check
      %p179 = pneg %p178
    $region18: #{rescale_layer_forward.2} parent=5 // pred_check_branch
      %181 = sbr.rel (%p179) target = $region20
    $region19: #{rescale_layer_forward.2} parent=5 // pred_region
      // Predicated region
      $region21: #{rescale_layer_forward.2} parent=19 // pred_check
        %p182 = pneg %p45
      $region22: #{rescale_layer_forward.2} parent=19 // pred_check_branch
        %184 = sbr.rel (%p182) target = $region24
      $region23: #{rescale_layer_forward.2} parent=19 // pred_region
        %s185 = smul.u32 8, %s19
        %s186 = ssub.s32 18, %s185
        %p187 = scmp.lt.s32.totalorder %s186, 8
        %s188 = scalar_select %p187, %s186, 8
        %s189 = smul.u32 4, %s188
        %s190 = smul.u32 %s189, 3
        %p191 = scmp.lt.s32.totalorder %s18, 1
        %s192 = scalar_select %p191, %s18, 1
        %p193 = scmp.lt.s32.totalorder %s185, 17
        %s194 = scalar_select %p193, %s185, 17
        %s195 = smul.addr %s194, 3
        %s196 = smul.addr %s192, 54
        %s197 = sadd.s32 %s195, %s196
        %s198 = smul.addr %s197, 4
        %s199 = scalar_lea.vmem %s0, %s198
        %s200 = smul.u32 8, %s19
        %s201 = ssub.s32 18, %s200
        %p202 = scmp.lt.s32.totalorder %s201, 8
        %s203 = scalar_select %p202, %s201, 8
        %s204 = smul.u32 4, %s203
        %s205 = smul.u32 %s204, 3
      $region24: #{rescale_layer_forward.2} parent=19 // pred_fallthru
        _
      // Predicated region
      $region25: #{rescale_layer_forward.2} parent=19 // pred_check
        %p206 = pneg %p77
      $region26: #{rescale_layer_forward.2} parent=19 // pred_check_branch
        %208 = sbr.rel (%p206) target = $region28
      $region27: #{rescale_layer_forward.2} parent=19 // pred_region
        %s209 = sadd.s32 %s19, 1
        %s210 = smul.u32 %s209, 4
        %s211 = smul.u32 2, %s210
        %p212 = scmp.lt.s32.totalorder %s18, 1
        %s213 = scalar_select %p212, %s18, 1
        %p214 = scmp.lt.s32.totalorder %s211, 17
        %s215 = scalar_select %p214, %s211, 17
        %s216 = smul.addr %s215, 3
        %s217 = smul.addr %s213, 54
        %s218 = sadd.s32 %s216, %s217
        %s219 = smul.addr %s218, 4
        %s220 = scalar_lea.vmem %s1, %s219
        %s221 = sadd.s32 %s19, 1
        %s222 = smul.u32 %s221, 4
        %s223 = smul.u32 2, %s222
      $region28: #{rescale_layer_forward.2} parent=19 // pred_fallthru
        _
    $region20: #{rescale_layer_forward.2} parent=5 // pred_fallthru
      _
    %p224 = scmp.le.s32.totalorder 1, %s11
    %p225 = scmp.lt.s32.totalorder %s11, 5
    %p226 = pnand %p224, %p225
    %p227 = pneg %p226
    // Predicated region
    $region29: #{rescale_layer_forward.2} parent=5 // pred_check
      _
    $region30: #{rescale_layer_forward.2} parent=5 // pred_check_branch
      %229 = sbr.rel (%p226) target = $region32
    $region31: #{rescale_layer_forward.2} parent=5 // pred_region
      %s230 = ssub.s32 %s11, 1
      %s231 = smul.u32 8, %s21
      %s232 = ssub.s32 18, %s231
      %p233 = scmp.lt.s32.totalorder %s232, 8
      %s234 = scalar_select %p233, %s232, 8
      %s235 = smul.u32 4, %s234
      %s236 = smul.u32 %s235, 3
      %p237 = scmp.lt.s32.totalorder %s20, 1
      %s238 = scalar_select %p237, %s20, 1
      %p239 = scmp.lt.s32.totalorder %s231, 17
      %s240 = scalar_select %p239, %s231, 17
      %s241 = smul.addr %s240, 3
      %s242 = smul.addr %s238, 54
      %s243 = sadd.s32 %s241, %s242
      %s244 = smul.addr %s243, 4
      %s245 = scalar_lea.vmem %s0, %s244
      %p246 = pneg %p51
      %p247 = pneg %p48
      %s248 = sadd.s32 %s21, 1
      %s249 = smul.u32 %s248, 4
      %s250 = smul.u32 2, %s249
      %p251 = scmp.lt.s32.totalorder %s20, 1
      %s252 = scalar_select %p251, %s20, 1
      %p253 = scmp.lt.s32.totalorder %s250, 17
      %s254 = scalar_select %p253, %s250, 17
      %s255 = smul.addr %s254, 3
      %s256 = smul.addr %s252, 54
      %s257 = sadd.s32 %s255, %s256
      %s258 = smul.addr %s257, 4
      %s259 = scalar_lea.vmem %s1, %s258
      %p260 = pneg %p83
      %p261 = pneg %p80
      %p262 = pneg %p104
      %p263 = pneg %p101
      %p264 = pneg %p132
      %p265 = pneg %p129
      %p266 = scmp.lt.s32.totalorder %s20, 1
      %s267 = scalar_select %p266, %s20, 1
      %p268 = scmp.lt.s32.totalorder %s21, 1
      %s269 = scalar_select %p268, %s21, 1
      %s270 = smul.addr %s267, 2
      %s271 = sadd.s32 %s269, %s270
      %s272 = scalar_lea.vmem %s3, %s271
      %p273 = pneg %p160
      %p274 = pneg %p157
      %p275 = scmp.lt.s32.totalorder %s20, 1
      %s276 = scalar_select %p275, %s20, 1
      %p277 = scmp.lt.s32.totalorder %s21, 1
      %s278 = scalar_select %p277, %s21, 1
      %s279 = smul.addr %s276, 2
      %s280 = sadd.s32 %s278, %s279
      %s281 = scalar_lea.vmem %s4, %s280
      %s282 = smul.u32 8, %s21
      %s283 = ssub.s32 18, %s282
      %p284 = scmp.lt.s32.totalorder %s283, 8
      %s285 = scalar_select %p284, %s283, 8
      %s286 = smul.u32 4, %s285
      %s287 = smul.u32 %s286, 3
      %p288 = scmp.lt.s32.totalorder %s20, 1
      %s289 = scalar_select %p288, %s20, 1
      %p290 = scmp.lt.s32.totalorder %s282, 17
      %s291 = scalar_select %p290, %s282, 17
      %s292 = smul.addr %s291, 3
      %s293 = smul.addr %s289, 54
      %s294 = sadd.s32 %s292, %s293
      %s295 = smul.addr %s294, 4
      %s296 = scalar_lea.vmem %s0, %s295
      %s297 = smul.u32 8, %s21
      %s298 = ssub.s32 18, %s297
      %p299 = scmp.lt.s32.totalorder %s298, 8
      %s300 = scalar_select %p299, %s298, 8
      %s301 = smul.u32 4, %s300
      %s302 = smul.u32 %s301, 3
      %s303 = sadd.s32 %s21, 1
      %s304 = smul.u32 %s303, 4
      %s305 = smul.u32 2, %s304
      %p306 = scmp.lt.s32.totalorder %s20, 1
      %s307 = scalar_select %p306, %s20, 1
      %p308 = scmp.lt.s32.totalorder %s305, 17
      %s309 = scalar_select %p308, %s305, 17
      %s310 = smul.addr %s309, 3
      %s311 = smul.addr %s307, 54
      %s312 = sadd.s32 %s310, %s311
      %s313 = smul.addr %s312, 4
      %s314 = scalar_lea.vmem %s1, %s313
      %s315 = sadd.s32 %s21, 1
      %s316 = smul.u32 %s315, 4
      %s317 = smul.u32 2, %s316
      %p318 = scmp.lt.s32.totalorder %s20, 1
      %s319 = scalar_select %p318, %s20, 1
      %p320 = scmp.lt.s32.totalorder %s21, 1
      %s321 = scalar_select %p320, %s21, 1
      %s322 = smul.addr %s319, 2
      %s323 = sadd.s32 %s321, %s322
      %s324 = scalar_lea.vmem %s3, %s323
      %p325 = scmp.lt.s32.totalorder %s20, 1
      %s326 = scalar_select %p325, %s20, 1
      %p327 = scmp.lt.s32.totalorder %s21, 1
      %s328 = scalar_select %p327, %s21, 1
      %s329 = smul.addr %s326, 2
      %s330 = sadd.s32 %s328, %s329
      %s331 = scalar_lea.vmem %s4, %s330
      %v333 = vld [vmem:[%s296] sm:$0xf]
      %v334 = vld [vmem:[%s296 + $0x4] sm:$0xf]
      %v335 = vld [vmem:[%s296 + $0x8] sm:$0x1]
      %v336 = vld [vmem:[%s296 + $0xc] sm:$0xf]
      %v337 = vld [vmem:[%s296 + $0x10] sm:$0xf]
      %v338 = vld [vmem:[%s296 + $0x14] sm:$0x1]
      %v339 = vld [vmem:[%s296 + $0x18] sm:$0xf]
      %v340 = vld [vmem:[%s296 + $0x1c] sm:$0xf]
      %v341 = vld [vmem:[%s296 + $0x20] sm:$0x1]
      %v342 = vld [vmem:[%s296 + $0x24] sm:$0xf]
      %v343 = vld [vmem:[%s296 + $0x28] sm:$0xf]
      %v344 = vld [vmem:[%s296 + $0x2c] sm:$0x1]
      %v345 = vld [vmem:[%s296 + $0x30] sm:$0xf]
      %v346 = vld [vmem:[%s296 + $0x34] sm:$0xf]
      %v347 = vld [vmem:[%s296 + $0x38] sm:$0x1]
      %v348 = vld [vmem:[%s296 + $0x3c] sm:$0xf]
      %v349 = vld [vmem:[%s296 + $0x40] sm:$0xf]
      %v350 = vld [vmem:[%s296 + $0x44] sm:$0x1]
      %v351 = vld [vmem:[%s296 + $0x48] sm:$0xf]
      %v352 = vld [vmem:[%s296 + $0x4c] sm:$0xf]
      %v353 = vld [vmem:[%s296 + $0x50] sm:$0x1]
      %v354 = vld [vmem:[%s296 + $0x54] sm:$0xf]
      %v355 = vld [vmem:[%s296 + $0x58] sm:$0xf]
      %v356 = vld [vmem:[%s296 + $0x5c] sm:$0x1]
      %vm357 = vcmask 27648
      %358 = vst.msk [vmem:[#allocation2] sm:$0xf] %vm357, %v333
      %359 = vst.msk [vmem:[#allocation2 + $0x4] sm:$0xf] %vm357, %v334
      %vm360 = vcmask 24576
      %361 = vst.msk [vmem:[#allocation2 + $0x8] sm:$0x1] %vm360, %v335
      %362 = vst.msk [vmem:[#allocation2 + $0xc] sm:$0xf] %vm357, %v336
      %363 = vst.msk [vmem:[#allocation2 + $0x10] sm:$0xf] %vm357, %v337
      %364 = vst.msk [vmem:[#allocation2 + $0x14] sm:$0x1] %vm360, %v338
      %365 = vst.msk [vmem:[#allocation2 + $0x18] sm:$0xf] %vm357, %v339
      %366 = vst.msk [vmem:[#allocation2 + $0x1c] sm:$0xf] %vm357, %v340
      %367 = vst.msk [vmem:[#allocation2 + $0x20] sm:$0x1] %vm360, %v341
      %368 = vst.msk [vmem:[#allocation2 + $0x24] sm:$0xf] %vm357, %v342
      %369 = vst.msk [vmem:[#allocation2 + $0x28] sm:$0xf] %vm357, %v343
      %370 = vst.msk [vmem:[#allocation2 + $0x2c] sm:$0x1] %vm360, %v344
      %371 = vst.msk [vmem:[#allocation2 + $0x30] sm:$0xf] %vm357, %v345
      %372 = vst.msk [vmem:[#allocation2 + $0x34] sm:$0xf] %vm357, %v346
      %373 = vst.msk [vmem:[#allocation2 + $0x38] sm:$0x1] %vm360, %v347
      %374 = vst.msk [vmem:[#allocation2 + $0x3c] sm:$0xf] %vm357, %v348
      %375 = vst.msk [vmem:[#allocation2 + $0x40] sm:$0xf] %vm357, %v349
      %376 = vst.msk [vmem:[#allocation2 + $0x44] sm:$0x1] %vm360, %v350
      %377 = vst.msk [vmem:[#allocation2 + $0x48] sm:$0xf] %vm357, %v351
      %378 = vst.msk [vmem:[#allocation2 + $0x4c] sm:$0xf] %vm357, %v352
      %379 = vst.msk [vmem:[#allocation2 + $0x50] sm:$0x1] %vm360, %v353
      %380 = vst.msk [vmem:[#allocation2 + $0x54] sm:$0xf] %vm357, %v354
      %381 = vst.msk [vmem:[#allocation2 + $0x58] sm:$0xf] %vm357, %v355
      %382 = vst.msk [vmem:[#allocation2 + $0x5c] sm:$0x1] %vm360, %v356
      %v383 = vld [vmem:[%s314] sm:$0xf]
      %v384 = vld [vmem:[%s314 + $0x4] sm:$0xf]
      %v385 = vld [vmem:[%s314 + $0x8] sm:$0x1]
      %v386 = vld [vmem:[%s314 + $0xc] sm:$0xf]
      %v387 = vld [vmem:[%s314 + $0x10] sm:$0xf]
      %v388 = vld [vmem:[%s314 + $0x14] sm:$0x1]
      %s389 = scalar_lea.vmem [#allocation2], 96
      %390 = vst.msk [vmem:[%s389] sm:$0xf] %vm357, %v383
      %391 = vst.msk [vmem:[%s389 + $0x4] sm:$0xf] %vm357, %v384
      %392 = vst.msk [vmem:[%s389 + $0x8] sm:$0x1] %vm360, %v385
      %393 = vst.msk [vmem:[%s389 + $0xc] sm:$0xf] %vm357, %v386
      %394 = vst.msk [vmem:[%s389 + $0x10] sm:$0xf] %vm357, %v387
      %395 = vst.msk [vmem:[%s389 + $0x14] sm:$0x1] %vm360, %v388
      %v396 = vld [vmem:[#allocation2] sm:$0xf]
      %v397 = vld [vmem:[#allocation2 + $0x4] sm:$0xf]
      %v398 = vld [vmem:[#allocation2 + $0xc] sm:$0xf]
      %v399 = vld [vmem:[#allocation2 + $0x10] sm:$0xf]
      %v400 = vld [vmem:[#allocation2 + $0x18] sm:$0xf]
      %v401 = vld [vmem:[#allocation2 + $0x1c] sm:$0xf]
      %v402 = vld [vmem:[#allocation2 + $0x24] sm:$0xf]
      %v403 = vld [vmem:[#allocation2 + $0x28] sm:$0xf]
      %v404 = vld [vmem:[#allocation2 + $0x30] sm:$0xf]
      %v405 = vld [vmem:[#allocation2 + $0x34] sm:$0xf]
      %v406 = vld [vmem:[#allocation2 + $0x3c] sm:$0xf]
      %v407 = vld [vmem:[#allocation2 + $0x40] sm:$0xf]
      %v408 = vld [vmem:[#allocation2 + $0x48] sm:$0xf]
      %v409 = vld [vmem:[#allocation2 + $0x4c] sm:$0xf]
      %v410 = vld [vmem:[#allocation2 + $0x54] sm:$0xf]
      %v411 = vld [vmem:[#allocation2 + $0x58] sm:$0xf]
      %412 = vst.msk [vmem:[#allocation3] sm:$0xf] %vm357, %v396
      %413 = vst.msk [vmem:[#allocation3 + $0x4] sm:$0xf] %vm357, %v397
      %414 = vst.msk [vmem:[#allocation3 + $0x8] sm:$0xf] %vm357, %v398
      %415 = vst.msk [vmem:[#allocation3 + $0xc] sm:$0xf] %vm357, %v399
      %416 = vst.msk [vmem:[#allocation3 + $0x10] sm:$0xf] %vm357, %v400
      %417 = vst.msk [vmem:[#allocation3 + $0x14] sm:$0xf] %vm357, %v401
      %418 = vst.msk [vmem:[#allocation3 + $0x18] sm:$0xf] %vm357, %v402
      %419 = vst.msk [vmem:[#allocation3 + $0x1c] sm:$0xf] %vm357, %v403
      %420 = vst.msk [vmem:[#allocation3 + $0x20] sm:$0xf] %vm357, %v404
      %421 = vst.msk [vmem:[#allocation3 + $0x24] sm:$0xf] %vm357, %v405
      %422 = vst.msk [vmem:[#allocation3 + $0x28] sm:$0xf] %vm357, %v406
      %423 = vst.msk [vmem:[#allocation3 + $0x2c] sm:$0xf] %vm357, %v407
      %424 = vst.msk [vmem:[#allocation3 + $0x30] sm:$0xf] %vm357, %v408
      %425 = vst.msk [vmem:[#allocation3 + $0x34] sm:$0xf] %vm357, %v409
      %426 = vst.msk [vmem:[#allocation3 + $0x38] sm:$0xf] %vm357, %v410
      %427 = vst.msk [vmem:[#allocation3 + $0x3c] sm:$0xf] %vm357, %v411
      %v428 = vld [vmem:[#allocation2] sm:$0xf]
      %v429 = vld [vmem:[#allocation2 + $0x4] sm:$0xf]
      %v430 = vld [vmem:[#allocation2 + $0x8] sm:$0x1]
      %v431 = vld [vmem:[#allocation2 + $0xc] sm:$0xf]
      %v432 = vld [vmem:[#allocation2 + $0x10] sm:$0xf]
      %v433 = vld [vmem:[#allocation2 + $0x14] sm:$0x1]
      %v434 = vld [vmem:[#allocation2 + $0x18] sm:$0xf]
      %v435 = vld [vmem:[#allocation2 + $0x1c] sm:$0xf]
      %v436 = vld [vmem:[#allocation2 + $0x20] sm:$0x1]
      %v437 = vld [vmem:[#allocation2 + $0x24] sm:$0xf]
      %v438 = vld [vmem:[#allocation2 + $0x28] sm:$0xf]
      %v439 = vld [vmem:[#allocation2 + $0x2c] sm:$0x1]
      %v440 = vld [vmem:[#allocation2 + $0x30] sm:$0xf]
      %v441 = vld [vmem:[#allocation2 + $0x34] sm:$0xf]
      %v442 = vld [vmem:[#allocation2 + $0x38] sm:$0x1]
      %v443 = vld [vmem:[#allocation2 + $0x3c] sm:$0xf]
      %v444 = vld [vmem:[#allocation2 + $0x40] sm:$0xf]
      %v445 = vld [vmem:[#allocation2 + $0x44] sm:$0x1]
      %v446 = vld [vmem:[#allocation2 + $0x48] sm:$0xf]
      %v447 = vld [vmem:[#allocation2 + $0x4c] sm:$0xf]
      %v448 = vld [vmem:[#allocation2 + $0x50] sm:$0x1]
      %v449 = vld [vmem:[#allocation2 + $0x54] sm:$0xf]
      %v450 = vld [vmem:[#allocation2 + $0x58] sm:$0xf]
      %v451 = vld [vmem:[#allocation2 + $0x5c] sm:$0x1]
      %vm452 = vsmask.f32 3328
      %vm453 = vsmask.f32 7440
      %vm454 = vmor %vm452, %vm453
      %v456 = vshrl.u32 %v428, 16
      %v458 = vrot.slane %v456, 4
      %v459 = vshll.u32 %v428, 16
      %v461 = vrot.slane %v459, 5
      %v462 = vor.u32 %v458, %v461
      %v463 = vrot.slane %v462, 4
      %v465 = vshll.u32 %v429, 16
      %v467 = vrot.slane %v465, 5
      %v468 = vsel %vm454, %v463, %v467
      %v469 = vshrl.u32 %v429, 16
      %v471 = vrot.slane %v469, 4
      %v472 = vor.u32 %v471, %v467
      %v473 = vrot.slane %v472, 4
      %v475 = vshll.u32 %v430, 16
      %v477 = vrot.slane %v475, 5
      %v478 = vsel %vm454, %v473, %v477
      %v480 = vshrl.u32 %v431, 16
      %v482 = vrot.slane %v480, 4
      %v483 = vshll.u32 %v431, 16
      %v485 = vrot.slane %v483, 5
      %v486 = vor.u32 %v482, %v485
      %v487 = vrot.slane %v486, 4
      %v489 = vshll.u32 %v432, 16
      %v491 = vrot.slane %v489, 5
      %v492 = vsel %vm454, %v487, %v491
      %v493 = vshrl.u32 %v432, 16
      %v495 = vrot.slane %v493, 4
      %v496 = vor.u32 %v495, %v491
      %v497 = vrot.slane %v496, 4
      %v499 = vshll.u32 %v433, 16
      %v501 = vrot.slane %v499, 5
      %v502 = vsel %vm454, %v497, %v501
      %v504 = vshrl.u32 %v434, 16
      %v506 = vrot.slane %v504, 4
      %v507 = vshll.u32 %v434, 16
      %v509 = vrot.slane %v507, 5
      %v510 = vor.u32 %v506, %v509
      %v511 = vrot.slane %v510, 4
      %v513 = vshll.u32 %v435, 16
      %v515 = vrot.slane %v513, 5
      %v516 = vsel %vm454, %v511, %v515
      %v517 = vshrl.u32 %v435, 16
      %v519 = vrot.slane %v517, 4
      %v520 = vor.u32 %v519, %v515
      %v521 = vrot.slane %v520, 4
      %v523 = vshll.u32 %v436, 16
      %v525 = vrot.slane %v523, 5
      %v526 = vsel %vm454, %v521, %v525
      %v528 = vshrl.u32 %v437, 16
      %v530 = vrot.slane %v528, 4
      %v531 = vshll.u32 %v437, 16
      %v533 = vrot.slane %v531, 5
      %v534 = vor.u32 %v530, %v533
      %v535 = vrot.slane %v534, 4
      %v537 = vshll.u32 %v438, 16
      %v539 = vrot.slane %v537, 5
      %v540 = vsel %vm454, %v535, %v539
      %v541 = vshrl.u32 %v438, 16
      %v543 = vrot.slane %v541, 4
      %v544 = vor.u32 %v543, %v539
      %v545 = vrot.slane %v544, 4
      %v547 = vshll.u32 %v439, 16
      %v549 = vrot.slane %v547, 5
      %v550 = vsel %vm454, %v545, %v549
      %v552 = vshrl.u32 %v440, 16
      %v554 = vrot.slane %v552, 4
      %v555 = vshll.u32 %v440, 16
      %v557 = vrot.slane %v555, 5
      %v558 = vor.u32 %v554, %v557
      %v559 = vrot.slane %v558, 4
      %v561 = vshll.u32 %v441, 16
      %v563 = vrot.slane %v561, 5
      %v564 = vsel %vm454, %v559, %v563
      %v565 = vshrl.u32 %v441, 16
      %v567 = vrot.slane %v565, 4
      %v568 = vor.u32 %v567, %v563
      %v569 = vrot.slane %v568, 4
      %v571 = vshll.u32 %v442, 16
      %v573 = vrot.slane %v571, 5
      %v574 = vsel %vm454, %v569, %v573
      %v576 = vshrl.u32 %v443, 16
      %v578 = vrot.slane %v576, 4
      %v579 = vshll.u32 %v443, 16
      %v581 = vrot.slane %v579, 5
      %v582 = vor.u32 %v578, %v581
      %v583 = vrot.slane %v582, 4
      %v585 = vshll.u32 %v444, 16
      %v587 = vrot.slane %v585, 5
      %v588 = vsel %vm454, %v583, %v587
      %v589 = vshrl.u32 %v444, 16
      %v591 = vrot.slane %v589, 4
      %v592 = vor.u32 %v591, %v587
      %v593 = vrot.slane %v592, 4
      %v595 = vshll.u32 %v445, 16
      %v597 = vrot.slane %v595, 5
      %v598 = vsel %vm454, %v593, %v597
      %v600 = vshrl.u32 %v446, 16
      %v602 = vrot.slane %v600, 4
      %v603 = vshll.u32 %v446, 16
      %v605 = vrot.slane %v603, 5
      %v606 = vor.u32 %v602, %v605
      %v607 = vrot.slane %v606, 4
      %v609 = vshll.u32 %v447, 16
      %v611 = vrot.slane %v609, 5
      %v612 = vsel %vm454, %v607, %v611
      %v613 = vshrl.u32 %v447, 16
      %v615 = vrot.slane %v613, 4
      %v616 = vor.u32 %v615, %v611
      %v617 = vrot.slane %v616, 4
      %v619 = vshll.u32 %v448, 16
      %v621 = vrot.slane %v619, 5
      %v622 = vsel %vm454, %v617, %v621
      %v624 = vshrl.u32 %v449, 16
      %v626 = vrot.slane %v624, 4
      %v627 = vshll.u32 %v449, 16
      %v629 = vrot.slane %v627, 5
      %v630 = vor.u32 %v626, %v629
      %v631 = vrot.slane %v630, 4
      %v633 = vshll.u32 %v450, 16
      %v635 = vrot.slane %v633, 5
      %v636 = vsel %vm454, %v631, %v635
      %v637 = vshrl.u32 %v450, 16
      %v639 = vrot.slane %v637, 4
      %v640 = vor.u32 %v639, %v635
      %v641 = vrot.slane %v640, 4
      %v643 = vshll.u32 %v451, 16
      %v645 = vrot.slane %v643, 5
      %v646 = vsel %vm454, %v641, %v645
      %647 = vrot.lane.b32.xlu0 %v468, 4
      %v648 = vpop.permute.xlu0 %647
      %649 = vrot.lane.b32.xlu0 %v478, 4
      %v650 = vpop.permute.xlu0 %649
      %651 = vrot.lane.b32.xlu0 %v492, 4
      %v652 = vpop.permute.xlu0 %651
      %653 = vrot.lane.b32.xlu0 %v502, 4
      %v654 = vpop.permute.xlu0 %653
      %655 = vrot.lane.b32.xlu0 %v516, 4
      %v656 = vpop.permute.xlu0 %655
      %657 = vrot.lane.b32.xlu0 %v526, 4
      %v658 = vpop.permute.xlu0 %657
      %659 = vrot.lane.b32.xlu0 %v540, 4
      %v660 = vpop.permute.xlu0 %659
      %661 = vrot.lane.b32.xlu0 %v550, 4
      %v662 = vpop.permute.xlu0 %661
      %663 = vrot.lane.b32.xlu0 %v564, 4
      %v664 = vpop.permute.xlu0 %663
      %665 = vrot.lane.b32.xlu0 %v574, 4
      %v666 = vpop.permute.xlu0 %665
      %667 = vrot.lane.b32.xlu0 %v588, 4
      %v668 = vpop.permute.xlu0 %667
      %669 = vrot.lane.b32.xlu0 %v598, 4
      %v670 = vpop.permute.xlu0 %669
      %671 = vrot.lane.b32.xlu0 %v612, 4
      %v672 = vpop.permute.xlu0 %671
      %673 = vrot.lane.b32.xlu0 %v622, 4
      %v674 = vpop.permute.xlu0 %673
      %675 = vrot.lane.b32.xlu0 %v636, 4
      %v676 = vpop.permute.xlu0 %675
      %677 = vrot.lane.b32.xlu0 %v646, 4
      %v678 = vpop.permute.xlu0 %677
      %vm695 = vcmask 60448
      %696 = vst.msk [vmem:[#allocation3] sm:$0xf] %vm695, %v648
      %697 = vst.msk [vmem:[#allocation3 + $0x4] sm:$0xf] %vm695, %v650
      %698 = vst.msk [vmem:[#allocation3 + $0x8] sm:$0xf] %vm695, %v652
      %699 = vst.msk [vmem:[#allocation3 + $0xc] sm:$0xf] %vm695, %v654
      %700 = vst.msk [vmem:[#allocation3 + $0x10] sm:$0xf] %vm695, %v656
      %701 = vst.msk [vmem:[#allocation3 + $0x14] sm:$0xf] %vm695, %v658
      %702 = vst.msk [vmem:[#allocation3 + $0x18] sm:$0xf] %vm695, %v660
      %703 = vst.msk [vmem:[#allocation3 + $0x1c] sm:$0xf] %vm695, %v662
      %704 = vst.msk [vmem:[#allocation3 + $0x20] sm:$0xf] %vm695, %v664
      %705 = vst.msk [vmem:[#allocation3 + $0x24] sm:$0xf] %vm695, %v666
      %706 = vst.msk [vmem:[#allocation3 + $0x28] sm:$0xf] %vm695, %v668
      %707 = vst.msk [vmem:[#allocation3 + $0x2c] sm:$0xf] %vm695, %v670
      %708 = vst.msk [vmem:[#allocation3 + $0x30] sm:$0xf] %vm695, %v672
      %709 = vst.msk [vmem:[#allocation3 + $0x34] sm:$0xf] %vm695, %v674
      %710 = vst.msk [vmem:[#allocation3 + $0x38] sm:$0xf] %vm695, %v676
      %711 = vst.msk [vmem:[#allocation3 + $0x3c] sm:$0xf] %vm695, %v678
      %v712 = vld [vmem:[#allocation2] sm:$0xe]
      %v713 = vld [vmem:[#allocation2 + $0x4] sm:$0xf]
      %v714 = vld [vmem:[#allocation2 + $0x8] sm:$0x1]
      %v715 = vld [vmem:[#allocation2 + $0xc] sm:$0xe]
      %v716 = vld [vmem:[#allocation2 + $0x10] sm:$0xf]
      %v717 = vld [vmem:[#allocation2 + $0x14] sm:$0x1]
      %v718 = vld [vmem:[#allocation2 + $0x18] sm:$0xe]
      %v719 = vld [vmem:[#allocation2 + $0x1c] sm:$0xf]
      %v720 = vld [vmem:[#allocation2 + $0x20] sm:$0x1]
      %v721 = vld [vmem:[#allocation2 + $0x24] sm:$0xe]
      %v722 = vld [vmem:[#allocation2 + $0x28] sm:$0xf]
      %v723 = vld [vmem:[#allocation2 + $0x2c] sm:$0x1]
      %v724 = vld [vmem:[#allocation2 + $0x30] sm:$0xe]
      %v725 = vld [vmem:[#allocation2 + $0x34] sm:$0xf]
      %v726 = vld [vmem:[#allocation2 + $0x38] sm:$0x1]
      %v727 = vld [vmem:[#allocation2 + $0x3c] sm:$0xe]
      %v728 = vld [vmem:[#allocation2 + $0x40] sm:$0xf]
      %v729 = vld [vmem:[#allocation2 + $0x44] sm:$0x1]
      %v730 = vld [vmem:[#allocation2 + $0x48] sm:$0xe]
      %v731 = vld [vmem:[#allocation2 + $0x4c] sm:$0xf]
      %v732 = vld [vmem:[#allocation2 + $0x50] sm:$0x1]
      %v733 = vld [vmem:[#allocation2 + $0x54] sm:$0xe]
      %v734 = vld [vmem:[#allocation2 + $0x58] sm:$0xf]
      %v735 = vld [vmem:[#allocation2 + $0x5c] sm:$0x1]
      %vm760 = vcmask 1042432
      %vm761 = vcmask 1046532
      %vm762 = vmor %vm760, %vm761
      %v763 = vrot.slane %v712, 5
      %v764 = vrot.slane %v763, 4
      %v765 = vrot.slane %v713, 5
      %v766 = vsel %vm762, %v764, %v765
      %v767 = vrot.slane %v765, 4
      %v768 = vrot.slane %v714, 5
      %v769 = vsel %vm762, %v767, %v768
      %v770 = vrot.slane %v715, 5
      %v771 = vrot.slane %v770, 4
      %v772 = vrot.slane %v716, 5
      %v773 = vsel %vm762, %v771, %v772
      %v774 = vrot.slane %v772, 4
      %v775 = vrot.slane %v717, 5
      %v776 = vsel %vm762, %v774, %v775
      %v777 = vrot.slane %v718, 5
      %v778 = vrot.slane %v777, 4
      %v779 = vrot.slane %v719, 5
      %v780 = vsel %vm762, %v778, %v779
      %v781 = vrot.slane %v779, 4
      %v782 = vrot.slane %v720, 5
      %v783 = vsel %vm762, %v781, %v782
      %v784 = vrot.slane %v721, 5
      %v785 = vrot.slane %v784, 4
      %v786 = vrot.slane %v722, 5
      %v787 = vsel %vm762, %v785, %v786
      %v788 = vrot.slane %v786, 4
      %v789 = vrot.slane %v723, 5
      %v790 = vsel %vm762, %v788, %v789
      %v791 = vrot.slane %v724, 5
      %v792 = vrot.slane %v791, 4
      %v793 = vrot.slane %v725, 5
      %v794 = vsel %vm762, %v792, %v793
      %v795 = vrot.slane %v793, 4
      %v796 = vrot.slane %v726, 5
      %v797 = vsel %vm762, %v795, %v796
      %v798 = vrot.slane %v727, 5
      %v799 = vrot.slane %v798, 4
      %v800 = vrot.slane %v728, 5
      %v801 = vsel %vm762, %v799, %v800
      %v802 = vrot.slane %v800, 4
      %v803 = vrot.slane %v729, 5
      %v804 = vsel %vm762, %v802, %v803
      %v805 = vrot.slane %v730, 5
      %v806 = vrot.slane %v805, 4
      %v807 = vrot.slane %v731, 5
      %v808 = vsel %vm762, %v806, %v807
      %v809 = vrot.slane %v807, 4
      %v810 = vrot.slane %v732, 5
      %v811 = vsel %vm762, %v809, %v810
      %v812 = vrot.slane %v733, 5
      %v813 = vrot.slane %v812, 4
      %v814 = vrot.slane %v734, 5
      %v815 = vsel %vm762, %v813, %v814
      %v816 = vrot.slane %v814, 4
      %v817 = vrot.slane %v735, 5
      %v818 = vsel %vm762, %v816, %v817
      %819 = vrot.lane.b32.xlu0 %v766, 8
      %v820 = vpop.permute.xlu0 %819
      %821 = vrot.lane.b32.xlu0 %v769, 8
      %v822 = vpop.permute.xlu0 %821
      %823 = vrot.lane.b32.xlu0 %v773, 8
      %v824 = vpop.permute.xlu0 %823
      %825 = vrot.lane.b32.xlu0 %v776, 8
      %v826 = vpop.permute.xlu0 %825
      %827 = vrot.lane.b32.xlu0 %v780, 8
      %v828 = vpop.permute.xlu0 %827
      %829 = vrot.lane.b32.xlu0 %v783, 8
      %v830 = vpop.permute.xlu0 %829
      %831 = vrot.lane.b32.xlu0 %v787, 8
      %v832 = vpop.permute.xlu0 %831
      %833 = vrot.lane.b32.xlu0 %v790, 8
      %v834 = vpop.permute.xlu0 %833
      %835 = vrot.lane.b32.xlu0 %v794, 8
      %v836 = vpop.permute.xlu0 %835
      %837 = vrot.lane.b32.xlu0 %v797, 8
      %v838 = vpop.permute.xlu0 %837
      %839 = vrot.lane.b32.xlu0 %v801, 8
      %v840 = vpop.permute.xlu0 %839
      %841 = vrot.lane.b32.xlu0 %v804, 8
      %v842 = vpop.permute.xlu0 %841
      %843 = vrot.lane.b32.xlu0 %v808, 8
      %v844 = vpop.permute.xlu0 %843
      %845 = vrot.lane.b32.xlu0 %v811, 8
      %v846 = vpop.permute.xlu0 %845
      %847 = vrot.lane.b32.xlu0 %v815, 8
      %v848 = vpop.permute.xlu0 %847
      %849 = vrot.lane.b32.xlu0 %v818, 8
      %v850 = vpop.permute.xlu0 %849
      %vm867 = vcmask 93248
      %868 = vst.msk [vmem:[#allocation3] sm:$0xf] %vm867, %v820
      %869 = vst.msk [vmem:[#allocation3 + $0x4] sm:$0xf] %vm867, %v822
      %870 = vst.msk [vmem:[#allocation3 + $0x8] sm:$0xf] %vm867, %v824
      %871 = vst.msk [vmem:[#allocation3 + $0xc] sm:$0xf] %vm867, %v826
      %872 = vst.msk [vmem:[#allocation3 + $0x10] sm:$0xf] %vm867, %v828
      %873 = vst.msk [vmem:[#allocation3 + $0x14] sm:$0xf] %vm867, %v830
      %874 = vst.msk [vmem:[#allocation3 + $0x18] sm:$0xf] %vm867, %v832
      %875 = vst.msk [vmem:[#allocation3 + $0x1c] sm:$0xf] %vm867, %v834
      %876 = vst.msk [vmem:[#allocation3 + $0x20] sm:$0xf] %vm867, %v836
      %877 = vst.msk [vmem:[#allocation3 + $0x24] sm:$0xf] %vm867, %v838
      %878 = vst.msk [vmem:[#allocation3 + $0x28] sm:$0xf] %vm867, %v840
      %879 = vst.msk [vmem:[#allocation3 + $0x2c] sm:$0xf] %vm867, %v842
      %880 = vst.msk [vmem:[#allocation3 + $0x30] sm:$0xf] %vm867, %v844
      %881 = vst.msk [vmem:[#allocation3 + $0x34] sm:$0xf] %vm867, %v846
      %882 = vst.msk [vmem:[#allocation3 + $0x38] sm:$0xf] %vm867, %v848
      %883 = vst.msk [vmem:[#allocation3 + $0x3c] sm:$0xf] %vm867, %v850
      %s884 = scalar_lea.vmem [#allocation2], 12
      %v885 = vld [vmem:[%s884] sm:$0xf]
      %v886 = vld [vmem:[%s884 + $0x4] sm:$0xf]
      %v887 = vld [vmem:[%s884 + $0xc] sm:$0xf]
      %v888 = vld [vmem:[%s884 + $0x10] sm:$0xf]
      %v889 = vld [vmem:[%s884 + $0x18] sm:$0xf]
      %v890 = vld [vmem:[%s884 + $0x1c] sm:$0xf]
      %v891 = vld [vmem:[%s884 + $0x24] sm:$0xf]
      %v892 = vld [vmem:[%s884 + $0x28] sm:$0xf]
      %v893 = vld [vmem:[%s884 + $0x30] sm:$0xf]
      %v894 = vld [vmem:[%s884 + $0x34] sm:$0xf]
      %v895 = vld [vmem:[%s884 + $0x3c] sm:$0xf]
      %v896 = vld [vmem:[%s884 + $0x40] sm:$0xf]
      %v897 = vld [vmem:[%s884 + $0x48] sm:$0xf]
      %v898 = vld [vmem:[%s884 + $0x4c] sm:$0xf]
      %v899 = vld [vmem:[%s884 + $0x54] sm:$0xf]
      %v900 = vld [vmem:[%s884 + $0x58] sm:$0xf]
      %917 = vrot.lane.b32.xlu0 %v885, 12
      %v918 = vpop.permute.xlu0 %917
      %919 = vrot.lane.b32.xlu0 %v886, 12
      %v920 = vpop.permute.xlu0 %919
      %921 = vrot.lane.b32.xlu0 %v887, 12
      %v922 = vpop.permute.xlu0 %921
      %923 = vrot.lane.b32.xlu0 %v888, 12
      %v924 = vpop.permute.xlu0 %923
      %925 = vrot.lane.b32.xlu0 %v889, 12
      %v926 = vpop.permute.xlu0 %925
      %927 = vrot.lane.b32.xlu0 %v890, 12
      %v928 = vpop.permute.xlu0 %927
      %929 = vrot.lane.b32.xlu0 %v891, 12
      %v930 = vpop.permute.xlu0 %929
      %931 = vrot.lane.b32.xlu0 %v892, 12
      %v932 = vpop.permute.xlu0 %931
      %933 = vrot.lane.b32.xlu0 %v893, 12
      %v934 = vpop.permute.xlu0 %933
      %935 = vrot.lane.b32.xlu0 %v894, 12
      %v936 = vpop.permute.xlu0 %935
      %937 = vrot.lane.b32.xlu0 %v895, 12
      %v938 = vpop.permute.xlu0 %937
      %939 = vrot.lane.b32.xlu0 %v896, 12
      %v940 = vpop.permute.xlu0 %939
      %941 = vrot.lane.b32.xlu0 %v897, 12
      %v942 = vpop.permute.xlu0 %941
      %943 = vrot.lane.b32.xlu0 %v898, 12
      %v944 = vpop.permute.xlu0 %943
      %945 = vrot.lane.b32.xlu0 %v899, 12
      %v946 = vpop.permute.xlu0 %945
      %947 = vrot.lane.b32.xlu0 %v900, 12
      %v948 = vpop.permute.xlu0 %947
      %vm965 = vcmask 126048
      %966 = vst.msk [vmem:[#allocation3] sm:$0xf] %vm965, %v918
      %967 = vst.msk [vmem:[#allocation3 + $0x4] sm:$0xf] %vm965, %v920
      %968 = vst.msk [vmem:[#allocation3 + $0x8] sm:$0xf] %vm965, %v922
      %969 = vst.msk [vmem:[#allocation3 + $0xc] sm:$0xf] %vm965, %v924
      %970 = vst.msk [vmem:[#allocation3 + $0x10] sm:$0xf] %vm965, %v926
      %971 = vst.msk [vmem:[#allocation3 + $0x14] sm:$0xf] %vm965, %v928
      %972 = vst.msk [vmem:[#allocation3 + $0x18] sm:$0xf] %vm965, %v930
      %973 = vst.msk [vmem:[#allocation3 + $0x1c] sm:$0xf] %vm965, %v932
      %974 = vst.msk [vmem:[#allocation3 + $0x20] sm:$0xf] %vm965, %v934
      %975 = vst.msk [vmem:[#allocation3 + $0x24] sm:$0xf] %vm965, %v936
      %976 = vst.msk [vmem:[#allocation3 + $0x28] sm:$0xf] %vm965, %v938
      %977 = vst.msk [vmem:[#allocation3 + $0x2c] sm:$0xf] %vm965, %v940
      %978 = vst.msk [vmem:[#allocation3 + $0x30] sm:$0xf] %vm965, %v942
      %979 = vst.msk [vmem:[#allocation3 + $0x34] sm:$0xf] %vm965, %v944
      %980 = vst.msk [vmem:[#allocation3 + $0x38] sm:$0xf] %vm965, %v946
      %981 = vst.msk [vmem:[#allocation3 + $0x3c] sm:$0xf] %vm965, %v948
      %v982 = vld [vmem:[%s884] sm:$0xf]
      %v983 = vld [vmem:[%s884 + $0x4] sm:$0xf]
      %v984 = vld [vmem:[%s884 + $0x8] sm:$0x1]
      %v985 = vld [vmem:[%s884 + $0xc] sm:$0xf]
      %v986 = vld [vmem:[%s884 + $0x10] sm:$0xf]
      %v987 = vld [vmem:[%s884 + $0x14] sm:$0x1]
      %v988 = vld [vmem:[%s884 + $0x18] sm:$0xf]
      %v989 = vld [vmem:[%s884 + $0x1c] sm:$0xf]
      %v990 = vld [vmem:[%s884 + $0x20] sm:$0x1]
      %v991 = vld [vmem:[%s884 + $0x24] sm:$0xf]
      %v992 = vld [vmem:[%s884 + $0x28] sm:$0xf]
      %v993 = vld [vmem:[%s884 + $0x2c] sm:$0x1]
      %v994 = vld [vmem:[%s884 + $0x30] sm:$0xf]
      %v995 = vld [vmem:[%s884 + $0x34] sm:$0xf]
      %v996 = vld [vmem:[%s884 + $0x38] sm:$0x1]
      %v997 = vld [vmem:[%s884 + $0x3c] sm:$0xf]
      %v998 = vld [vmem:[%s884 + $0x40] sm:$0xf]
      %v999 = vld [vmem:[%s884 + $0x44] sm:$0x1]
      %v1000 = vld [vmem:[%s884 + $0x48] sm:$0xf]
      %v1001 = vld [vmem:[%s884 + $0x4c] sm:$0xf]
      %v1002 = vld [vmem:[%s884 + $0x50] sm:$0x1]
      %v1003 = vld [vmem:[%s884 + $0x54] sm:$0xf]
      %v1004 = vld [vmem:[%s884 + $0x58] sm:$0xf]
      %v1005 = vld [vmem:[%s884 + $0x5c] sm:$0x1]
      %v1007 = vshrl.u32 %v982, 16
      %v1009 = vrot.slane %v1007, 4
      %v1010 = vshll.u32 %v982, 16
      %v1012 = vrot.slane %v1010, 5
      %v1013 = vor.u32 %v1009, %v1012
      %v1014 = vrot.slane %v1013, 4
      %v1016 = vshll.u32 %v983, 16
      %v1018 = vrot.slane %v1016, 5
      %v1019 = vsel %vm454, %v1014, %v1018
      %v1020 = vshrl.u32 %v983, 16
      %v1022 = vrot.slane %v1020, 4
      %v1023 = vor.u32 %v1022, %v1018
      %v1024 = vrot.slane %v1023, 4
      %v1026 = vshll.u32 %v984, 16
      %v1028 = vrot.slane %v1026, 5
      %v1029 = vsel %vm454, %v1024, %v1028
      %v1031 = vshrl.u32 %v985, 16
      %v1033 = vrot.slane %v1031, 4
      %v1034 = vshll.u32 %v985, 16
      %v1036 = vrot.slane %v1034, 5
      %v1037 = vor.u32 %v1033, %v1036
      %v1038 = vrot.slane %v1037, 4
      %v1040 = vshll.u32 %v986, 16
      %v1042 = vrot.slane %v1040, 5
      %v1043 = vsel %vm454, %v1038, %v1042
      %v1044 = vshrl.u32 %v986, 16
      %v1046 = vrot.slane %v1044, 4
      %v1047 = vor.u32 %v1046, %v1042
      %v1048 = vrot.slane %v1047, 4
      %v1050 = vshll.u32 %v987, 16
      %v1052 = vrot.slane %v1050, 5
      %v1053 = vsel %vm454, %v1048, %v1052
      %v1055 = vshrl.u32 %v988, 16
      %v1057 = vrot.slane %v1055, 4
      %v1058 = vshll.u32 %v988, 16
      %v1060 = vrot.slane %v1058, 5
      %v1061 = vor.u32 %v1057, %v1060
      %v1062 = vrot.slane %v1061, 4
      %v1064 = vshll.u32 %v989, 16
      %v1066 = vrot.slane %v1064, 5
      %v1067 = vsel %vm454, %v1062, %v1066
      %v1068 = vshrl.u32 %v989, 16
      %v1070 = vrot.slane %v1068, 4
      %v1071 = vor.u32 %v1070, %v1066
      %v1072 = vrot.slane %v1071, 4
      %v1074 = vshll.u32 %v990, 16
      %v1076 = vrot.slane %v1074, 5
      %v1077 = vsel %vm454, %v1072, %v1076
      %v1079 = vshrl.u32 %v991, 16
      %v1081 = vrot.slane %v1079, 4
      %v1082 = vshll.u32 %v991, 16
      %v1084 = vrot.slane %v1082, 5
      %v1085 = vor.u32 %v1081, %v1084
      %v1086 = vrot.slane %v1085, 4
      %v1088 = vshll.u32 %v992, 16
      %v1090 = vrot.slane %v1088, 5
      %v1091 = vsel %vm454, %v1086, %v1090
      %v1092 = vshrl.u32 %v992, 16
      %v1094 = vrot.slane %v1092, 4
      %v1095 = vor.u32 %v1094, %v1090
      %v1096 = vrot.slane %v1095, 4
      %v1098 = vshll.u32 %v993, 16
      %v1100 = vrot.slane %v1098, 5
      %v1101 = vsel %vm454, %v1096, %v1100
      %v1103 = vshrl.u32 %v994, 16
      %v1105 = vrot.slane %v1103, 4
      %v1106 = vshll.u32 %v994, 16
      %v1108 = vrot.slane %v1106, 5
      %v1109 = vor.u32 %v1105, %v1108
      %v1110 = vrot.slane %v1109, 4
      %v1112 = vshll.u32 %v995, 16
      %v1114 = vrot.slane %v1112, 5
      %v1115 = vsel %vm454, %v1110, %v1114
      %v1116 = vshrl.u32 %v995, 16
      %v1118 = vrot.slane %v1116, 4
      %v1119 = vor.u32 %v1118, %v1114
      %v1120 = vrot.slane %v1119, 4
      %v1122 = vshll.u32 %v996, 16
      %v1124 = vrot.slane %v1122, 5
      %v1125 = vsel %vm454, %v1120, %v1124
      %v1127 = vshrl.u32 %v997, 16
      %v1129 = vrot.slane %v1127, 4
      %v1130 = vshll.u32 %v997, 16
      %v1132 = vrot.slane %v1130, 5
      %v1133 = vor.u32 %v1129, %v1132
      %v1134 = vrot.slane %v1133, 4
      %v1136 = vshll.u32 %v998, 16
      %v1138 = vrot.slane %v1136, 5
      %v1139 = vsel %vm454, %v1134, %v1138
      %v1140 = vshrl.u32 %v998, 16
      %v1142 = vrot.slane %v1140, 4
      %v1143 = vor.u32 %v1142, %v1138
      %v1144 = vrot.slane %v1143, 4
      %v1146 = vshll.u32 %v999, 16
      %v1148 = vrot.slane %v1146, 5
      %v1149 = vsel %vm454, %v1144, %v1148
      %v1151 = vshrl.u32 %v1000, 16
      %v1153 = vrot.slane %v1151, 4
      %v1154 = vshll.u32 %v1000, 16
      %v1156 = vrot.slane %v1154, 5
      %v1157 = vor.u32 %v1153, %v1156
      %v1158 = vrot.slane %v1157, 4
      %v1160 = vshll.u32 %v1001, 16
      %v1162 = vrot.slane %v1160, 5
      %v1163 = vsel %vm454, %v1158, %v1162
      %v1164 = vshrl.u32 %v1001, 16
      %v1166 = vrot.slane %v1164, 4
      %v1167 = vor.u32 %v1166, %v1162
      %v1168 = vrot.slane %v1167, 4
      %v1170 = vshll.u32 %v1002, 16
      %v1172 = vrot.slane %v1170, 5
      %v1173 = vsel %vm454, %v1168, %v1172
      %v1175 = vshrl.u32 %v1003, 16
      %v1177 = vrot.slane %v1175, 4
      %v1178 = vshll.u32 %v1003, 16
      %v1180 = vrot.slane %v1178, 5
      %v1181 = vor.u32 %v1177, %v1180
      %v1182 = vrot.slane %v1181, 4
      %v1184 = vshll.u32 %v1004, 16
      %v1186 = vrot.slane %v1184, 5
      %v1187 = vsel %vm454, %v1182, %v1186
      %v1188 = vshrl.u32 %v1004, 16
      %v1190 = vrot.slane %v1188, 4
      %v1191 = vor.u32 %v1190, %v1186
      %v1192 = vrot.slane %v1191, 4
      %v1194 = vshll.u32 %v1005, 16
      %v1196 = vrot.slane %v1194, 5
      %v1197 = vsel %vm454, %v1192, %v1196
      %1198 = vrot.lane.b32.xlu0 %v1019, 16
      %v1199 = vpop.permute.xlu0 %1198
      %1200 = vrot.lane.b32.xlu0 %v1029, 16
      %v1201 = vpop.permute.xlu0 %1200
      %1202 = vrot.lane.b32.xlu0 %v1043, 16
      %v1203 = vpop.permute.xlu0 %1202
      %1204 = vrot.lane.b32.xlu0 %v1053, 16
      %v1205 = vpop.permute.xlu0 %1204
      %1206 = vrot.lane.b32.xlu0 %v1067, 16
      %v1207 = vpop.permute.xlu0 %1206
      %1208 = vrot.lane.b32.xlu0 %v1077, 16
      %v1209 = vpop.permute.xlu0 %1208
      %1210 = vrot.lane.b32.xlu0 %v1091, 16
      %v1211 = vpop.permute.xlu0 %1210
      %1212 = vrot.lane.b32.xlu0 %v1101, 16
      %v1213 = vpop.permute.xlu0 %1212
      %1214 = vrot.lane.b32.xlu0 %v1115, 16
      %v1215 = vpop.permute.xlu0 %1214
      %1216 = vrot.lane.b32.xlu0 %v1125, 16
      %v1217 = vpop.permute.xlu0 %1216
      %1218 = vrot.lane.b32.xlu0 %v1139, 16
      %v1219 = vpop.permute.xlu0 %1218
      %1220 = vrot.lane.b32.xlu0 %v1149, 16
      %v1221 = vpop.permute.xlu0 %1220
      %1222 = vrot.lane.b32.xlu0 %v1163, 16
      %v1223 = vpop.permute.xlu0 %1222
      %1224 = vrot.lane.b32.xlu0 %v1173, 16
      %v1225 = vpop.permute.xlu0 %1224
      %1226 = vrot.lane.b32.xlu0 %v1187, 16
      %v1227 = vpop.permute.xlu0 %1226
      %1228 = vrot.lane.b32.xlu0 %v1197, 16
      %v1229 = vpop.permute.xlu0 %1228
      %vm1246 = vcmask 158848
      %1247 = vst.msk [vmem:[#allocation3] sm:$0xf] %vm1246, %v1199
      %1248 = vst.msk [vmem:[#allocation3 + $0x4] sm:$0xf] %vm1246, %v1201
      %1249 = vst.msk [vmem:[#allocation3 + $0x8] sm:$0xf] %vm1246, %v1203
      %1250 = vst.msk [vmem:[#allocation3 + $0xc] sm:$0xf] %vm1246, %v1205
      %1251 = vst.msk [vmem:[#allocation3 + $0x10] sm:$0xf] %vm1246, %v1207
      %1252 = vst.msk [vmem:[#allocation3 + $0x14] sm:$0xf] %vm1246, %v1209
      %1253 = vst.msk [vmem:[#allocation3 + $0x18] sm:$0xf] %vm1246, %v1211
      %1254 = vst.msk [vmem:[#allocation3 + $0x1c] sm:$0xf] %vm1246, %v1213
      %1255 = vst.msk [vmem:[#allocation3 + $0x20] sm:$0xf] %vm1246, %v1215
      %1256 = vst.msk [vmem:[#allocation3 + $0x24] sm:$0xf] %vm1246, %v1217
      %1257 = vst.msk [vmem:[#allocation3 + $0x28] sm:$0xf] %vm1246, %v1219
      %1258 = vst.msk [vmem:[#allocation3 + $0x2c] sm:$0xf] %vm1246, %v1221
      %1259 = vst.msk [vmem:[#allocation3 + $0x30] sm:$0xf] %vm1246, %v1223
      %1260 = vst.msk [vmem:[#allocation3 + $0x34] sm:$0xf] %vm1246, %v1225
      %1261 = vst.msk [vmem:[#allocation3 + $0x38] sm:$0xf] %vm1246, %v1227
      %1262 = vst.msk [vmem:[#allocation3 + $0x3c] sm:$0xf] %vm1246, %v1229
      %v1263 = vld [vmem:[%s884] sm:$0xe]
      %v1264 = vld [vmem:[%s884 + $0x4] sm:$0xf]
      %v1265 = vld [vmem:[%s884 + $0x8] sm:$0x1]
      %v1266 = vld [vmem:[%s884 + $0xc] sm:$0xe]
      %v1267 = vld [vmem:[%s884 + $0x10] sm:$0xf]
      %v1268 = vld [vmem:[%s884 + $0x14] sm:$0x1]
      %v1269 = vld [vmem:[%s884 + $0x18] sm:$0xe]
      %v1270 = vld [vmem:[%s884 + $0x1c] sm:$0xf]
      %v1271 = vld [vmem:[%s884 + $0x20] sm:$0x1]
      %v1272 = vld [vmem:[%s884 + $0x24] sm:$0xe]
      %v1273 = vld [vmem:[%s884 + $0x28] sm:$0xf]
      %v1274 = vld [vmem:[%s884 + $0x2c] sm:$0x1]
      %v1275 = vld [vmem:[%s884 + $0x30] sm:$0xe]
      %v1276 = vld [vmem:[%s884 + $0x34] sm:$0xf]
      %v1277 = vld [vmem:[%s884 + $0x38] sm:$0x1]
      %v1278 = vld [vmem:[%s884 + $0x3c] sm:$0xe]
      %v1279 = vld [vmem:[%s884 + $0x40] sm:$0xf]
      %v1280 = vld [vmem:[%s884 + $0x44] sm:$0x1]
      %v1281 = vld [vmem:[%s884 + $0x48] sm:$0xe]
      %v1282 = vld [vmem:[%s884 + $0x4c] sm:$0xf]
      %v1283 = vld [vmem:[%s884 + $0x50] sm:$0x1]
      %v1284 = vld [vmem:[%s884 + $0x54] sm:$0xe]
      %v1285 = vld [vmem:[%s884 + $0x58] sm:$0xf]
      %v1286 = vld [vmem:[%s884 + $0x5c] sm:$0x1]
      %v1311 = vrot.slane %v1263, 5
      %v1312 = vrot.slane %v1311, 4
      %v1313 = vrot.slane %v1264, 5
      %v1314 = vsel %vm762, %v1312, %v1313
      %v1315 = vrot.slane %v1313, 4
      %v1316 = vrot.slane %v1265, 5
      %v1317 = vsel %vm762, %v1315, %v1316
      %v1318 = vrot.slane %v1266, 5
      %v1319 = vrot.slane %v1318, 4
      %v1320 = vrot.slane %v1267, 5
      %v1321 = vsel %vm762, %v1319, %v1320
      %v1322 = vrot.slane %v1320, 4
      %v1323 = vrot.slane %v1268, 5
      %v1324 = vsel %vm762, %v1322, %v1323
      %v1325 = vrot.slane %v1269, 5
      %v1326 = vrot.slane %v1325, 4
      %v1327 = vrot.slane %v1270, 5
      %v1328 = vsel %vm762, %v1326, %v1327
      %v1329 = vrot.slane %v1327, 4
      %v1330 = vrot.slane %v1271, 5
      %v1331 = vsel %vm762, %v1329, %v1330
      %v1332 = vrot.slane %v1272, 5
      %v1333 = vrot.slane %v1332, 4
      %v1334 = vrot.slane %v1273, 5
      %v1335 = vsel %vm762, %v1333, %v1334
      %v1336 = vrot.slane %v1334, 4
      %v1337 = vrot.slane %v1274, 5
      %v1338 = vsel %vm762, %v1336, %v1337
      %v1339 = vrot.slane %v1275, 5
      %v1340 = vrot.slane %v1339, 4
      %v1341 = vrot.slane %v1276, 5
      %v1342 = vsel %vm762, %v1340, %v1341
      %v1343 = vrot.slane %v1341, 4
      %v1344 = vrot.slane %v1277, 5
      %v1345 = vsel %vm762, %v1343, %v1344
      %v1346 = vrot.slane %v1278, 5
      %v1347 = vrot.slane %v1346, 4
      %v1348 = vrot.slane %v1279, 5
      %v1349 = vsel %vm762, %v1347, %v1348
      %v1350 = vrot.slane %v1348, 4
      %v1351 = vrot.slane %v1280, 5
      %v1352 = vsel %vm762, %v1350, %v1351
      %v1353 = vrot.slane %v1281, 5
      %v1354 = vrot.slane %v1353, 4
      %v1355 = vrot.slane %v1282, 5
      %v1356 = vsel %vm762, %v1354, %v1355
      %v1357 = vrot.slane %v1355, 4
      %v1358 = vrot.slane %v1283, 5
      %v1359 = vsel %vm762, %v1357, %v1358
      %v1360 = vrot.slane %v1284, 5
      %v1361 = vrot.slane %v1360, 4
      %v1362 = vrot.slane %v1285, 5
      %v1363 = vsel %vm762, %v1361, %v1362
      %v1364 = vrot.slane %v1362, 4
      %v1365 = vrot.slane %v1286, 5
      %v1366 = vsel %vm762, %v1364, %v1365
      %1367 = vrot.lane.b32.xlu0 %v1314, 20
      %v1368 = vpop.permute.xlu0 %1367
      %1369 = vrot.lane.b32.xlu0 %v1317, 20
      %v1370 = vpop.permute.xlu0 %1369
      %1371 = vrot.lane.b32.xlu0 %v1321, 20
      %v1372 = vpop.permute.xlu0 %1371
      %1373 = vrot.lane.b32.xlu0 %v1324, 20
      %v1374 = vpop.permute.xlu0 %1373
      %1375 = vrot.lane.b32.xlu0 %v1328, 20
      %v1376 = vpop.permute.xlu0 %1375
      %1377 = vrot.lane.b32.xlu0 %v1331, 20
      %v1378 = vpop.permute.xlu0 %1377
      %1379 = vrot.lane.b32.xlu0 %v1335, 20
      %v1380 = vpop.permute.xlu0 %1379
      %1381 = vrot.lane.b32.xlu0 %v1338, 20
      %v1382 = vpop.permute.xlu0 %1381
      %1383 = vrot.lane.b32.xlu0 %v1342, 20
      %v1384 = vpop.permute.xlu0 %1383
      %1385 = vrot.lane.b32.xlu0 %v1345, 20
      %v1386 = vpop.permute.xlu0 %1385
      %1387 = vrot.lane.b32.xlu0 %v1349, 20
      %v1388 = vpop.permute.xlu0 %1387
      %1389 = vrot.lane.b32.xlu0 %v1352, 20
      %v1390 = vpop.permute.xlu0 %1389
      %1391 = vrot.lane.b32.xlu0 %v1356, 20
      %v1392 = vpop.permute.xlu0 %1391
      %1393 = vrot.lane.b32.xlu0 %v1359, 20
      %v1394 = vpop.permute.xlu0 %1393
      %1395 = vrot.lane.b32.xlu0 %v1363, 20
      %v1396 = vpop.permute.xlu0 %1395
      %1397 = vrot.lane.b32.xlu0 %v1366, 20
      %v1398 = vpop.permute.xlu0 %1397
      %vm1415 = vcmask 191648
      %1416 = vst.msk [vmem:[#allocation3] sm:$0xf] %vm1415, %v1368
      %1417 = vst.msk [vmem:[#allocation3 + $0x4] sm:$0xf] %vm1415, %v1370
      %1418 = vst.msk [vmem:[#allocation3 + $0x8] sm:$0xf] %vm1415, %v1372
      %1419 = vst.msk [vmem:[#allocation3 + $0xc] sm:$0xf] %vm1415, %v1374
      %1420 = vst.msk [vmem:[#allocation3 + $0x10] sm:$0xf] %vm1415, %v1376
      %1421 = vst.msk [vmem:[#allocation3 + $0x14] sm:$0xf] %vm1415, %v1378
      %1422 = vst.msk [vmem:[#allocation3 + $0x18] sm:$0xf] %vm1415, %v1380
      %1423 = vst.msk [vmem:[#allocation3 + $0x1c] sm:$0xf] %vm1415, %v1382
      %1424 = vst.msk [vmem:[#allocation3 + $0x20] sm:$0xf] %vm1415, %v1384
      %1425 = vst.msk [vmem:[#allocation3 + $0x24] sm:$0xf] %vm1415, %v1386
      %1426 = vst.msk [vmem:[#allocation3 + $0x28] sm:$0xf] %vm1415, %v1388
      %1427 = vst.msk [vmem:[#allocation3 + $0x2c] sm:$0xf] %vm1415, %v1390
      %1428 = vst.msk [vmem:[#allocation3 + $0x30] sm:$0xf] %vm1415, %v1392
      %1429 = vst.msk [vmem:[#allocation3 + $0x34] sm:$0xf] %vm1415, %v1394
      %1430 = vst.msk [vmem:[#allocation3 + $0x38] sm:$0xf] %vm1415, %v1396
      %1431 = vst.msk [vmem:[#allocation3 + $0x3c] sm:$0xf] %vm1415, %v1398
      %s1432 = scalar_lea.vmem [#allocation2], 24
      %v1433 = vld [vmem:[%s1432] sm:$0xf]
      %v1434 = vld [vmem:[%s1432 + $0x4] sm:$0xf]
      %v1435 = vld [vmem:[%s1432 + $0xc] sm:$0xf]
      %v1436 = vld [vmem:[%s1432 + $0x10] sm:$0xf]
      %v1437 = vld [vmem:[%s1432 + $0x18] sm:$0xf]
      %v1438 = vld [vmem:[%s1432 + $0x1c] sm:$0xf]
      %v1439 = vld [vmem:[%s1432 + $0x24] sm:$0xf]
      %v1440 = vld [vmem:[%s1432 + $0x28] sm:$0xf]
      %v1441 = vld [vmem:[%s1432 + $0x30] sm:$0xf]
      %v1442 = vld [vmem:[%s1432 + $0x34] sm:$0xf]
      %v1443 = vld [vmem:[%s1432 + $0x3c] sm:$0xf]
      %v1444 = vld [vmem:[%s1432 + $0x40] sm:$0xf]
      %v1445 = vld [vmem:[%s1432 + $0x48] sm:$0xf]
      %v1446 = vld [vmem:[%s1432 + $0x4c] sm:$0xf]
      %v1447 = vld [vmem:[%s1432 + $0x54] sm:$0xf]
      %v1448 = vld [vmem:[%s1432 + $0x58] sm:$0xf]
      %1465 = vrot.lane.b32.xlu0 %v1433, 24
      %v1466 = vpop.permute.xlu0 %1465
      %1467 = vrot.lane.b32.xlu0 %v1434, 24
      %v1468 = vpop.permute.xlu0 %1467
      %1469 = vrot.lane.b32.xlu0 %v1435, 24
      %v1470 = vpop.permute.xlu0 %1469
      %1471 = vrot.lane.b32.xlu0 %v1436, 24
      %v1472 = vpop.permute.xlu0 %1471
      %1473 = vrot.lane.b32.xlu0 %v1437, 24
      %v1474 = vpop.permute.xlu0 %1473
      %1475 = vrot.lane.b32.xlu0 %v1438, 24
      %v1476 = vpop.permute.xlu0 %1475
      %1477 = vrot.lane.b32.xlu0 %v1439, 24
      %v1478 = vpop.permute.xlu0 %1477
      %1479 = vrot.lane.b32.xlu0 %v1440, 24
      %v1480 = vpop.permute.xlu0 %1479
      %1481 = vrot.lane.b32.xlu0 %v1441, 24
      %v1482 = vpop.permute.xlu0 %1481
      %1483 = vrot.lane.b32.xlu0 %v1442, 24
      %v1484 = vpop.permute.xlu0 %1483
      %1485 = vrot.lane.b32.xlu0 %v1443, 24
      %v1486 = vpop.permute.xlu0 %1485
      %1487 = vrot.lane.b32.xlu0 %v1444, 24
      %v1488 = vpop.permute.xlu0 %1487
      %1489 = vrot.lane.b32.xlu0 %v1445, 24
      %v1490 = vpop.permute.xlu0 %1489
      %1491 = vrot.lane.b32.xlu0 %v1446, 24
      %v1492 = vpop.permute.xlu0 %1491
      %1493 = vrot.lane.b32.xlu0 %v1447, 24
      %v1494 = vpop.permute.xlu0 %1493
      %1495 = vrot.lane.b32.xlu0 %v1448, 24
      %v1496 = vpop.permute.xlu0 %1495
      %vm1513 = vcmask 224448
      %1514 = vst.msk [vmem:[#allocation3] sm:$0xf] %vm1513, %v1466
      %1515 = vst.msk [vmem:[#allocation3 + $0x4] sm:$0xf] %vm1513, %v1468
      %1516 = vst.msk [vmem:[#allocation3 + $0x8] sm:$0xf] %vm1513, %v1470
      %1517 = vst.msk [vmem:[#allocation3 + $0xc] sm:$0xf] %vm1513, %v1472
      %1518 = vst.msk [vmem:[#allocation3 + $0x10] sm:$0xf] %vm1513, %v1474
      %1519 = vst.msk [vmem:[#allocation3 + $0x14] sm:$0xf] %vm1513, %v1476
      %1520 = vst.msk [vmem:[#allocation3 + $0x18] sm:$0xf] %vm1513, %v1478
      %1521 = vst.msk [vmem:[#allocation3 + $0x1c] sm:$0xf] %vm1513, %v1480
      %1522 = vst.msk [vmem:[#allocation3 + $0x20] sm:$0xf] %vm1513, %v1482
      %1523 = vst.msk [vmem:[#allocation3 + $0x24] sm:$0xf] %vm1513, %v1484
      %1524 = vst.msk [vmem:[#allocation3 + $0x28] sm:$0xf] %vm1513, %v1486
      %1525 = vst.msk [vmem:[#allocation3 + $0x2c] sm:$0xf] %vm1513, %v1488
      %1526 = vst.msk [vmem:[#allocation3 + $0x30] sm:$0xf] %vm1513, %v1490
      %1527 = vst.msk [vmem:[#allocation3 + $0x34] sm:$0xf] %vm1513, %v1492
      %1528 = vst.msk [vmem:[#allocation3 + $0x38] sm:$0xf] %vm1513, %v1494
      %1529 = vst.msk [vmem:[#allocation3 + $0x3c] sm:$0xf] %vm1513, %v1496
      %v1530 = vld [vmem:[%s1432] sm:$0xf]
      %v1531 = vld [vmem:[%s1432 + $0x4] sm:$0xf]
      %v1532 = vld [vmem:[%s1432 + $0x8] sm:$0x1]
      %v1533 = vld [vmem:[%s1432 + $0xc] sm:$0xf]
      %v1534 = vld [vmem:[%s1432 + $0x10] sm:$0xf]
      %v1535 = vld [vmem:[%s1432 + $0x14] sm:$0x1]
      %v1536 = vld [vmem:[%s1432 + $0x18] sm:$0xf]
      %v1537 = vld [vmem:[%s1432 + $0x1c] sm:$0xf]
      %v1538 = vld [vmem:[%s1432 + $0x20] sm:$0x1]
      %v1539 = vld [vmem:[%s1432 + $0x24] sm:$0xf]
      %v1540 = vld [vmem:[%s1432 + $0x28] sm:$0xf]
      %v1541 = vld [vmem:[%s1432 + $0x2c] sm:$0x1]
      %v1542 = vld [vmem:[%s1432 + $0x30] sm:$0xf]
      %v1543 = vld [vmem:[%s1432 + $0x34] sm:$0xf]
      %v1544 = vld [vmem:[%s1432 + $0x38] sm:$0x1]
      %v1545 = vld [vmem:[%s1432 + $0x3c] sm:$0xf]
      %v1546 = vld [vmem:[%s1432 + $0x40] sm:$0xf]
      %v1547 = vld [vmem:[%s1432 + $0x44] sm:$0x1]
      %v1548 = vld [vmem:[%s1432 + $0x48] sm:$0xf]
      %v1549 = vld [vmem:[%s1432 + $0x4c] sm:$0xf]
      %v1550 = vld [vmem:[%s1432 + $0x50] sm:$0x1]
      %v1551 = vld [vmem:[%s1432 + $0x54] sm:$0xf]
      %v1552 = vld [vmem:[%s1432 + $0x58] sm:$0xf]
      %v1553 = vld [vmem:[%s1432 + $0x5c] sm:$0x1]
      %v1555 = vshrl.u32 %v1530, 16
      %v1557 = vrot.slane %v1555, 4
      %v1558 = vshll.u32 %v1530, 16
      %v1560 = vrot.slane %v1558, 5
      %v1561 = vor.u32 %v1557, %v1560
      %v1562 = vrot.slane %v1561, 4
      %v1564 = vshll.u32 %v1531, 16
      %v1566 = vrot.slane %v1564, 5
      %v1567 = vsel %vm454, %v1562, %v1566
      %v1568 = vshrl.u32 %v1531, 16
      %v1570 = vrot.slane %v1568, 4
      %v1571 = vor.u32 %v1570, %v1566
      %v1572 = vrot.slane %v1571, 4
      %v1574 = vshll.u32 %v1532, 16
      %v1576 = vrot.slane %v1574, 5
      %v1577 = vsel %vm454, %v1572, %v1576
      %v1579 = vshrl.u32 %v1533, 16
      %v1581 = vrot.slane %v1579, 4
      %v1582 = vshll.u32 %v1533, 16
      %v1584 = vrot.slane %v1582, 5
      %v1585 = vor.u32 %v1581, %v1584
      %v1586 = vrot.slane %v1585, 4
      %v1588 = vshll.u32 %v1534, 16
      %v1590 = vrot.slane %v1588, 5
      %v1591 = vsel %vm454, %v1586, %v1590
      %v1592 = vshrl.u32 %v1534, 16
      %v1594 = vrot.slane %v1592, 4
      %v1595 = vor.u32 %v1594, %v1590
      %v1596 = vrot.slane %v1595, 4
      %v1598 = vshll.u32 %v1535, 16
      %v1600 = vrot.slane %v1598, 5
      %v1601 = vsel %vm454, %v1596, %v1600
      %v1603 = vshrl.u32 %v1536, 16
      %v1605 = vrot.slane %v1603, 4
      %v1606 = vshll.u32 %v1536, 16
      %v1608 = vrot.slane %v1606, 5
      %v1609 = vor.u32 %v1605, %v1608
      %v1610 = vrot.slane %v1609, 4
      %v1612 = vshll.u32 %v1537, 16
      %v1614 = vrot.slane %v1612, 5
      %v1615 = vsel %vm454, %v1610, %v1614
      %v1616 = vshrl.u32 %v1537, 16
      %v1618 = vrot.slane %v1616, 4
      %v1619 = vor.u32 %v1618, %v1614
      %v1620 = vrot.slane %v1619, 4
      %v1622 = vshll.u32 %v1538, 16
      %v1624 = vrot.slane %v1622, 5
      %v1625 = vsel %vm454, %v1620, %v1624
      %v1627 = vshrl.u32 %v1539, 16
      %v1629 = vrot.slane %v1627, 4
      %v1630 = vshll.u32 %v1539, 16
      %v1632 = vrot.slane %v1630, 5
      %v1633 = vor.u32 %v1629, %v1632
      %v1634 = vrot.slane %v1633, 4
      %v1636 = vshll.u32 %v1540, 16
      %v1638 = vrot.slane %v1636, 5
      %v1639 = vsel %vm454, %v1634, %v1638
      %v1640 = vshrl.u32 %v1540, 16
      %v1642 = vrot.slane %v1640, 4
      %v1643 = vor.u32 %v1642, %v1638
      %v1644 = vrot.slane %v1643, 4
      %v1646 = vshll.u32 %v1541, 16
      %v1648 = vrot.slane %v1646, 5
      %v1649 = vsel %vm454, %v1644, %v1648
      %v1651 = vshrl.u32 %v1542, 16
      %v1653 = vrot.slane %v1651, 4
      %v1654 = vshll.u32 %v1542, 16
      %v1656 = vrot.slane %v1654, 5
      %v1657 = vor.u32 %v1653, %v1656
      %v1658 = vrot.slane %v1657, 4
      %v1660 = vshll.u32 %v1543, 16
      %v1662 = vrot.slane %v1660, 5
      %v1663 = vsel %vm454, %v1658, %v1662
      %v1664 = vshrl.u32 %v1543, 16
      %v1666 = vrot.slane %v1664, 4
      %v1667 = vor.u32 %v1666, %v1662
      %v1668 = vrot.slane %v1667, 4
      %v1670 = vshll.u32 %v1544, 16
      %v1672 = vrot.slane %v1670, 5
      %v1673 = vsel %vm454, %v1668, %v1672
      %v1675 = vshrl.u32 %v1545, 16
      %v1677 = vrot.slane %v1675, 4
      %v1678 = vshll.u32 %v1545, 16
      %v1680 = vrot.slane %v1678, 5
      %v1681 = vor.u32 %v1677, %v1680
      %v1682 = vrot.slane %v1681, 4
      %v1684 = vshll.u32 %v1546, 16
      %v1686 = vrot.slane %v1684, 5
      %v1687 = vsel %vm454, %v1682, %v1686
      %v1688 = vshrl.u32 %v1546, 16
      %v1690 = vrot.slane %v1688, 4
      %v1691 = vor.u32 %v1690, %v1686
      %v1692 = vrot.slane %v1691, 4
      %v1694 = vshll.u32 %v1547, 16
      %v1696 = vrot.slane %v1694, 5
      %v1697 = vsel %vm454, %v1692, %v1696
      %v1699 = vshrl.u32 %v1548, 16
      %v1701 = vrot.slane %v1699, 4
      %v1702 = vshll.u32 %v1548, 16
      %v1704 = vrot.slane %v1702, 5
      %v1705 = vor.u32 %v1701, %v1704
      %v1706 = vrot.slane %v1705, 4
      %v1708 = vshll.u32 %v1549, 16
      %v1710 = vrot.slane %v1708, 5
      %v1711 = vsel %vm454, %v1706, %v1710
      %v1712 = vshrl.u32 %v1549, 16
      %v1714 = vrot.slane %v1712, 4
      %v1715 = vor.u32 %v1714, %v1710
      %v1716 = vrot.slane %v1715, 4
      %v1718 = vshll.u32 %v1550, 16
      %v1720 = vrot.slane %v1718, 5
      %v1721 = vsel %vm454, %v1716, %v1720
      %v1723 = vshrl.u32 %v1551, 16
      %v1725 = vrot.slane %v1723, 4
      %v1726 = vshll.u32 %v1551, 16
      %v1728 = vrot.slane %v1726, 5
      %v1729 = vor.u32 %v1725, %v1728
      %v1730 = vrot.slane %v1729, 4
      %v1732 = vshll.u32 %v1552, 16
      %v1734 = vrot.slane %v1732, 5
      %v1735 = vsel %vm454, %v1730, %v1734
      %v1736 = vshrl.u32 %v1552, 16
      %v1738 = vrot.slane %v1736, 4
      %v1739 = vor.u32 %v1738, %v1734
      %v1740 = vrot.slane %v1739, 4
      %v1742 = vshll.u32 %v1553, 16
      %v1744 = vrot.slane %v1742, 5
      %v1745 = vsel %vm454, %v1740, %v1744
      %1746 = vrot.lane.b32.xlu0 %v1567, 28
      %v1747 = vpop.permute.xlu0 %1746
      %1748 = vrot.lane.b32.xlu0 %v1577, 28
      %v1749 = vpop.permute.xlu0 %1748
      %1750 = vrot.lane.b32.xlu0 %v1591, 28
      %v1751 = vpop.permute.xlu0 %1750
      %1752 = vrot.lane.b32.xlu0 %v1601, 28
      %v1753 = vpop.permute.xlu0 %1752
      %1754 = vrot.lane.b32.xlu0 %v1615, 28
      %v1755 = vpop.permute.xlu0 %1754
      %1756 = vrot.lane.b32.xlu0 %v1625, 28
      %v1757 = vpop.permute.xlu0 %1756
      %1758 = vrot.lane.b32.xlu0 %v1639, 28
      %v1759 = vpop.permute.xlu0 %1758
      %1760 = vrot.lane.b32.xlu0 %v1649, 28
      %v1761 = vpop.permute.xlu0 %1760
      %1762 = vrot.lane.b32.xlu0 %v1663, 28
      %v1763 = vpop.permute.xlu0 %1762
      %1764 = vrot.lane.b32.xlu0 %v1673, 28
      %v1765 = vpop.permute.xlu0 %1764
      %1766 = vrot.lane.b32.xlu0 %v1687, 28
      %v1767 = vpop.permute.xlu0 %1766
      %1768 = vrot.lane.b32.xlu0 %v1697, 28
      %v1769 = vpop.permute.xlu0 %1768
      %1770 = vrot.lane.b32.xlu0 %v1711, 28
      %v1771 = vpop.permute.xlu0 %1770
      %1772 = vrot.lane.b32.xlu0 %v1721, 28
      %v1773 = vpop.permute.xlu0 %1772
      %1774 = vrot.lane.b32.xlu0 %v1735, 28
      %v1775 = vpop.permute.xlu0 %1774
      %1776 = vrot.lane.b32.xlu0 %v1745, 28
      %v1777 = vpop.permute.xlu0 %1776
      %vm1794 = vcmask 257248
      %1795 = vst.msk [vmem:[#allocation3] sm:$0xf] %vm1794, %v1747
      %1796 = vst.msk [vmem:[#allocation3 + $0x4] sm:$0xf] %vm1794, %v1749
      %1797 = vst.msk [vmem:[#allocation3 + $0x8] sm:$0xf] %vm1794, %v1751
      %1798 = vst.msk [vmem:[#allocation3 + $0xc] sm:$0xf] %vm1794, %v1753
      %1799 = vst.msk [vmem:[#allocation3 + $0x10] sm:$0xf] %vm1794, %v1755
      %1800 = vst.msk [vmem:[#allocation3 + $0x14] sm:$0xf] %vm1794, %v1757
      %1801 = vst.msk [vmem:[#allocation3 + $0x18] sm:$0xf] %vm1794, %v1759
      %1802 = vst.msk [vmem:[#allocation3 + $0x1c] sm:$0xf] %vm1794, %v1761
      %1803 = vst.msk [vmem:[#allocation3 + $0x20] sm:$0xf] %vm1794, %v1763
      %1804 = vst.msk [vmem:[#allocation3 + $0x24] sm:$0xf] %vm1794, %v1765
      %1805 = vst.msk [vmem:[#allocation3 + $0x28] sm:$0xf] %vm1794, %v1767
      %1806 = vst.msk [vmem:[#allocation3 + $0x2c] sm:$0xf] %vm1794, %v1769
      %1807 = vst.msk [vmem:[#allocation3 + $0x30] sm:$0xf] %vm1794, %v1771
      %1808 = vst.msk [vmem:[#allocation3 + $0x34] sm:$0xf] %vm1794, %v1773
      %1809 = vst.msk [vmem:[#allocation3 + $0x38] sm:$0xf] %vm1794, %v1775
      %1810 = vst.msk [vmem:[#allocation3 + $0x3c] sm:$0xf] %vm1794, %v1777
      %v1811 = vld [vmem:[%s1432] sm:$0xe]
      %v1812 = vld [vmem:[%s1432 + $0x4] sm:$0xf]
      %v1813 = vld [vmem:[%s1432 + $0x8] sm:$0x1]
      %v1814 = vld [vmem:[%s1432 + $0xc] sm:$0xe]
      %v1815 = vld [vmem:[%s1432 + $0x10] sm:$0xf]
      %v1816 = vld [vmem:[%s1432 + $0x14] sm:$0x1]
      %v1817 = vld [vmem:[%s1432 + $0x18] sm:$0xe]
      %v1818 = vld [vmem:[%s1432 + $0x1c] sm:$0xf]
      %v1819 = vld [vmem:[%s1432 + $0x20] sm:$0x1]
      %v1820 = vld [vmem:[%s1432 + $0x24] sm:$0xe]
      %v1821 = vld [vmem:[%s1432 + $0x28] sm:$0xf]
      %v1822 = vld [vmem:[%s1432 + $0x2c] sm:$0x1]
      %v1823 = vld [vmem:[%s1432 + $0x30] sm:$0xe]
      %v1824 = vld [vmem:[%s1432 + $0x34] sm:$0xf]
      %v1825 = vld [vmem:[%s1432 + $0x38] sm:$0x1]
      %v1826 = vld [vmem:[%s1432 + $0x3c] sm:$0xe]
      %v1827 = vld [vmem:[%s1432 + $0x40] sm:$0xf]
      %v1828 = vld [vmem:[%s1432 + $0x44] sm:$0x1]
      %v1829 = vld [vmem:[%s1432 + $0x48] sm:$0xe]
      %v1830 = vld [vmem:[%s1432 + $0x4c] sm:$0xf]
      %v1831 = vld [vmem:[%s1432 + $0x50] sm:$0x1]
      %v1832 = vld [vmem:[%s1432 + $0x54] sm:$0xe]
      %v1833 = vld [vmem:[%s1432 + $0x58] sm:$0xf]
      %v1834 = vld [vmem:[%s1432 + $0x5c] sm:$0x1]
      %v1859 = vrot.slane %v1811, 5
      %v1860 = vrot.slane %v1859, 4
      %v1861 = vrot.slane %v1812, 5
      %v1862 = vsel %vm762, %v1860, %v1861
      %v1863 = vrot.slane %v1861, 4
      %v1864 = vrot.slane %v1813, 5
      %v1865 = vsel %vm762, %v1863, %v1864
      %v1866 = vrot.slane %v1814, 5
      %v1867 = vrot.slane %v1866, 4
      %v1868 = vrot.slane %v1815, 5
      %v1869 = vsel %vm762, %v1867, %v1868
      %v1870 = vrot.slane %v1868, 4
      %v1871 = vrot.slane %v1816, 5
      %v1872 = vsel %vm762, %v1870, %v1871
      %v1873 = vrot.slane %v1817, 5
      %v1874 = vrot.slane %v1873, 4
      %v1875 = vrot.slane %v1818, 5
      %v1876 = vsel %vm762, %v1874, %v1875
      %v1877 = vrot.slane %v1875, 4
      %v1878 = vrot.slane %v1819, 5
      %v1879 = vsel %vm762, %v1877, %v1878
      %v1880 = vrot.slane %v1820, 5
      %v1881 = vrot.slane %v1880, 4
      %v1882 = vrot.slane %v1821, 5
      %v1883 = vsel %vm762, %v1881, %v1882
      %v1884 = vrot.slane %v1882, 4
      %v1885 = vrot.slane %v1822, 5
      %v1886 = vsel %vm762, %v1884, %v1885
      %v1887 = vrot.slane %v1823, 5
      %v1888 = vrot.slane %v1887, 4
      %v1889 = vrot.slane %v1824, 5
      %v1890 = vsel %vm762, %v1888, %v1889
      %v1891 = vrot.slane %v1889, 4
      %v1892 = vrot.slane %v1825, 5
      %v1893 = vsel %vm762, %v1891, %v1892
      %v1894 = vrot.slane %v1826, 5
      %v1895 = vrot.slane %v1894, 4
      %v1896 = vrot.slane %v1827, 5
      %v1897 = vsel %vm762, %v1895, %v1896
      %v1898 = vrot.slane %v1896, 4
      %v1899 = vrot.slane %v1828, 5
      %v1900 = vsel %vm762, %v1898, %v1899
      %v1901 = vrot.slane %v1829, 5
      %v1902 = vrot.slane %v1901, 4
      %v1903 = vrot.slane %v1830, 5
      %v1904 = vsel %vm762, %v1902, %v1903
      %v1905 = vrot.slane %v1903, 4
      %v1906 = vrot.slane %v1831, 5
      %v1907 = vsel %vm762, %v1905, %v1906
      %v1908 = vrot.slane %v1832, 5
      %v1909 = vrot.slane %v1908, 4
      %v1910 = vrot.slane %v1833, 5
      %v1911 = vsel %vm762, %v1909, %v1910
      %v1912 = vrot.slane %v1910, 4
      %v1913 = vrot.slane %v1834, 5
      %v1914 = vsel %vm762, %v1912, %v1913
      %1915 = vrot.lane.b32.xlu0 %v1862, 32
      %v1916 = vpop.permute.xlu0 %1915
      %1917 = vrot.lane.b32.xlu0 %v1865, 32
      %v1918 = vpop.permute.xlu0 %1917
      %1919 = vrot.lane.b32.xlu0 %v1869, 32
      %v1920 = vpop.permute.xlu0 %1919
      %1921 = vrot.lane.b32.xlu0 %v1872, 32
      %v1922 = vpop.permute.xlu0 %1921
      %1923 = vrot.lane.b32.xlu0 %v1876, 32
      %v1924 = vpop.permute.xlu0 %1923
      %1925 = vrot.lane.b32.xlu0 %v1879, 32
      %v1926 = vpop.permute.xlu0 %1925
      %1927 = vrot.lane.b32.xlu0 %v1883, 32
      %v1928 = vpop.permute.xlu0 %1927
      %1929 = vrot.lane.b32.xlu0 %v1886, 32
      %v1930 = vpop.permute.xlu0 %1929
      %1931 = vrot.lane.b32.xlu0 %v1890, 32
      %v1932 = vpop.permute.xlu0 %1931
      %1933 = vrot.lane.b32.xlu0 %v1893, 32
      %v1934 = vpop.permute.xlu0 %1933
      %1935 = vrot.lane.b32.xlu0 %v1897, 32
      %v1936 = vpop.permute.xlu0 %1935
      %1937 = vrot.lane.b32.xlu0 %v1900, 32
      %v1938 = vpop.permute.xlu0 %1937
      %1939 = vrot.lane.b32.xlu0 %v1904, 32
      %v1940 = vpop.permute.xlu0 %1939
      %1941 = vrot.lane.b32.xlu0 %v1907, 32
      %v1942 = vpop.permute.xlu0 %1941
      %1943 = vrot.lane.b32.xlu0 %v1911, 32
      %v1944 = vpop.permute.xlu0 %1943
      %1945 = vrot.lane.b32.xlu0 %v1914, 32
      %v1946 = vpop.permute.xlu0 %1945
      %vm1963 = vcmask 290048
      %1964 = vst.msk [vmem:[#allocation3] sm:$0xf] %vm1963, %v1916
      %1965 = vst.msk [vmem:[#allocation3 + $0x4] sm:$0xf] %vm1963, %v1918
      %1966 = vst.msk [vmem:[#allocation3 + $0x8] sm:$0xf] %vm1963, %v1920
      %1967 = vst.msk [vmem:[#allocation3 + $0xc] sm:$0xf] %vm1963, %v1922
      %1968 = vst.msk [vmem:[#allocation3 + $0x10] sm:$0xf] %vm1963, %v1924
      %1969 = vst.msk [vmem:[#allocation3 + $0x14] sm:$0xf] %vm1963, %v1926
      %1970 = vst.msk [vmem:[#allocation3 + $0x18] sm:$0xf] %vm1963, %v1928
      %1971 = vst.msk [vmem:[#allocation3 + $0x1c] sm:$0xf] %vm1963, %v1930
      %1972 = vst.msk [vmem:[#allocation3 + $0x20] sm:$0xf] %vm1963, %v1932
      %1973 = vst.msk [vmem:[#allocation3 + $0x24] sm:$0xf] %vm1963, %v1934
      %1974 = vst.msk [vmem:[#allocation3 + $0x28] sm:$0xf] %vm1963, %v1936
      %1975 = vst.msk [vmem:[#allocation3 + $0x2c] sm:$0xf] %vm1963, %v1938
      %1976 = vst.msk [vmem:[#allocation3 + $0x30] sm:$0xf] %vm1963, %v1940
      %1977 = vst.msk [vmem:[#allocation3 + $0x34] sm:$0xf] %vm1963, %v1942
      %1978 = vst.msk [vmem:[#allocation3 + $0x38] sm:$0xf] %vm1963, %v1944
      %1979 = vst.msk [vmem:[#allocation3 + $0x3c] sm:$0xf] %vm1963, %v1946
      %v1980 = vld [vmem:[#allocation3] sm:$0xf]
      %v1981 = vld [vmem:[#allocation3 + $0x4] sm:$0xf]
      %v1982 = vld [vmem:[#allocation3 + $0x8] sm:$0xf]
      %v1983 = vld [vmem:[#allocation3 + $0xc] sm:$0xf]
      %v1984 = vld [vmem:[#allocation3 + $0x10] sm:$0xf]
      %v1985 = vld [vmem:[#allocation3 + $0x14] sm:$0xf]
      %v1986 = vld [vmem:[#allocation3 + $0x18] sm:$0xf]
      %v1987 = vld [vmem:[#allocation3 + $0x1c] sm:$0xf]
      %v1988 = vld [vmem:[#allocation3 + $0x20] sm:$0xf]
      %v1989 = vld [vmem:[#allocation3 + $0x24] sm:$0xf]
      %v1990 = vld [vmem:[#allocation3 + $0x28] sm:$0xf]
      %v1991 = vld [vmem:[#allocation3 + $0x2c] sm:$0xf]
      %v1992 = vld [vmem:[#allocation3 + $0x30] sm:$0xf]
      %v1993 = vld [vmem:[#allocation3 + $0x34] sm:$0xf]
      %v1994 = vld [vmem:[#allocation3 + $0x38] sm:$0xf]
      %v1995 = vld [vmem:[#allocation3 + $0x3c] sm:$0xf]
      %v1996 = vld [vmem:[%s2] sm:$0xf]
      %v1997 = vld [vmem:[%s2 + $0x4] sm:$0xf]
      %v1998 = vld [vmem:[%s2 + $0x8] sm:$0xf]
      %v1999 = vld [vmem:[%s2 + $0xc] sm:$0xf]
      %v2000 = vld [vmem:[%s2 + $0x10] sm:$0x3]
      %v2017 = vunpack.c.l.b16 %v1980
      %v2018 = vunpack.c.l.b16 %v1981
      %v2019 = vunpack.c.l.b16 %v1982
      %v2020 = vunpack.c.l.b16 %v1983
      %v2021 = vunpack.c.l.b16 %v1984
      %v2022 = vunpack.c.l.b16 %v1985
      %v2023 = vunpack.c.l.b16 %v1986
      %v2024 = vunpack.c.l.b16 %v1987
      %v2025 = vunpack.c.l.b16 %v1988
      %v2026 = vunpack.c.l.b16 %v1989
      %v2027 = vunpack.c.l.b16 %v1990
      %v2028 = vunpack.c.l.b16 %v1991
      %v2029 = vunpack.c.l.b16 %v1992
      %v2030 = vunpack.c.l.b16 %v1993
      %v2031 = vunpack.c.l.b16 %v1994
      %v2032 = vunpack.c.l.b16 %v1995
      %v2033 = vpack.c.b16 %v2018, %v2017
      %v2034 = vpack.c.b16 %v2020, %v2019
      %v2035 = vpack.c.b16 %v2022, %v2021
      %v2036 = vpack.c.b16 %v2024, %v2023
      %v2037 = vpack.c.b16 %v2026, %v2025
      %v2038 = vpack.c.b16 %v2028, %v2027
      %v2039 = vpack.c.b16 %v2030, %v2029
      %v2040 = vpack.c.b16 %v2032, %v2031
      %v2046 = vunpack.c.l.b16 %v1996
      %v2047 = vunpack.c.l.b16 %v1997
      %v2048 = vunpack.c.l.b16 %v1998
      %v2049 = vunpack.c.l.b16 %v1999
      %v2050 = vunpack.c.l.b16 %v2000
      %v2051 = vpack.c.b16 %v2047, %v2046
      %v2052 = vpack.c.b16 %v2049, %v2048
      %v2053 = vpack.c.b16 %v2050, %v2050
      %vm2056 = vcmask 293888
      %v2058 = vsel %vm2056, %v2033, 0
      %v2061 = vsel %vm2056, %v2034, 0
      %v2064 = vsel %vm2056, %v2035, 0
      %v2067 = vsel %vm2056, %v2036, 0
      %v2070 = vsel %vm2056, %v2037, 0
      %v2073 = vsel %vm2056, %v2038, 0
      %v2076 = vsel %vm2056, %v2039, 0
      %v2079 = vsel %vm2056, %v2040, 0
      %vm2081 = vcmask 1041408
      %v2083 = vsel %vm2081, %v2053, 0
      %2085 = vmatpush.bf16.msra.mxu0 0
      %2086 = vmatpush.bf16.msra.mxu0 0
      %2087 = vmatpush.bf16.msra.mxu0 0
      %2088 = vmatpush.bf16.msra.mxu0 0
      %2089 = vmatpush.bf16.msra.mxu0 0
      %2090 = vmatpush.bf16.msra.mxu0 %v2083
      %2091 = vmatpush.bf16.msra.mxu0 %v2052
      %2092 = vmatpush.bf16.msra.mxu0 %v2051
      %2093 = vmatmul.bf16.gmra.mxu0 %v2058
      %v2094 = vpop.f32.mrf.mxu0
      %v2095 = vadd.f32 0.0, %v2094
      %v2096 = vpop.f32.mrf.mxu0
      %v2097 = vadd.f32 0.0, %v2096
      %2098 = vmatmul.bf16.gmra.mxu0 %v2061
      %v2099 = vpop.f32.mrf.mxu0
      %v2100 = vadd.f32 0.0, %v2099
      %v2101 = vpop.f32.mrf.mxu0
      %v2102 = vadd.f32 0.0, %v2101
      %2103 = vmatmul.bf16.gmra.mxu0 %v2064
      %v2104 = vpop.f32.mrf.mxu0
      %v2105 = vadd.f32 0.0, %v2104
      %v2106 = vpop.f32.mrf.mxu0
      %v2107 = vadd.f32 0.0, %v2106
      %2108 = vmatmul.bf16.gmra.mxu0 %v2067
      %v2109 = vpop.f32.mrf.mxu0
      %v2110 = vadd.f32 0.0, %v2109
      %v2111 = vpop.f32.mrf.mxu0
      %v2112 = vadd.f32 0.0, %v2111
      %2113 = vmatmul.bf16.gmra.mxu0 %v2070
      %v2114 = vpop.f32.mrf.mxu0
      %v2115 = vadd.f32 0.0, %v2114
      %v2116 = vpop.f32.mrf.mxu0
      %v2117 = vadd.f32 0.0, %v2116
      %2118 = vmatmul.bf16.gmra.mxu0 %v2073
      %v2119 = vpop.f32.mrf.mxu0
      %v2120 = vadd.f32 0.0, %v2119
      %v2121 = vpop.f32.mrf.mxu0
      %v2122 = vadd.f32 0.0, %v2121
      %2123 = vmatmul.bf16.gmra.mxu0 %v2076
      %v2124 = vpop.f32.mrf.mxu0
      %v2125 = vadd.f32 0.0, %v2124
      %v2126 = vpop.f32.mrf.mxu0
      %v2127 = vadd.f32 0.0, %v2126
      %2128 = vmatmul.bf16.gmra.mxu0 %v2079
      %v2129 = vpop.f32.mrf.mxu0
      %v2130 = vadd.f32 0.0, %v2129
      %v2131 = vpop.f32.mrf.mxu0
      %v2132 = vadd.f32 0.0, %v2131
      %2133 = vdwg.mxu0
      %vm2134 = vcmask 64512
      %v2135 = vsel %vm2134, %v2095, 0.0
      %v2136 = vsel %vm2134, %v2097, 0.0
      %v2137 = vadd.f32 %v2135, %v2136
      %v2138 = vsel %vm2134, %v2100, 0.0
      %v2139 = vadd.f32 %v2137, %v2138
      %v2140 = vsel %vm2134, %v2102, 0.0
      %v2141 = vadd.f32 %v2139, %v2140
      %v2142 = vsel %vm2134, %v2105, 0.0
      %v2143 = vadd.f32 %v2141, %v2142
      %v2144 = vsel %vm2134, %v2107, 0.0
      %v2145 = vadd.f32 %v2143, %v2144
      %v2146 = vsel %vm2134, %v2110, 0.0
      %v2147 = vadd.f32 %v2145, %v2146
      %v2148 = vsel %vm2134, %v2112, 0.0
      %v2149 = vadd.f32 %v2147, %v2148
      %v2150 = vsel %vm2134, %v2115, 0.0
      %v2151 = vadd.f32 %v2149, %v2150
      %v2152 = vsel %vm2134, %v2117, 0.0
      %v2153 = vadd.f32 %v2151, %v2152
      %v2154 = vsel %vm2134, %v2120, 0.0
      %v2155 = vadd.f32 %v2153, %v2154
      %v2156 = vsel %vm2134, %v2122, 0.0
      %v2157 = vadd.f32 %v2155, %v2156
      %v2158 = vsel %vm2134, %v2125, 0.0
      %v2159 = vadd.f32 %v2157, %v2158
      %v2160 = vsel %vm2134, %v2127, 0.0
      %v2161 = vadd.f32 %v2159, %v2160
      %v2162 = vsel %vm2134, %v2130, 0.0
      %v2163 = vadd.f32 %v2161, %v2162
      %v2164 = vsel %vm2134, %v2132, 0.0
      %v2165 = vadd.f32 %v2163, %v2164
      %v2166 = vrot.slane %v2165, 4
      %v2167 = vadd.f32 %v2165, %v2166
      %v2168 = vrot.slane %v2167, 2
      %v2169 = vadd.f32 %v2167, %v2168
      %v2170 = vrot.slane %v2169, 1
      %v2171 = vadd.f32 %v2169, %v2170
      %v2172 = vmul.f32 %v2171, 0.0078125
      %v2173 = vsub.f32 %v2095, %v2172
      %v2174 = vsub.f32 %v2097, %v2172
      %v2175 = vsub.f32 %v2100, %v2172
      %v2176 = vsub.f32 %v2102, %v2172
      %v2177 = vsub.f32 %v2105, %v2172
      %v2178 = vsub.f32 %v2107, %v2172
      %v2179 = vsub.f32 %v2110, %v2172
      %v2180 = vsub.f32 %v2112, %v2172
      %v2181 = vsub.f32 %v2115, %v2172
      %v2182 = vsub.f32 %v2117, %v2172
      %v2183 = vsub.f32 %v2120, %v2172
      %v2184 = vsub.f32 %v2122, %v2172
      %v2185 = vsub.f32 %v2125, %v2172
      %v2186 = vsub.f32 %v2127, %v2172
      %v2187 = vsub.f32 %v2130, %v2172
      %v2188 = vsub.f32 %v2132, %v2172
      %v2189 = vmul.f32 %v2173, %v2173
      %v2190 = vmul.f32 %v2174, %v2174
      %v2191 = vmul.f32 %v2175, %v2175
      %v2192 = vmul.f32 %v2176, %v2176
      %v2193 = vmul.f32 %v2177, %v2177
      %v2194 = vmul.f32 %v2178, %v2178
      %v2195 = vmul.f32 %v2179, %v2179
      %v2196 = vmul.f32 %v2180, %v2180
      %v2197 = vmul.f32 %v2181, %v2181
      %v2198 = vmul.f32 %v2182, %v2182
      %v2199 = vmul.f32 %v2183, %v2183
      %v2200 = vmul.f32 %v2184, %v2184
      %v2201 = vmul.f32 %v2185, %v2185
      %v2202 = vmul.f32 %v2186, %v2186
      %v2203 = vmul.f32 %v2187, %v2187
      %v2204 = vmul.f32 %v2188, %v2188
      %v2205 = vsel %vm2134, %v2189, 0.0
      %v2206 = vsel %vm2134, %v2190, 0.0
      %v2207 = vadd.f32 %v2205, %v2206
      %v2208 = vsel %vm2134, %v2191, 0.0
      %v2209 = vadd.f32 %v2207, %v2208
      %v2210 = vsel %vm2134, %v2192, 0.0
      %v2211 = vadd.f32 %v2209, %v2210
      %v2212 = vsel %vm2134, %v2193, 0.0
      %v2213 = vadd.f32 %v2211, %v2212
      %v2214 = vsel %vm2134, %v2194, 0.0
      %v2215 = vadd.f32 %v2213, %v2214
      %v2216 = vsel %vm2134, %v2195, 0.0
      %v2217 = vadd.f32 %v2215, %v2216
      %v2218 = vsel %vm2134, %v2196, 0.0
      %v2219 = vadd.f32 %v2217, %v2218
      %v2220 = vsel %vm2134, %v2197, 0.0
      %v2221 = vadd.f32 %v2219, %v2220
      %v2222 = vsel %vm2134, %v2198, 0.0
      %v2223 = vadd.f32 %v2221, %v2222
      %v2224 = vsel %vm2134, %v2199, 0.0
      %v2225 = vadd.f32 %v2223, %v2224
      %v2226 = vsel %vm2134, %v2200, 0.0
      %v2227 = vadd.f32 %v2225, %v2226
      %v2228 = vsel %vm2134, %v2201, 0.0
      %v2229 = vadd.f32 %v2227, %v2228
      %v2230 = vsel %vm2134, %v2202, 0.0
      %v2231 = vadd.f32 %v2229, %v2230
      %v2232 = vsel %vm2134, %v2203, 0.0
      %v2233 = vadd.f32 %v2231, %v2232
      %v2234 = vsel %vm2134, %v2204, 0.0
      %v2235 = vadd.f32 %v2233, %v2234
      %v2236 = vrot.slane %v2235, 4
      %v2237 = vadd.f32 %v2235, %v2236
      %v2238 = vrot.slane %v2237, 2
      %v2239 = vadd.f32 %v2237, %v2238
      %v2240 = vrot.slane %v2239, 1
      %v2241 = vadd.f32 %v2239, %v2240
      %vm2242 = vcmask 57344
      %2243 = vst.msk [vmem:[%s324] sm:$0x1] %vm2242, %v2171
      %2244 = vst.msk [vmem:[%s331] sm:$0x1] %vm2242, %v2241
      %p2245 = scmp.lt.s32.totalorder %s20, 1
      %s2246 = scalar_select %p2245, %s20, 1
      %p2247 = scmp.lt.s32.totalorder %s21, 1
      %s2248 = scalar_select %p2247, %s21, 1
      %s2249 = smul.addr %s2246, 2
      %s2250 = sadd.s32 %s2248, %s2249
      %s2251 = scalar_lea.vmem %s3, %s2250
      %p2252 = scmp.lt.s32.totalorder %s20, 1
      %s2253 = scalar_select %p2252, %s20, 1
      %p2254 = scmp.lt.s32.totalorder %s21, 1
      %s2255 = scalar_select %p2254, %s21, 1
      %s2256 = smul.addr %s2253, 2
      %s2257 = sadd.s32 %s2255, %s2256
      %s2258 = scalar_lea.vmem %s4, %s2257
      // Predicated region
      $region33: #{rescale_layer_forward.2} parent=31 // pred_check
        %p2259 = pneg %p129
      $region34: #{rescale_layer_forward.2} parent=31 // pred_check_branch
        %2261 = sbr.rel (%p2259) target = $region36
      $region35: #{rescale_layer_forward.2} parent=31 // pred_region
        _
      $region36: #{rescale_layer_forward.2} parent=31 // pred_fallthru
        _
      // Predicated region
      $region37: #{rescale_layer_forward.2} parent=31 // pred_check
        %p2262 = pneg %p157
      $region38: #{rescale_layer_forward.2} parent=31 // pred_check_branch
        %2264 = sbr.rel (%p2262) target = $region40
      $region39: #{rescale_layer_forward.2} parent=31 // pred_region
        _
      $region40: #{rescale_layer_forward.2} parent=31 // pred_fallthru
        _
    $region32: #{rescale_layer_forward.2} parent=5 // pred_fallthru
      _
    %p2265 = scmp.le.s32.totalorder 2, %s11
    // Predicated region
    $region41: #{rescale_layer_forward.2} parent=5 // pred_check
      %p2266 = pneg %p2265
    $region42: #{rescale_layer_forward.2} parent=5 // pred_check_branch
      %2268 = sbr.rel (%p2266) target = $region44
    $region43: #{rescale_layer_forward.2} parent=5 // pred_region
      %s2269 = ssub.s32 %s11, 2
      // Predicated region
      $region45: #{rescale_layer_forward.2} parent=43 // pred_check
        %p2270 = pneg %p135
      $region46: #{rescale_layer_forward.2} parent=43 // pred_check_branch
        %2272 = sbr.rel (%p2270) target = $region48
      $region47: #{rescale_layer_forward.2} parent=43 // pred_region
        %p2273 = scmp.lt.s32.totalorder %s22, 1
        %s2274 = scalar_select %p2273, %s22, 1
        %p2275 = scmp.lt.s32.totalorder %s23, 1
        %s2276 = scalar_select %p2275, %s23, 1
        %s2277 = smul.addr %s2274, 2
        %s2278 = sadd.s32 %s2276, %s2277
        %s2279 = scalar_lea.vmem %s3, %s2278
      $region48: #{rescale_layer_forward.2} parent=43 // pred_fallthru
        _
      // Predicated region
      $region49: #{rescale_layer_forward.2} parent=43 // pred_check
        %p2280 = pneg %p163
      $region50: #{rescale_layer_forward.2} parent=43 // pred_check_branch
        %2282 = sbr.rel (%p2280) target = $region52
      $region51: #{rescale_layer_forward.2} parent=43 // pred_region
        %p2283 = scmp.lt.s32.totalorder %s22, 1
        %s2284 = scalar_select %p2283, %s22, 1
        %p2285 = scmp.lt.s32.totalorder %s23, 1
        %s2286 = scalar_select %p2285, %s23, 1
        %s2287 = smul.addr %s2284, 2
        %s2288 = sadd.s32 %s2286, %s2287
        %s2289 = scalar_lea.vmem %s4, %s2288
      $region52: #{rescale_layer_forward.2} parent=43 // pred_fallthru
        _
    $region44: #{rescale_layer_forward.2} parent=5 // pred_fallthru
      _
  $region6: #{rescale_layer_forward.2} parent=0 // loop_footer
    %s15 = sadd.s32 1, %s11
  $region7: #{rescale_layer_forward.2} parent=0 // loop_footer_branch
    %10 = sbr.rel target = $region3
  $region8: #{rescale_layer_forward.2} parent=0 // loop_exit
    _

// kernel: rescale_layer_forward.3
$region0: #{rescale_layer_forward.3}
  #allocation0 [shape = 'u32[]', space=smem, size = 0x4, offset = 0x4, fixed_abs, tag = 'smem constant byte address 0x4 - core index']
  #allocation1 [shape = 'u32[72,128]{1,0:T(1,128)}', space=vmem, size = 0x9000, scoped, tag = 'internal scratch']
  #allocation2 [shape = 'bf16[10,18,4]{2,1,0:T(8,128)(2,1)}', space=vmem, size = 0xf000, scoped, tag = 'scratch operand']
  #allocation3 [shape = 'bf16[128,36]{1,0:T(8,128)(2,1)}', space=vmem, size = 0x8000, scoped, tag = 'scratch operand']
  %s0 = inlined_call_operand.vmem [shape: bf16[2,18,18,4], index: 0, kind: input, shape index: {}, may-alias: {0,1}]
  %s1 = inlined_call_operand.vmem [shape: bf16[2,18,18,4], index: 1, kind: input, shape index: {}, may-alias: {0,1}]
  %s2 = inlined_call_operand.vmem [shape: bf16[36,8], index: 2, kind: input, shape index: {}]
  %s3 = inlined_call_operand.vmem [shape: f32[1,8], index: 3, kind: input, shape index: {}]
  %s4 = inlined_call_operand.vmem [shape: f32[1,8], index: 4, kind: input, shape index: {}]
  %s5 = inlined_call_operand.vmem [shape: f32[2,16,16,8], index: 5, kind: output, shape index: {}]
  %s6 = sld [smem:[#allocation0]]
  $region53: #{rescale_layer_forward.3} parent=0
    _
  %s8 = ssub.s32 1, %s6
  %s9 = scalar_select 0, %s8, %s6
  loop: start=0, step=1, limit=6
  $region2: #{rescale_layer_forward.3} parent=0 // loop_pre_header
    _
  $region3: #{rescale_layer_forward.3} parent=0 // loop_header
    %s11 = sphi 0, %s15
    %p12 = scmp.ge.s32.totalorder %s11, 6
    %s18 = sphi 0, %s30
    %s19 = sphi 0, %s26
    %s20 = sphi 0, %s18
    %s21 = sphi 0, %s19
    %s22 = sphi 0, %s20
    %s23 = sphi 0, %s21
    %s35 = sphi 0, %s37
    %s38 = sphi 0, %s35
    %s39 = sphi 0, %s38
    %s55 = sphi 0, %s39
    %s67 = sphi 0, %s69
    %s70 = sphi 0, %s67
    %s71 = sphi 0, %s70
    %s87 = sphi 0, %s71
    %s91 = sphi 0, %s91
    %s93 = sphi 0, %s91
    %s94 = sphi 0, %s93
    %s108 = sphi 0, %s94
    %s112 = sphi 0, %s112
    %s114 = sphi 0, %s112
    %s115 = sphi 0, %s114
    %s129 = sphi 0, %s115
    %s133 = sphi 0, %s133
    %s135 = sphi 0, %s133
    %s136 = sphi 0, %s135
    %s150 = sphi 0, %s136
    %s158 = sphi 0, %s160
    %s161 = sphi 0, %s158
    %s162 = sphi 0, %s161
    %s178 = sphi 0, %s162
  $region4: #{rescale_layer_forward.3} parent=0 // loop_header_branch
    %14 = sbr.rel (%p12) target = $region8
  $region5: #{rescale_layer_forward.3} parent=0 // loop_body
    %s16 = ssub.s32 %s11, 1
    %s17 = ssub.s32 %s11, 2
    %s24 = sadd.s32 1, %s19
    %p25 = scmp.ge.s32.totalorder %s24, 2
    %s26 = scalar_select %p25, 0, %s24
    %s27 = sadd.s32 1, %s18
    %s28 = scalar_select %p25, %s27, %s18
    %p29 = scmp.ge.s32.totalorder %s28, 2
    %s30 = scalar_select %p29, 0, %s28
    %s31 = ssub.s32 %s18, %s30
    %s32 = ssub.s32 %s19, %s26
    %s33 = sor.u32 %s31, %s32
    %p34 = scmp.eq.s32.totalorder %s33, 0
    %s36 = sadd.s32 %s35, 1
    %s37 = scalar_select %p34, %s35, %s36
    %p40 = pneg %p34
    %p41 = scmp.eq.s32.totalorder %s11, 3
    %p42 = por %p40, %p41
    %p43 = scmp.ne.s32.totalorder %s35, %s38
    %p44 = scmp.eq.s32.totalorder %s11, 0
    %p45 = por %p43, %p44
    %p46 = scmp.ne.s32.totalorder %s35, %s38
    %p47 = scmp.eq.s32.totalorder %s16, 3
    %p48 = por %p46, %p47
    %p49 = scmp.ne.s32.totalorder %s38, %s39
    %p50 = scmp.eq.s32.totalorder %s16, 0
    %p51 = por %p49, %p50
    %p52 = scmp.ne.s32.totalorder %s38, %s39
    %p53 = scmp.eq.s32.totalorder %s17, 3
    %p54 = por %p52, %p53
    %p56 = scmp.ne.s32.totalorder %s39, %s55
    %p57 = scmp.eq.s32.totalorder %s17, 0
    %p58 = por %p56, %p57
    %s59 = sadd.s32 %s19, 1
    %s60 = smul.u32 %s59, 4
    %s61 = sadd.s32 %s26, 1
    %s62 = smul.u32 %s61, 4
    %s63 = ssub.s32 %s18, %s30
    %s64 = ssub.s32 %s60, %s62
    %s65 = sor.u32 %s63, %s64
    %p66 = scmp.eq.s32.totalorder %s65, 0
    %s68 = sadd.s32 %s67, 1
    %s69 = scalar_select %p66, %s67, %s68
    %p72 = pneg %p66
    %p73 = scmp.eq.s32.totalorder %s11, 3
    %p74 = por %p72, %p73
    %p75 = scmp.ne.s32.totalorder %s67, %s70
    %p76 = scmp.eq.s32.totalorder %s11, 0
    %p77 = por %p75, %p76
    %p78 = scmp.ne.s32.totalorder %s67, %s70
    %p79 = scmp.eq.s32.totalorder %s16, 3
    %p80 = por %p78, %p79
    %p81 = scmp.ne.s32.totalorder %s70, %s71
    %p82 = scmp.eq.s32.totalorder %s16, 0
    %p83 = por %p81, %p82
    %p84 = scmp.ne.s32.totalorder %s70, %s71
    %p85 = scmp.eq.s32.totalorder %s17, 3
    %p86 = por %p84, %p85
    %p88 = scmp.ne.s32.totalorder %s71, %s87
    %p89 = scmp.eq.s32.totalorder %s17, 0
    %p90 = por %p88, %p89
    %s92 = sadd.s32 %s91, 1
    %p95 = scmp.eq.s32.totalorder %s11, 3
    %p96 = scmp.ne.s32.totalorder %s91, %s93
    %p97 = scmp.eq.s32.totalorder %s11, 0
    %p98 = por %p96, %p97
    %p99 = scmp.ne.s32.totalorder %s91, %s93
    %p100 = scmp.eq.s32.totalorder %s16, 3
    %p101 = por %p99, %p100
    %p102 = scmp.ne.s32.totalorder %s93, %s94
    %p103 = scmp.eq.s32.totalorder %s16, 0
    %p104 = por %p102, %p103
    %p105 = scmp.ne.s32.totalorder %s93, %s94
    %p106 = scmp.eq.s32.totalorder %s17, 3
    %p107 = por %p105, %p106
    %p109 = scmp.ne.s32.totalorder %s94, %s108
    %p110 = scmp.eq.s32.totalorder %s17, 0
    %p111 = por %p109, %p110
    %s113 = sadd.s32 %s112, 1
    %p116 = scmp.eq.s32.totalorder %s11, 3
    %p117 = scmp.ne.s32.totalorder %s112, %s114
    %p118 = scmp.eq.s32.totalorder %s11, 0
    %p119 = por %p117, %p118
    %p120 = scmp.ne.s32.totalorder %s112, %s114
    %p121 = scmp.eq.s32.totalorder %s16, 3
    %p122 = por %p120, %p121
    %p123 = scmp.ne.s32.totalorder %s114, %s115
    %p124 = scmp.eq.s32.totalorder %s16, 0
    %p125 = por %p123, %p124
    %p126 = scmp.ne.s32.totalorder %s114, %s115
    %p127 = scmp.eq.s32.totalorder %s17, 3
    %p128 = por %p126, %p127
    %p130 = scmp.ne.s32.totalorder %s115, %s129
    %p131 = scmp.eq.s32.totalorder %s17, 0
    %p132 = por %p130, %p131
    %s134 = sadd.s32 %s133, 1
    %p137 = scmp.eq.s32.totalorder %s11, 3
    %p138 = scmp.ne.s32.totalorder %s133, %s135
    %p139 = scmp.eq.s32.totalorder %s11, 0
    %p140 = por %p138, %p139
    %p141 = scmp.ne.s32.totalorder %s133, %s135
    %p142 = scmp.eq.s32.totalorder %s16, 3
    %p143 = por %p141, %p142
    %p144 = scmp.ne.s32.totalorder %s135, %s136
    %p145 = scmp.eq.s32.totalorder %s16, 0
    %p146 = por %p144, %p145
    %p147 = scmp.ne.s32.totalorder %s135, %s136
    %p148 = scmp.eq.s32.totalorder %s17, 3
    %p149 = por %p147, %p148
    %p151 = scmp.ne.s32.totalorder %s136, %s150
    %p152 = scmp.eq.s32.totalorder %s17, 0
    %p153 = por %p151, %p152
    %s154 = ssub.s32 %s18, %s30
    %s155 = ssub.s32 %s19, %s26
    %s156 = sor.u32 %s154, %s155
    %p157 = scmp.eq.s32.totalorder %s156, 0
    %s159 = sadd.s32 %s158, 1
    %s160 = scalar_select %p157, %s158, %s159
    %p163 = pneg %p157
    %p164 = scmp.eq.s32.totalorder %s11, 3
    %p165 = por %p163, %p164
    %p166 = scmp.ne.s32.totalorder %s158, %s161
    %p167 = scmp.eq.s32.totalorder %s11, 0
    %p168 = por %p166, %p167
    %p169 = scmp.ne.s32.totalorder %s158, %s161
    %p170 = scmp.eq.s32.totalorder %s16, 3
    %p171 = por %p169, %p170
    %p172 = scmp.ne.s32.totalorder %s161, %s162
    %p173 = scmp.eq.s32.totalorder %s16, 0
    %p174 = por %p172, %p173
    %p175 = scmp.ne.s32.totalorder %s161, %s162
    %p176 = scmp.eq.s32.totalorder %s17, 3
    %p177 = por %p175, %p176
    %p179 = scmp.ne.s32.totalorder %s162, %s178
    %p180 = scmp.eq.s32.totalorder %s17, 0
    %p181 = por %p179, %p180
    %p182 = scmp.le.s32.totalorder 1, %s11
    %p183 = scmp.lt.s32.totalorder %s11, 5
    %p184 = pnand %p182, %p183
    %p185 = pneg %p184
    // Predicated region
    $region9: #{rescale_layer_forward.3} parent=5 // pred_check
      _
    $region10: #{rescale_layer_forward.3} parent=5 // pred_check_branch
      %187 = sbr.rel (%p184) target = $region12
    $region11: #{rescale_layer_forward.3} parent=5 // pred_region
      %s188 = ssub.s32 %s11, 1
      // Predicated region
      $region13: #{rescale_layer_forward.3} parent=11 // pred_check
        %p189 = pneg %p104
      $region14: #{rescale_layer_forward.3} parent=11 // pred_check_branch
        %191 = sbr.rel (%p189) target = $region16
      $region15: #{rescale_layer_forward.3} parent=11 // pred_region
        _
      $region16: #{rescale_layer_forward.3} parent=11 // pred_fallthru
        _
      // Predicated region
      $region17: #{rescale_layer_forward.3} parent=11 // pred_check
        %p192 = pneg %p125
      $region18: #{rescale_layer_forward.3} parent=11 // pred_check_branch
        %194 = sbr.rel (%p192) target = $region20
      $region19: #{rescale_layer_forward.3} parent=11 // pred_region
        _
      $region20: #{rescale_layer_forward.3} parent=11 // pred_fallthru
        _
      // Predicated region
      $region21: #{rescale_layer_forward.3} parent=11 // pred_check
        %p195 = pneg %p146
      $region22: #{rescale_layer_forward.3} parent=11 // pred_check_branch
        %197 = sbr.rel (%p195) target = $region24
      $region23: #{rescale_layer_forward.3} parent=11 // pred_region
        _
      $region24: #{rescale_layer_forward.3} parent=11 // pred_fallthru
        _
    $region12: #{rescale_layer_forward.3} parent=5 // pred_fallthru
      _
    %p198 = scmp.lt.s32.totalorder %s11, 4
    // Predicated region
    $region25: #{rescale_layer_forward.3} parent=5 // pred_check
      %p199 = pneg %p198
    $region26: #{rescale_layer_forward.3} parent=5 // pred_check_branch
      %201 = sbr.rel (%p199) target = $region28
    $region27: #{rescale_layer_forward.3} parent=5 // pred_region
      // Predicated region
      $region29: #{rescale_layer_forward.3} parent=27 // pred_check
        %p202 = pneg %p45
      $region30: #{rescale_layer_forward.3} parent=27 // pred_check_branch
        %204 = sbr.rel (%p202) target = $region32
      $region31: #{rescale_layer_forward.3} parent=27 // pred_region
        %s205 = smul.u32 8, %s19
        %s206 = ssub.s32 18, %s205
        %p207 = scmp.lt.s32.totalorder %s206, 8
        %s208 = scalar_select %p207, %s206, 8
        %s209 = smul.u32 4, %s208
        %s210 = smul.u32 %s209, 3
        %p211 = scmp.lt.s32.totalorder %s18, 1
        %s212 = scalar_select %p211, %s18, 1
        %p213 = scmp.lt.s32.totalorder %s205, 17
        %s214 = scalar_select %p213, %s205, 17
        %s215 = smul.addr %s214, 3
        %s216 = smul.addr %s212, 54
        %s217 = sadd.s32 %s215, %s216
        %s218 = smul.addr %s217, 4
        %s219 = scalar_lea.vmem %s0, %s218
        %s220 = smul.u32 8, %s19
        %s221 = ssub.s32 18, %s220
        %p222 = scmp.lt.s32.totalorder %s221, 8
        %s223 = scalar_select %p222, %s221, 8
        %s224 = smul.u32 4, %s223
        %s225 = smul.u32 %s224, 3
      $region32: #{rescale_layer_forward.3} parent=27 // pred_fallthru
        _
      // Predicated region
      $region33: #{rescale_layer_forward.3} parent=27 // pred_check
        %p226 = pneg %p77
      $region34: #{rescale_layer_forward.3} parent=27 // pred_check_branch
        %228 = sbr.rel (%p226) target = $region36
      $region35: #{rescale_layer_forward.3} parent=27 // pred_region
        %s229 = sadd.s32 %s19, 1
        %s230 = smul.u32 %s229, 4
        %s231 = smul.u32 2, %s230
        %p232 = scmp.lt.s32.totalorder %s18, 1
        %s233 = scalar_select %p232, %s18, 1
        %p234 = scmp.lt.s32.totalorder %s231, 17
        %s235 = scalar_select %p234, %s231, 17
        %s236 = smul.addr %s235, 3
        %s237 = smul.addr %s233, 54
        %s238 = sadd.s32 %s236, %s237
        %s239 = smul.addr %s238, 4
        %s240 = scalar_lea.vmem %s1, %s239
        %s241 = sadd.s32 %s19, 1
        %s242 = smul.u32 %s241, 4
        %s243 = smul.u32 2, %s242
      $region36: #{rescale_layer_forward.3} parent=27 // pred_fallthru
        _
    $region28: #{rescale_layer_forward.3} parent=5 // pred_fallthru
      _
    %p244 = scmp.le.s32.totalorder 1, %s11
    %p245 = scmp.lt.s32.totalorder %s11, 5
    %p246 = pnand %p244, %p245
    %p247 = pneg %p246
    // Predicated region
    $region37: #{rescale_layer_forward.3} parent=5 // pred_check
      _
    $region38: #{rescale_layer_forward.3} parent=5 // pred_check_branch
      %249 = sbr.rel (%p246) target = $region40
    $region39: #{rescale_layer_forward.3} parent=5 // pred_region
      %s250 = ssub.s32 %s11, 1
      %s251 = smul.u32 8, %s21
      %s252 = ssub.s32 18, %s251
      %p253 = scmp.lt.s32.totalorder %s252, 8
      %s254 = scalar_select %p253, %s252, 8
      %s255 = smul.u32 4, %s254
      %s256 = smul.u32 %s255, 3
      %p257 = scmp.lt.s32.totalorder %s20, 1
      %s258 = scalar_select %p257, %s20, 1
      %p259 = scmp.lt.s32.totalorder %s251, 17
      %s260 = scalar_select %p259, %s251, 17
      %s261 = smul.addr %s260, 3
      %s262 = smul.addr %s258, 54
      %s263 = sadd.s32 %s261, %s262
      %s264 = smul.addr %s263, 4
      %s265 = scalar_lea.vmem %s0, %s264
      %p266 = pneg %p51
      %p267 = pneg %p48
      %s268 = sadd.s32 %s21, 1
      %s269 = smul.u32 %s268, 4
      %s270 = smul.u32 2, %s269
      %p271 = scmp.lt.s32.totalorder %s20, 1
      %s272 = scalar_select %p271, %s20, 1
      %p273 = scmp.lt.s32.totalorder %s270, 17
      %s274 = scalar_select %p273, %s270, 17
      %s275 = smul.addr %s274, 3
      %s276 = smul.addr %s272, 54
      %s277 = sadd.s32 %s275, %s276
      %s278 = smul.addr %s277, 4
      %s279 = scalar_lea.vmem %s1, %s278
      %p280 = pneg %p83
      %p281 = pneg %p80
      %p282 = pneg %p104
      %p283 = pneg %p101
      %p284 = pneg %p125
      %p285 = pneg %p122
      %p286 = pneg %p146
      %p287 = pneg %p143
      %p288 = pneg %p174
      %p289 = pneg %p171
      %s290 = smul.u32 8, %s21
      %p291 = scmp.lt.s32.totalorder %s20, 1
      %s292 = scalar_select %p291, %s20, 1
      %p293 = scmp.lt.s32.totalorder %s290, 15
      %s294 = scalar_select %p293, %s290, 15
      %s295 = smul.addr %s294, 2
      %s296 = smul.addr %s292, 32
      %s297 = sadd.s32 %s295, %s296
      %s298 = smul.addr %s297, 8
      %s299 = scalar_lea.vmem %s5, %s298
      %s300 = smul.u32 8, %s21
      %s301 = ssub.s32 18, %s300
      %p302 = scmp.lt.s32.totalorder %s301, 8
      %s303 = scalar_select %p302, %s301, 8
      %s304 = smul.u32 4, %s303
      %s305 = smul.u32 %s304, 3
      %p306 = scmp.lt.s32.totalorder %s20, 1
      %s307 = scalar_select %p306, %s20, 1
      %p308 = scmp.lt.s32.totalorder %s300, 17
      %s309 = scalar_select %p308, %s300, 17
      %s310 = smul.addr %s309, 3
      %s311 = smul.addr %s307, 54
      %s312 = sadd.s32 %s310, %s311
      %s313 = smul.addr %s312, 4
      %s314 = scalar_lea.vmem %s0, %s313
      %s315 = smul.u32 8, %s21
      %s316 = ssub.s32 18, %s315
      %p317 = scmp.lt.s32.totalorder %s316, 8
      %s318 = scalar_select %p317, %s316, 8
      %s319 = smul.u32 4, %s318
      %s320 = smul.u32 %s319, 3
      %s321 = sadd.s32 %s21, 1
      %s322 = smul.u32 %s321, 4
      %s323 = smul.u32 2, %s322
      %p324 = scmp.lt.s32.totalorder %s20, 1
      %s325 = scalar_select %p324, %s20, 1
      %p326 = scmp.lt.s32.totalorder %s323, 17
      %s327 = scalar_select %p326, %s323, 17
      %s328 = smul.addr %s327, 3
      %s329 = smul.addr %s325, 54
      %s330 = sadd.s32 %s328, %s329
      %s331 = smul.addr %s330, 4
      %s332 = scalar_lea.vmem %s1, %s331
      %s333 = sadd.s32 %s21, 1
      %s334 = smul.u32 %s333, 4
      %s335 = smul.u32 2, %s334
      %s336 = smul.u32 8, %s21
      %p337 = scmp.lt.s32.totalorder %s20, 1
      %s338 = scalar_select %p337, %s20, 1
      %p339 = scmp.lt.s32.totalorder %s336, 15
      %s340 = scalar_select %p339, %s336, 15
      %s341 = smul.addr %s340, 2
      %s342 = smul.addr %s338, 32
      %s343 = sadd.s32 %s341, %s342
      %s344 = smul.addr %s343, 8
      %s345 = scalar_lea.vmem %s5, %s344
      %s346 = smul.u32 8, %s21
      %v348 = vld [vmem:[%s314] sm:$0xf]
      %v349 = vld [vmem:[%s314 + $0x4] sm:$0xf]
      %v350 = vld [vmem:[%s314 + $0x8] sm:$0x1]
      %v351 = vld [vmem:[%s314 + $0xc] sm:$0xf]
      %v352 = vld [vmem:[%s314 + $0x10] sm:$0xf]
      %v353 = vld [vmem:[%s314 + $0x14] sm:$0x1]
      %v354 = vld [vmem:[%s314 + $0x18] sm:$0xf]
      %v355 = vld [vmem:[%s314 + $0x1c] sm:$0xf]
      %v356 = vld [vmem:[%s314 + $0x20] sm:$0x1]
      %v357 = vld [vmem:[%s314 + $0x24] sm:$0xf]
      %v358 = vld [vmem:[%s314 + $0x28] sm:$0xf]
      %v359 = vld [vmem:[%s314 + $0x2c] sm:$0x1]
      %v360 = vld [vmem:[%s314 + $0x30] sm:$0xf]
      %v361 = vld [vmem:[%s314 + $0x34] sm:$0xf]
      %v362 = vld [vmem:[%s314 + $0x38] sm:$0x1]
      %v363 = vld [vmem:[%s314 + $0x3c] sm:$0xf]
      %v364 = vld [vmem:[%s314 + $0x40] sm:$0xf]
      %v365 = vld [vmem:[%s314 + $0x44] sm:$0x1]
      %v366 = vld [vmem:[%s314 + $0x48] sm:$0xf]
      %v367 = vld [vmem:[%s314 + $0x4c] sm:$0xf]
      %v368 = vld [vmem:[%s314 + $0x50] sm:$0x1]
      %v369 = vld [vmem:[%s314 + $0x54] sm:$0xf]
      %v370 = vld [vmem:[%s314 + $0x58] sm:$0xf]
      %v371 = vld [vmem:[%s314 + $0x5c] sm:$0x1]
      %vm372 = vcmask 27648
      %373 = vst.msk [vmem:[#allocation2] sm:$0xf] %vm372, %v348
      %374 = vst.msk [vmem:[#allocation2 + $0x4] sm:$0xf] %vm372, %v349
      %vm375 = vcmask 24576
      %376 = vst.msk [vmem:[#allocation2 + $0x8] sm:$0x1] %vm375, %v350
      %377 = vst.msk [vmem:[#allocation2 + $0xc] sm:$0xf] %vm372, %v351
      %378 = vst.msk [vmem:[#allocation2 + $0x10] sm:$0xf] %vm372, %v352
      %379 = vst.msk [vmem:[#allocation2 + $0x14] sm:$0x1] %vm375, %v353
      %380 = vst.msk [vmem:[#allocation2 + $0x18] sm:$0xf] %vm372, %v354
      %381 = vst.msk [vmem:[#allocation2 + $0x1c] sm:$0xf] %vm372, %v355
      %382 = vst.msk [vmem:[#allocation2 + $0x20] sm:$0x1] %vm375, %v356
      %383 = vst.msk [vmem:[#allocation2 + $0x24] sm:$0xf] %vm372, %v357
      %384 = vst.msk [vmem:[#allocation2 + $0x28] sm:$0xf] %vm372, %v358
      %385 = vst.msk [vmem:[#allocation2 + $0x2c] sm:$0x1] %vm375, %v359
      %386 = vst.msk [vmem:[#allocation2 + $0x30] sm:$0xf] %vm372, %v360
      %387 = vst.msk [vmem:[#allocation2 + $0x34] sm:$0xf] %vm372, %v361
      %388 = vst.msk [vmem:[#allocation2 + $0x38] sm:$0x1] %vm375, %v362
      %389 = vst.msk [vmem:[#allocation2 + $0x3c] sm:$0xf] %vm372, %v363
      %390 = vst.msk [vmem:[#allocation2 + $0x40] sm:$0xf] %vm372, %v364
      %391 = vst.msk [vmem:[#allocation2 + $0x44] sm:$0x1] %vm375, %v365
      %392 = vst.msk [vmem:[#allocation2 + $0x48] sm:$0xf] %vm372, %v366
      %393 = vst.msk [vmem:[#allocation2 + $0x4c] sm:$0xf] %vm372, %v367
      %394 = vst.msk [vmem:[#allocation2 + $0x50] sm:$0x1] %vm375, %v368
      %395 = vst.msk [vmem:[#allocation2 + $0x54] sm:$0xf] %vm372, %v369
      %396 = vst.msk [vmem:[#allocation2 + $0x58] sm:$0xf] %vm372, %v370
      %397 = vst.msk [vmem:[#allocation2 + $0x5c] sm:$0x1] %vm375, %v371
      %v398 = vld [vmem:[%s332] sm:$0xf]
      %v399 = vld [vmem:[%s332 + $0x4] sm:$0xf]
      %v400 = vld [vmem:[%s332 + $0x8] sm:$0x1]
      %v401 = vld [vmem:[%s332 + $0xc] sm:$0xf]
      %v402 = vld [vmem:[%s332 + $0x10] sm:$0xf]
      %v403 = vld [vmem:[%s332 + $0x14] sm:$0x1]
      %s404 = scalar_lea.vmem [#allocation2], 96
      %405 = vst.msk [vmem:[%s404] sm:$0xf] %vm372, %v398
      %406 = vst.msk [vmem:[%s404 + $0x4] sm:$0xf] %vm372, %v399
      %407 = vst.msk [vmem:[%s404 + $0x8] sm:$0x1] %vm375, %v400
      %408 = vst.msk [vmem:[%s404 + $0xc] sm:$0xf] %vm372, %v401
      %409 = vst.msk [vmem:[%s404 + $0x10] sm:$0xf] %vm372, %v402
      %410 = vst.msk [vmem:[%s404 + $0x14] sm:$0x1] %vm375, %v403
      %v411 = vld [vmem:[#allocation2] sm:$0xf]
      %v412 = vld [vmem:[#allocation2 + $0x4] sm:$0xf]
      %v413 = vld [vmem:[#allocation2 + $0xc] sm:$0xf]
      %v414 = vld [vmem:[#allocation2 + $0x10] sm:$0xf]
      %v415 = vld [vmem:[#allocation2 + $0x18] sm:$0xf]
      %v416 = vld [vmem:[#allocation2 + $0x1c] sm:$0xf]
      %v417 = vld [vmem:[#allocation2 + $0x24] sm:$0xf]
      %v418 = vld [vmem:[#allocation2 + $0x28] sm:$0xf]
      %v419 = vld [vmem:[#allocation2 + $0x30] sm:$0xf]
      %v420 = vld [vmem:[#allocation2 + $0x34] sm:$0xf]
      %v421 = vld [vmem:[#allocation2 + $0x3c] sm:$0xf]
      %v422 = vld [vmem:[#allocation2 + $0x40] sm:$0xf]
      %v423 = vld [vmem:[#allocation2 + $0x48] sm:$0xf]
      %v424 = vld [vmem:[#allocation2 + $0x4c] sm:$0xf]
      %v425 = vld [vmem:[#allocation2 + $0x54] sm:$0xf]
      %v426 = vld [vmem:[#allocation2 + $0x58] sm:$0xf]
      %427 = vst.msk [vmem:[#allocation3] sm:$0xf] %vm372, %v411
      %428 = vst.msk [vmem:[#allocation3 + $0x4] sm:$0xf] %vm372, %v412
      %429 = vst.msk [vmem:[#allocation3 + $0x8] sm:$0xf] %vm372, %v413
      %430 = vst.msk [vmem:[#allocation3 + $0xc] sm:$0xf] %vm372, %v414
      %431 = vst.msk [vmem:[#allocation3 + $0x10] sm:$0xf] %vm372, %v415
      %432 = vst.msk [vmem:[#allocation3 + $0x14] sm:$0xf] %vm372, %v416
      %433 = vst.msk [vmem:[#allocation3 + $0x18] sm:$0xf] %vm372, %v417
      %434 = vst.msk [vmem:[#allocation3 + $0x1c] sm:$0xf] %vm372, %v418
      %435 = vst.msk [vmem:[#allocation3 + $0x20] sm:$0xf] %vm372, %v419
      %436 = vst.msk [vmem:[#allocation3 + $0x24] sm:$0xf] %vm372, %v420
      %437 = vst.msk [vmem:[#allocation3 + $0x28] sm:$0xf] %vm372, %v421
      %438 = vst.msk [vmem:[#allocation3 + $0x2c] sm:$0xf] %vm372, %v422
      %439 = vst.msk [vmem:[#allocation3 + $0x30] sm:$0xf] %vm372, %v423
      %440 = vst.msk [vmem:[#allocation3 + $0x34] sm:$0xf] %vm372, %v424
      %441 = vst.msk [vmem:[#allocation3 + $0x38] sm:$0xf] %vm372, %v425
      %442 = vst.msk [vmem:[#allocation3 + $0x3c] sm:$0xf] %vm372, %v426
      %v443 = vld [vmem:[#allocation2] sm:$0xf]
      %v444 = vld [vmem:[#allocation2 + $0x4] sm:$0xf]
      %v445 = vld [vmem:[#allocation2 + $0x8] sm:$0x1]
      %v446 = vld [vmem:[#allocation2 + $0xc] sm:$0xf]
      %v447 = vld [vmem:[#allocation2 + $0x10] sm:$0xf]
      %v448 = vld [vmem:[#allocation2 + $0x14] sm:$0x1]
      %v449 = vld [vmem:[#allocation2 + $0x18] sm:$0xf]
      %v450 = vld [vmem:[#allocation2 + $0x1c] sm:$0xf]
      %v451 = vld [vmem:[#allocation2 + $0x20] sm:$0x1]
      %v452 = vld [vmem:[#allocation2 + $0x24] sm:$0xf]
      %v453 = vld [vmem:[#allocation2 + $0x28] sm:$0xf]
      %v454 = vld [vmem:[#allocation2 + $0x2c] sm:$0x1]
      %v455 = vld [vmem:[#allocation2 + $0x30] sm:$0xf]
      %v456 = vld [vmem:[#allocation2 + $0x34] sm:$0xf]
      %v457 = vld [vmem:[#allocation2 + $0x38] sm:$0x1]
      %v458 = vld [vmem:[#allocation2 + $0x3c] sm:$0xf]
      %v459 = vld [vmem:[#allocation2 + $0x40] sm:$0xf]
      %v460 = vld [vmem:[#allocation2 + $0x44] sm:$0x1]
      %v461 = vld [vmem:[#allocation2 + $0x48] sm:$0xf]
      %v462 = vld [vmem:[#allocation2 + $0x4c] sm:$0xf]
      %v463 = vld [vmem:[#allocation2 + $0x50] sm:$0x1]
      %v464 = vld [vmem:[#allocation2 + $0x54] sm:$0xf]
      %v465 = vld [vmem:[#allocation2 + $0x58] sm:$0xf]
      %v466 = vld [vmem:[#allocation2 + $0x5c] sm:$0x1]
      %vm467 = vsmask.f32 3328
      %vm468 = vsmask.f32 7440
      %vm469 = vmor %vm467, %vm468
      %v471 = vshrl.u32 %v443, 16
      %v473 = vrot.slane %v471, 4
      %v474 = vshll.u32 %v443, 16
      %v476 = vrot.slane %v474, 5
      %v477 = vor.u32 %v473, %v476
      %v478 = vrot.slane %v477, 4
      %v480 = vshll.u32 %v444, 16
      %v482 = vrot.slane %v480, 5
      %v483 = vsel %vm469, %v478, %v482
      %v484 = vshrl.u32 %v444, 16
      %v486 = vrot.slane %v484, 4
      %v487 = vor.u32 %v486, %v482
      %v488 = vrot.slane %v487, 4
      %v490 = vshll.u32 %v445, 16
      %v492 = vrot.slane %v490, 5
      %v493 = vsel %vm469, %v488, %v492
      %v495 = vshrl.u32 %v446, 16
      %v497 = vrot.slane %v495, 4
      %v498 = vshll.u32 %v446, 16
      %v500 = vrot.slane %v498, 5
      %v501 = vor.u32 %v497, %v500
      %v502 = vrot.slane %v501, 4
      %v504 = vshll.u32 %v447, 16
      %v506 = vrot.slane %v504, 5
      %v507 = vsel %vm469, %v502, %v506
      %v508 = vshrl.u32 %v447, 16
      %v510 = vrot.slane %v508, 4
      %v511 = vor.u32 %v510, %v506
      %v512 = vrot.slane %v511, 4
      %v514 = vshll.u32 %v448, 16
      %v516 = vrot.slane %v514, 5
      %v517 = vsel %vm469, %v512, %v516
      %v519 = vshrl.u32 %v449, 16
      %v521 = vrot.slane %v519, 4
      %v522 = vshll.u32 %v449, 16
      %v524 = vrot.slane %v522, 5
      %v525 = vor.u32 %v521, %v524
      %v526 = vrot.slane %v525, 4
      %v528 = vshll.u32 %v450, 16
      %v530 = vrot.slane %v528, 5
      %v531 = vsel %vm469, %v526, %v530
      %v532 = vshrl.u32 %v450, 16
      %v534 = vrot.slane %v532, 4
      %v535 = vor.u32 %v534, %v530
      %v536 = vrot.slane %v535, 4
      %v538 = vshll.u32 %v451, 16
      %v540 = vrot.slane %v538, 5
      %v541 = vsel %vm469, %v536, %v540
      %v543 = vshrl.u32 %v452, 16
      %v545 = vrot.slane %v543, 4
      %v546 = vshll.u32 %v452, 16
      %v548 = vrot.slane %v546, 5
      %v549 = vor.u32 %v545, %v548
      %v550 = vrot.slane %v549, 4
      %v552 = vshll.u32 %v453, 16
      %v554 = vrot.slane %v552, 5
      %v555 = vsel %vm469, %v550, %v554
      %v556 = vshrl.u32 %v453, 16
      %v558 = vrot.slane %v556, 4
      %v559 = vor.u32 %v558, %v554
      %v560 = vrot.slane %v559, 4
      %v562 = vshll.u32 %v454, 16
      %v564 = vrot.slane %v562, 5
      %v565 = vsel %vm469, %v560, %v564
      %v567 = vshrl.u32 %v455, 16
      %v569 = vrot.slane %v567, 4
      %v570 = vshll.u32 %v455, 16
      %v572 = vrot.slane %v570, 5
      %v573 = vor.u32 %v569, %v572
      %v574 = vrot.slane %v573, 4
      %v576 = vshll.u32 %v456, 16
      %v578 = vrot.slane %v576, 5
      %v579 = vsel %vm469, %v574, %v578
      %v580 = vshrl.u32 %v456, 16
      %v582 = vrot.slane %v580, 4
      %v583 = vor.u32 %v582, %v578
      %v584 = vrot.slane %v583, 4
      %v586 = vshll.u32 %v457, 16
      %v588 = vrot.slane %v586, 5
      %v589 = vsel %vm469, %v584, %v588
      %v591 = vshrl.u32 %v458, 16
      %v593 = vrot.slane %v591, 4
      %v594 = vshll.u32 %v458, 16
      %v596 = vrot.slane %v594, 5
      %v597 = vor.u32 %v593, %v596
      %v598 = vrot.slane %v597, 4
      %v600 = vshll.u32 %v459, 16
      %v602 = vrot.slane %v600, 5
      %v603 = vsel %vm469, %v598, %v602
      %v604 = vshrl.u32 %v459, 16
      %v606 = vrot.slane %v604, 4
      %v607 = vor.u32 %v606, %v602
      %v608 = vrot.slane %v607, 4
      %v610 = vshll.u32 %v460, 16
      %v612 = vrot.slane %v610, 5
      %v613 = vsel %vm469, %v608, %v612
      %v615 = vshrl.u32 %v461, 16
      %v617 = vrot.slane %v615, 4
      %v618 = vshll.u32 %v461, 16
      %v620 = vrot.slane %v618, 5
      %v621 = vor.u32 %v617, %v620
      %v622 = vrot.slane %v621, 4
      %v624 = vshll.u32 %v462, 16
      %v626 = vrot.slane %v624, 5
      %v627 = vsel %vm469, %v622, %v626
      %v628 = vshrl.u32 %v462, 16
      %v630 = vrot.slane %v628, 4
      %v631 = vor.u32 %v630, %v626
      %v632 = vrot.slane %v631, 4
      %v634 = vshll.u32 %v463, 16
      %v636 = vrot.slane %v634, 5
      %v637 = vsel %vm469, %v632, %v636
      %v639 = vshrl.u32 %v464, 16
      %v641 = vrot.slane %v639, 4
      %v642 = vshll.u32 %v464, 16
      %v644 = vrot.slane %v642, 5
      %v645 = vor.u32 %v641, %v644
      %v646 = vrot.slane %v645, 4
      %v648 = vshll.u32 %v465, 16
      %v650 = vrot.slane %v648, 5
      %v651 = vsel %vm469, %v646, %v650
      %v652 = vshrl.u32 %v465, 16
      %v654 = vrot.slane %v652, 4
      %v655 = vor.u32 %v654, %v650
      %v656 = vrot.slane %v655, 4
      %v658 = vshll.u32 %v466, 16
      %v660 = vrot.slane %v658, 5
      %v661 = vsel %vm469, %v656, %v660
      %662 = vrot.lane.b32.xlu0 %v483, 4
      %v663 = vpop.permute.xlu0 %662
      %664 = vrot.lane.b32.xlu0 %v493, 4
      %v665 = vpop.permute.xlu0 %664
      %666 = vrot.lane.b32.xlu0 %v507, 4
      %v667 = vpop.permute.xlu0 %666
      %668 = vrot.lane.b32.xlu0 %v517, 4
      %v669 = vpop.permute.xlu0 %668
      %670 = vrot.lane.b32.xlu0 %v531, 4
      %v671 = vpop.permute.xlu0 %670
      %672 = vrot.lane.b32.xlu0 %v541, 4
      %v673 = vpop.permute.xlu0 %672
      %674 = vrot.lane.b32.xlu0 %v555, 4
      %v675 = vpop.permute.xlu0 %674
      %676 = vrot.lane.b32.xlu0 %v565, 4
      %v677 = vpop.permute.xlu0 %676
      %678 = vrot.lane.b32.xlu0 %v579, 4
      %v679 = vpop.permute.xlu0 %678
      %680 = vrot.lane.b32.xlu0 %v589, 4
      %v681 = vpop.permute.xlu0 %680
      %682 = vrot.lane.b32.xlu0 %v603, 4
      %v683 = vpop.permute.xlu0 %682
      %684 = vrot.lane.b32.xlu0 %v613, 4
      %v685 = vpop.permute.xlu0 %684
      %686 = vrot.lane.b32.xlu0 %v627, 4
      %v687 = vpop.permute.xlu0 %686
      %688 = vrot.lane.b32.xlu0 %v637, 4
      %v689 = vpop.permute.xlu0 %688
      %690 = vrot.lane.b32.xlu0 %v651, 4
      %v691 = vpop.permute.xlu0 %690
      %692 = vrot.lane.b32.xlu0 %v661, 4
      %v693 = vpop.permute.xlu0 %692
      %vm710 = vcmask 60448
      %711 = vst.msk [vmem:[#allocation3] sm:$0xf] %vm710, %v663
      %712 = vst.msk [vmem:[#allocation3 + $0x4] sm:$0xf] %vm710, %v665
      %713 = vst.msk [vmem:[#allocation3 + $0x8] sm:$0xf] %vm710, %v667
      %714 = vst.msk [vmem:[#allocation3 + $0xc] sm:$0xf] %vm710, %v669
      %715 = vst.msk [vmem:[#allocation3 + $0x10] sm:$0xf] %vm710, %v671
      %716 = vst.msk [vmem:[#allocation3 + $0x14] sm:$0xf] %vm710, %v673
      %717 = vst.msk [vmem:[#allocation3 + $0x18] sm:$0xf] %vm710, %v675
      %718 = vst.msk [vmem:[#allocation3 + $0x1c] sm:$0xf] %vm710, %v677
      %719 = vst.msk [vmem:[#allocation3 + $0x20] sm:$0xf] %vm710, %v679
      %720 = vst.msk [vmem:[#allocation3 + $0x24] sm:$0xf] %vm710, %v681
      %721 = vst.msk [vmem:[#allocation3 + $0x28] sm:$0xf] %vm710, %v683
      %722 = vst.msk [vmem:[#allocation3 + $0x2c] sm:$0xf] %vm710, %v685
      %723 = vst.msk [vmem:[#allocation3 + $0x30] sm:$0xf] %vm710, %v687
      %724 = vst.msk [vmem:[#allocation3 + $0x34] sm:$0xf] %vm710, %v689
      %725 = vst.msk [vmem:[#allocation3 + $0x38] sm:$0xf] %vm710, %v691
      %726 = vst.msk [vmem:[#allocation3 + $0x3c] sm:$0xf] %vm710, %v693
      %v727 = vld [vmem:[#allocation2] sm:$0xe]
      %v728 = vld [vmem:[#allocation2 + $0x4] sm:$0xf]
      %v729 = vld [vmem:[#allocation2 + $0x8] sm:$0x1]
      %v730 = vld [vmem:[#allocation2 + $0xc] sm:$0xe]
      %v731 = vld [vmem:[#allocation2 + $0x10] sm:$0xf]
      %v732 = vld [vmem:[#allocation2 + $0x14] sm:$0x1]
      %v733 = vld [vmem:[#allocation2 + $0x18] sm:$0xe]
      %v734 = vld [vmem:[#allocation2 + $0x1c] sm:$0xf]
      %v735 = vld [vmem:[#allocation2 + $0x20] sm:$0x1]
      %v736 = vld [vmem:[#allocation2 + $0x24] sm:$0xe]
      %v737 = vld [vmem:[#allocation2 + $0x28] sm:$0xf]
      %v738 = vld [vmem:[#allocation2 + $0x2c] sm:$0x1]
      %v739 = vld [vmem:[#allocation2 + $0x30] sm:$0xe]
      %v740 = vld [vmem:[#allocation2 + $0x34] sm:$0xf]
      %v741 = vld [vmem:[#allocation2 + $0x38] sm:$0x1]
      %v742 = vld [vmem:[#allocation2 + $0x3c] sm:$0xe]
      %v743 = vld [vmem:[#allocation2 + $0x40] sm:$0xf]
      %v744 = vld [vmem:[#allocation2 + $0x44] sm:$0x1]
      %v745 = vld [vmem:[#allocation2 + $0x48] sm:$0xe]
      %v746 = vld [vmem:[#allocation2 + $0x4c] sm:$0xf]
      %v747 = vld [vmem:[#allocation2 + $0x50] sm:$0x1]
      %v748 = vld [vmem:[#allocation2 + $0x54] sm:$0xe]
      %v749 = vld [vmem:[#allocation2 + $0x58] sm:$0xf]
      %v750 = vld [vmem:[#allocation2 + $0x5c] sm:$0x1]
      %vm775 = vcmask 1042432
      %vm776 = vcmask 1046532
      %vm777 = vmor %vm775, %vm776
      %v778 = vrot.slane %v727, 5
      %v779 = vrot.slane %v778, 4
      %v780 = vrot.slane %v728, 5
      %v781 = vsel %vm777, %v779, %v780
      %v782 = vrot.slane %v780, 4
      %v783 = vrot.slane %v729, 5
      %v784 = vsel %vm777, %v782, %v783
      %v785 = vrot.slane %v730, 5
      %v786 = vrot.slane %v785, 4
      %v787 = vrot.slane %v731, 5
      %v788 = vsel %vm777, %v786, %v787
      %v789 = vrot.slane %v787, 4
      %v790 = vrot.slane %v732, 5
      %v791 = vsel %vm777, %v789, %v790
      %v792 = vrot.slane %v733, 5
      %v793 = vrot.slane %v792, 4
      %v794 = vrot.slane %v734, 5
      %v795 = vsel %vm777, %v793, %v794
      %v796 = vrot.slane %v794, 4
      %v797 = vrot.slane %v735, 5
      %v798 = vsel %vm777, %v796, %v797
      %v799 = vrot.slane %v736, 5
      %v800 = vrot.slane %v799, 4
      %v801 = vrot.slane %v737, 5
      %v802 = vsel %vm777, %v800, %v801
      %v803 = vrot.slane %v801, 4
      %v804 = vrot.slane %v738, 5
      %v805 = vsel %vm777, %v803, %v804
      %v806 = vrot.slane %v739, 5
      %v807 = vrot.slane %v806, 4
      %v808 = vrot.slane %v740, 5
      %v809 = vsel %vm777, %v807, %v808
      %v810 = vrot.slane %v808, 4
      %v811 = vrot.slane %v741, 5
      %v812 = vsel %vm777, %v810, %v811
      %v813 = vrot.slane %v742, 5
      %v814 = vrot.slane %v813, 4
      %v815 = vrot.slane %v743, 5
      %v816 = vsel %vm777, %v814, %v815
      %v817 = vrot.slane %v815, 4
      %v818 = vrot.slane %v744, 5
      %v819 = vsel %vm777, %v817, %v818
      %v820 = vrot.slane %v745, 5
      %v821 = vrot.slane %v820, 4
      %v822 = vrot.slane %v746, 5
      %v823 = vsel %vm777, %v821, %v822
      %v824 = vrot.slane %v822, 4
      %v825 = vrot.slane %v747, 5
      %v826 = vsel %vm777, %v824, %v825
      %v827 = vrot.slane %v748, 5
      %v828 = vrot.slane %v827, 4
      %v829 = vrot.slane %v749, 5
      %v830 = vsel %vm777, %v828, %v829
      %v831 = vrot.slane %v829, 4
      %v832 = vrot.slane %v750, 5
      %v833 = vsel %vm777, %v831, %v832
      %834 = vrot.lane.b32.xlu0 %v781, 8
      %v835 = vpop.permute.xlu0 %834
      %836 = vrot.lane.b32.xlu0 %v784, 8
      %v837 = vpop.permute.xlu0 %836
      %838 = vrot.lane.b32.xlu0 %v788, 8
      %v839 = vpop.permute.xlu0 %838
      %840 = vrot.lane.b32.xlu0 %v791, 8
      %v841 = vpop.permute.xlu0 %840
      %842 = vrot.lane.b32.xlu0 %v795, 8
      %v843 = vpop.permute.xlu0 %842
      %844 = vrot.lane.b32.xlu0 %v798, 8
      %v845 = vpop.permute.xlu0 %844
      %846 = vrot.lane.b32.xlu0 %v802, 8
      %v847 = vpop.permute.xlu0 %846
      %848 = vrot.lane.b32.xlu0 %v805, 8
      %v849 = vpop.permute.xlu0 %848
      %850 = vrot.lane.b32.xlu0 %v809, 8
      %v851 = vpop.permute.xlu0 %850
      %852 = vrot.lane.b32.xlu0 %v812, 8
      %v853 = vpop.permute.xlu0 %852
      %854 = vrot.lane.b32.xlu0 %v816, 8
      %v855 = vpop.permute.xlu0 %854
      %856 = vrot.lane.b32.xlu0 %v819, 8
      %v857 = vpop.permute.xlu0 %856
      %858 = vrot.lane.b32.xlu0 %v823, 8
      %v859 = vpop.permute.xlu0 %858
      %860 = vrot.lane.b32.xlu0 %v826, 8
      %v861 = vpop.permute.xlu0 %860
      %862 = vrot.lane.b32.xlu0 %v830, 8
      %v863 = vpop.permute.xlu0 %862
      %864 = vrot.lane.b32.xlu0 %v833, 8
      %v865 = vpop.permute.xlu0 %864
      %vm882 = vcmask 93248
      %883 = vst.msk [vmem:[#allocation3] sm:$0xf] %vm882, %v835
      %884 = vst.msk [vmem:[#allocation3 + $0x4] sm:$0xf] %vm882, %v837
      %885 = vst.msk [vmem:[#allocation3 + $0x8] sm:$0xf] %vm882, %v839
      %886 = vst.msk [vmem:[#allocation3 + $0xc] sm:$0xf] %vm882, %v841
      %887 = vst.msk [vmem:[#allocation3 + $0x10] sm:$0xf] %vm882, %v843
      %888 = vst.msk [vmem:[#allocation3 + $0x14] sm:$0xf] %vm882, %v845
      %889 = vst.msk [vmem:[#allocation3 + $0x18] sm:$0xf] %vm882, %v847
      %890 = vst.msk [vmem:[#allocation3 + $0x1c] sm:$0xf] %vm882, %v849
      %891 = vst.msk [vmem:[#allocation3 + $0x20] sm:$0xf] %vm882, %v851
      %892 = vst.msk [vmem:[#allocation3 + $0x24] sm:$0xf] %vm882, %v853
      %893 = vst.msk [vmem:[#allocation3 + $0x28] sm:$0xf] %vm882, %v855
      %894 = vst.msk [vmem:[#allocation3 + $0x2c] sm:$0xf] %vm882, %v857
      %895 = vst.msk [vmem:[#allocation3 + $0x30] sm:$0xf] %vm882, %v859
      %896 = vst.msk [vmem:[#allocation3 + $0x34] sm:$0xf] %vm882, %v861
      %897 = vst.msk [vmem:[#allocation3 + $0x38] sm:$0xf] %vm882, %v863
      %898 = vst.msk [vmem:[#allocation3 + $0x3c] sm:$0xf] %vm882, %v865
      %s899 = scalar_lea.vmem [#allocation2], 12
      %v900 = vld [vmem:[%s899] sm:$0xf]
      %v901 = vld [vmem:[%s899 + $0x4] sm:$0xf]
      %v902 = vld [vmem:[%s899 + $0xc] sm:$0xf]
      %v903 = vld [vmem:[%s899 + $0x10] sm:$0xf]
      %v904 = vld [vmem:[%s899 + $0x18] sm:$0xf]
      %v905 = vld [vmem:[%s899 + $0x1c] sm:$0xf]
      %v906 = vld [vmem:[%s899 + $0x24] sm:$0xf]
      %v907 = vld [vmem:[%s899 + $0x28] sm:$0xf]
      %v908 = vld [vmem:[%s899 + $0x30] sm:$0xf]
      %v909 = vld [vmem:[%s899 + $0x34] sm:$0xf]
      %v910 = vld [vmem:[%s899 + $0x3c] sm:$0xf]
      %v911 = vld [vmem:[%s899 + $0x40] sm:$0xf]
      %v912 = vld [vmem:[%s899 + $0x48] sm:$0xf]
      %v913 = vld [vmem:[%s899 + $0x4c] sm:$0xf]
      %v914 = vld [vmem:[%s899 + $0x54] sm:$0xf]
      %v915 = vld [vmem:[%s899 + $0x58] sm:$0xf]
      %932 = vrot.lane.b32.xlu0 %v900, 12
      %v933 = vpop.permute.xlu0 %932
      %934 = vrot.lane.b32.xlu0 %v901, 12
      %v935 = vpop.permute.xlu0 %934
      %936 = vrot.lane.b32.xlu0 %v902, 12
      %v937 = vpop.permute.xlu0 %936
      %938 = vrot.lane.b32.xlu0 %v903, 12
      %v939 = vpop.permute.xlu0 %938
      %940 = vrot.lane.b32.xlu0 %v904, 12
      %v941 = vpop.permute.xlu0 %940
      %942 = vrot.lane.b32.xlu0 %v905, 12
      %v943 = vpop.permute.xlu0 %942
      %944 = vrot.lane.b32.xlu0 %v906, 12
      %v945 = vpop.permute.xlu0 %944
      %946 = vrot.lane.b32.xlu0 %v907, 12
      %v947 = vpop.permute.xlu0 %946
      %948 = vrot.lane.b32.xlu0 %v908, 12
      %v949 = vpop.permute.xlu0 %948
      %950 = vrot.lane.b32.xlu0 %v909, 12
      %v951 = vpop.permute.xlu0 %950
      %952 = vrot.lane.b32.xlu0 %v910, 12
      %v953 = vpop.permute.xlu0 %952
      %954 = vrot.lane.b32.xlu0 %v911, 12
      %v955 = vpop.permute.xlu0 %954
      %956 = vrot.lane.b32.xlu0 %v912, 12
      %v957 = vpop.permute.xlu0 %956
      %958 = vrot.lane.b32.xlu0 %v913, 12
      %v959 = vpop.permute.xlu0 %958
      %960 = vrot.lane.b32.xlu0 %v914, 12
      %v961 = vpop.permute.xlu0 %960
      %962 = vrot.lane.b32.xlu0 %v915, 12
      %v963 = vpop.permute.xlu0 %962
      %vm980 = vcmask 126048
      %981 = vst.msk [vmem:[#allocation3] sm:$0xf] %vm980, %v933
      %982 = vst.msk [vmem:[#allocation3 + $0x4] sm:$0xf] %vm980, %v935
      %983 = vst.msk [vmem:[#allocation3 + $0x8] sm:$0xf] %vm980, %v937
      %984 = vst.msk [vmem:[#allocation3 + $0xc] sm:$0xf] %vm980, %v939
      %985 = vst.msk [vmem:[#allocation3 + $0x10] sm:$0xf] %vm980, %v941
      %986 = vst.msk [vmem:[#allocation3 + $0x14] sm:$0xf] %vm980, %v943
      %987 = vst.msk [vmem:[#allocation3 + $0x18] sm:$0xf] %vm980, %v945
      %988 = vst.msk [vmem:[#allocation3 + $0x1c] sm:$0xf] %vm980, %v947
      %989 = vst.msk [vmem:[#allocation3 + $0x20] sm:$0xf] %vm980, %v949
      %990 = vst.msk [vmem:[#allocation3 + $0x24] sm:$0xf] %vm980, %v951
      %991 = vst.msk [vmem:[#allocation3 + $0x28] sm:$0xf] %vm980, %v953
      %992 = vst.msk [vmem:[#allocation3 + $0x2c] sm:$0xf] %vm980, %v955
      %993 = vst.msk [vmem:[#allocation3 + $0x30] sm:$0xf] %vm980, %v957
      %994 = vst.msk [vmem:[#allocation3 + $0x34] sm:$0xf] %vm980, %v959
      %995 = vst.msk [vmem:[#allocation3 + $0x38] sm:$0xf] %vm980, %v961
      %996 = vst.msk [vmem:[#allocation3 + $0x3c] sm:$0xf] %vm980, %v963
      %v997 = vld [vmem:[%s899] sm:$0xf]
      %v998 = vld [vmem:[%s899 + $0x4] sm:$0xf]
      %v999 = vld [vmem:[%s899 + $0x8] sm:$0x1]
      %v1000 = vld [vmem:[%s899 + $0xc] sm:$0xf]
      %v1001 = vld [vmem:[%s899 + $0x10] sm:$0xf]
      %v1002 = vld [vmem:[%s899 + $0x14] sm:$0x1]
      %v1003 = vld [vmem:[%s899 + $0x18] sm:$0xf]
      %v1004 = vld [vmem:[%s899 + $0x1c] sm:$0xf]
      %v1005 = vld [vmem:[%s899 + $0x20] sm:$0x1]
      %v1006 = vld [vmem:[%s899 + $0x24] sm:$0xf]
      %v1007 = vld [vmem:[%s899 + $0x28] sm:$0xf]
      %v1008 = vld [vmem:[%s899 + $0x2c] sm:$0x1]
      %v1009 = vld [vmem:[%s899 + $0x30] sm:$0xf]
      %v1010 = vld [vmem:[%s899 + $0x34] sm:$0xf]
      %v1011 = vld [vmem:[%s899 + $0x38] sm:$0x1]
      %v1012 = vld [vmem:[%s899 + $0x3c] sm:$0xf]
      %v1013 = vld [vmem:[%s899 + $0x40] sm:$0xf]
      %v1014 = vld [vmem:[%s899 + $0x44] sm:$0x1]
      %v1015 = vld [vmem:[%s899 + $0x48] sm:$0xf]
      %v1016 = vld [vmem:[%s899 + $0x4c] sm:$0xf]
      %v1017 = vld [vmem:[%s899 + $0x50] sm:$0x1]
      %v1018 = vld [vmem:[%s899 + $0x54] sm:$0xf]
      %v1019 = vld [vmem:[%s899 + $0x58] sm:$0xf]
      %v1020 = vld [vmem:[%s899 + $0x5c] sm:$0x1]
      %v1022 = vshrl.u32 %v997, 16
      %v1024 = vrot.slane %v1022, 4
      %v1025 = vshll.u32 %v997, 16
      %v1027 = vrot.slane %v1025, 5
      %v1028 = vor.u32 %v1024, %v1027
      %v1029 = vrot.slane %v1028, 4
      %v1031 = vshll.u32 %v998, 16
      %v1033 = vrot.slane %v1031, 5
      %v1034 = vsel %vm469, %v1029, %v1033
      %v1035 = vshrl.u32 %v998, 16
      %v1037 = vrot.slane %v1035, 4
      %v1038 = vor.u32 %v1037, %v1033
      %v1039 = vrot.slane %v1038, 4
      %v1041 = vshll.u32 %v999, 16
      %v1043 = vrot.slane %v1041, 5
      %v1044 = vsel %vm469, %v1039, %v1043
      %v1046 = vshrl.u32 %v1000, 16
      %v1048 = vrot.slane %v1046, 4
      %v1049 = vshll.u32 %v1000, 16
      %v1051 = vrot.slane %v1049, 5
      %v1052 = vor.u32 %v1048, %v1051
      %v1053 = vrot.slane %v1052, 4
      %v1055 = vshll.u32 %v1001, 16
      %v1057 = vrot.slane %v1055, 5
      %v1058 = vsel %vm469, %v1053, %v1057
      %v1059 = vshrl.u32 %v1001, 16
      %v1061 = vrot.slane %v1059, 4
      %v1062 = vor.u32 %v1061, %v1057
      %v1063 = vrot.slane %v1062, 4
      %v1065 = vshll.u32 %v1002, 16
      %v1067 = vrot.slane %v1065, 5
      %v1068 = vsel %vm469, %v1063, %v1067
      %v1070 = vshrl.u32 %v1003, 16
      %v1072 = vrot.slane %v1070, 4
      %v1073 = vshll.u32 %v1003, 16
      %v1075 = vrot.slane %v1073, 5
      %v1076 = vor.u32 %v1072, %v1075
      %v1077 = vrot.slane %v1076, 4
      %v1079 = vshll.u32 %v1004, 16
      %v1081 = vrot.slane %v1079, 5
      %v1082 = vsel %vm469, %v1077, %v1081
      %v1083 = vshrl.u32 %v1004, 16
      %v1085 = vrot.slane %v1083, 4
      %v1086 = vor.u32 %v1085, %v1081
      %v1087 = vrot.slane %v1086, 4
      %v1089 = vshll.u32 %v1005, 16
      %v1091 = vrot.slane %v1089, 5
      %v1092 = vsel %vm469, %v1087, %v1091
      %v1094 = vshrl.u32 %v1006, 16
      %v1096 = vrot.slane %v1094, 4
      %v1097 = vshll.u32 %v1006, 16
      %v1099 = vrot.slane %v1097, 5
      %v1100 = vor.u32 %v1096, %v1099
      %v1101 = vrot.slane %v1100, 4
      %v1103 = vshll.u32 %v1007, 16
      %v1105 = vrot.slane %v1103, 5
      %v1106 = vsel %vm469, %v1101, %v1105
      %v1107 = vshrl.u32 %v1007, 16
      %v1109 = vrot.slane %v1107, 4
      %v1110 = vor.u32 %v1109, %v1105
      %v1111 = vrot.slane %v1110, 4
      %v1113 = vshll.u32 %v1008, 16
      %v1115 = vrot.slane %v1113, 5
      %v1116 = vsel %vm469, %v1111, %v1115
      %v1118 = vshrl.u32 %v1009, 16
      %v1120 = vrot.slane %v1118, 4
      %v1121 = vshll.u32 %v1009, 16
      %v1123 = vrot.slane %v1121, 5
      %v1124 = vor.u32 %v1120, %v1123
      %v1125 = vrot.slane %v1124, 4
      %v1127 = vshll.u32 %v1010, 16
      %v1129 = vrot.slane %v1127, 5
      %v1130 = vsel %vm469, %v1125, %v1129
      %v1131 = vshrl.u32 %v1010, 16
      %v1133 = vrot.slane %v1131, 4
      %v1134 = vor.u32 %v1133, %v1129
      %v1135 = vrot.slane %v1134, 4
      %v1137 = vshll.u32 %v1011, 16
      %v1139 = vrot.slane %v1137, 5
      %v1140 = vsel %vm469, %v1135, %v1139
      %v1142 = vshrl.u32 %v1012, 16
      %v1144 = vrot.slane %v1142, 4
      %v1145 = vshll.u32 %v1012, 16
      %v1147 = vrot.slane %v1145, 5
      %v1148 = vor.u32 %v1144, %v1147
      %v1149 = vrot.slane %v1148, 4
      %v1151 = vshll.u32 %v1013, 16
      %v1153 = vrot.slane %v1151, 5
      %v1154 = vsel %vm469, %v1149, %v1153
      %v1155 = vshrl.u32 %v1013, 16
      %v1157 = vrot.slane %v1155, 4
      %v1158 = vor.u32 %v1157, %v1153
      %v1159 = vrot.slane %v1158, 4
      %v1161 = vshll.u32 %v1014, 16
      %v1163 = vrot.slane %v1161, 5
      %v1164 = vsel %vm469, %v1159, %v1163
      %v1166 = vshrl.u32 %v1015, 16
      %v1168 = vrot.slane %v1166, 4
      %v1169 = vshll.u32 %v1015, 16
      %v1171 = vrot.slane %v1169, 5
      %v1172 = vor.u32 %v1168, %v1171
      %v1173 = vrot.slane %v1172, 4
      %v1175 = vshll.u32 %v1016, 16
      %v1177 = vrot.slane %v1175, 5
      %v1178 = vsel %vm469, %v1173, %v1177
      %v1179 = vshrl.u32 %v1016, 16
      %v1181 = vrot.slane %v1179, 4
      %v1182 = vor.u32 %v1181, %v1177
      %v1183 = vrot.slane %v1182, 4
      %v1185 = vshll.u32 %v1017, 16
      %v1187 = vrot.slane %v1185, 5
      %v1188 = vsel %vm469, %v1183, %v1187
      %v1190 = vshrl.u32 %v1018, 16
      %v1192 = vrot.slane %v1190, 4
      %v1193 = vshll.u32 %v1018, 16
      %v1195 = vrot.slane %v1193, 5
      %v1196 = vor.u32 %v1192, %v1195
      %v1197 = vrot.slane %v1196, 4
      %v1199 = vshll.u32 %v1019, 16
      %v1201 = vrot.slane %v1199, 5
      %v1202 = vsel %vm469, %v1197, %v1201
      %v1203 = vshrl.u32 %v1019, 16
      %v1205 = vrot.slane %v1203, 4
      %v1206 = vor.u32 %v1205, %v1201
      %v1207 = vrot.slane %v1206, 4
      %v1209 = vshll.u32 %v1020, 16
      %v1211 = vrot.slane %v1209, 5
      %v1212 = vsel %vm469, %v1207, %v1211
      %1213 = vrot.lane.b32.xlu0 %v1034, 16
      %v1214 = vpop.permute.xlu0 %1213
      %1215 = vrot.lane.b32.xlu0 %v1044, 16
      %v1216 = vpop.permute.xlu0 %1215
      %1217 = vrot.lane.b32.xlu0 %v1058, 16
      %v1218 = vpop.permute.xlu0 %1217
      %1219 = vrot.lane.b32.xlu0 %v1068, 16
      %v1220 = vpop.permute.xlu0 %1219
      %1221 = vrot.lane.b32.xlu0 %v1082, 16
      %v1222 = vpop.permute.xlu0 %1221
      %1223 = vrot.lane.b32.xlu0 %v1092, 16
      %v1224 = vpop.permute.xlu0 %1223
      %1225 = vrot.lane.b32.xlu0 %v1106, 16
      %v1226 = vpop.permute.xlu0 %1225
      %1227 = vrot.lane.b32.xlu0 %v1116, 16
      %v1228 = vpop.permute.xlu0 %1227
      %1229 = vrot.lane.b32.xlu0 %v1130, 16
      %v1230 = vpop.permute.xlu0 %1229
      %1231 = vrot.lane.b32.xlu0 %v1140, 16
      %v1232 = vpop.permute.xlu0 %1231
      %1233 = vrot.lane.b32.xlu0 %v1154, 16
      %v1234 = vpop.permute.xlu0 %1233
      %1235 = vrot.lane.b32.xlu0 %v1164, 16
      %v1236 = vpop.permute.xlu0 %1235
      %1237 = vrot.lane.b32.xlu0 %v1178, 16
      %v1238 = vpop.permute.xlu0 %1237
      %1239 = vrot.lane.b32.xlu0 %v1188, 16
      %v1240 = vpop.permute.xlu0 %1239
      %1241 = vrot.lane.b32.xlu0 %v1202, 16
      %v1242 = vpop.permute.xlu0 %1241
      %1243 = vrot.lane.b32.xlu0 %v1212, 16
      %v1244 = vpop.permute.xlu0 %1243
      %vm1261 = vcmask 158848
      %1262 = vst.msk [vmem:[#allocation3] sm:$0xf] %vm1261, %v1214
      %1263 = vst.msk [vmem:[#allocation3 + $0x4] sm:$0xf] %vm1261, %v1216
      %1264 = vst.msk [vmem:[#allocation3 + $0x8] sm:$0xf] %vm1261, %v1218
      %1265 = vst.msk [vmem:[#allocation3 + $0xc] sm:$0xf] %vm1261, %v1220
      %1266 = vst.msk [vmem:[#allocation3 + $0x10] sm:$0xf] %vm1261, %v1222
      %1267 = vst.msk [vmem:[#allocation3 + $0x14] sm:$0xf] %vm1261, %v1224
      %1268 = vst.msk [vmem:[#allocation3 + $0x18] sm:$0xf] %vm1261, %v1226
      %1269 = vst.msk [vmem:[#allocation3 + $0x1c] sm:$0xf] %vm1261, %v1228
      %1270 = vst.msk [vmem:[#allocation3 + $0x20] sm:$0xf] %vm1261, %v1230
      %1271 = vst.msk [vmem:[#allocation3 + $0x24] sm:$0xf] %vm1261, %v1232
      %1272 = vst.msk [vmem:[#allocation3 + $0x28] sm:$0xf] %vm1261, %v1234
      %1273 = vst.msk [vmem:[#allocation3 + $0x2c] sm:$0xf] %vm1261, %v1236
      %1274 = vst.msk [vmem:[#allocation3 + $0x30] sm:$0xf] %vm1261, %v1238
      %1275 = vst.msk [vmem:[#allocation3 + $0x34] sm:$0xf] %vm1261, %v1240
      %1276 = vst.msk [vmem:[#allocation3 + $0x38] sm:$0xf] %vm1261, %v1242
      %1277 = vst.msk [vmem:[#allocation3 + $0x3c] sm:$0xf] %vm1261, %v1244
      %v1278 = vld [vmem:[%s899] sm:$0xe]
      %v1279 = vld [vmem:[%s899 + $0x4] sm:$0xf]
      %v1280 = vld [vmem:[%s899 + $0x8] sm:$0x1]
      %v1281 = vld [vmem:[%s899 + $0xc] sm:$0xe]
      %v1282 = vld [vmem:[%s899 + $0x10] sm:$0xf]
      %v1283 = vld [vmem:[%s899 + $0x14] sm:$0x1]
      %v1284 = vld [vmem:[%s899 + $0x18] sm:$0xe]
      %v1285 = vld [vmem:[%s899 + $0x1c] sm:$0xf]
      %v1286 = vld [vmem:[%s899 + $0x20] sm:$0x1]
      %v1287 = vld [vmem:[%s899 + $0x24] sm:$0xe]
      %v1288 = vld [vmem:[%s899 + $0x28] sm:$0xf]
      %v1289 = vld [vmem:[%s899 + $0x2c] sm:$0x1]
      %v1290 = vld [vmem:[%s899 + $0x30] sm:$0xe]
      %v1291 = vld [vmem:[%s899 + $0x34] sm:$0xf]
      %v1292 = vld [vmem:[%s899 + $0x38] sm:$0x1]
      %v1293 = vld [vmem:[%s899 + $0x3c] sm:$0xe]
      %v1294 = vld [vmem:[%s899 + $0x40] sm:$0xf]
      %v1295 = vld [vmem:[%s899 + $0x44] sm:$0x1]
      %v1296 = vld [vmem:[%s899 + $0x48] sm:$0xe]
      %v1297 = vld [vmem:[%s899 + $0x4c] sm:$0xf]
      %v1298 = vld [vmem:[%s899 + $0x50] sm:$0x1]
      %v1299 = vld [vmem:[%s899 + $0x54] sm:$0xe]
      %v1300 = vld [vmem:[%s899 + $0x58] sm:$0xf]
      %v1301 = vld [vmem:[%s899 + $0x5c] sm:$0x1]
      %v1326 = vrot.slane %v1278, 5
      %v1327 = vrot.slane %v1326, 4
      %v1328 = vrot.slane %v1279, 5
      %v1329 = vsel %vm777, %v1327, %v1328
      %v1330 = vrot.slane %v1328, 4
      %v1331 = vrot.slane %v1280, 5
      %v1332 = vsel %vm777, %v1330, %v1331
      %v1333 = vrot.slane %v1281, 5
      %v1334 = vrot.slane %v1333, 4
      %v1335 = vrot.slane %v1282, 5
      %v1336 = vsel %vm777, %v1334, %v1335
      %v1337 = vrot.slane %v1335, 4
      %v1338 = vrot.slane %v1283, 5
      %v1339 = vsel %vm777, %v1337, %v1338
      %v1340 = vrot.slane %v1284, 5
      %v1341 = vrot.slane %v1340, 4
      %v1342 = vrot.slane %v1285, 5
      %v1343 = vsel %vm777, %v1341, %v1342
      %v1344 = vrot.slane %v1342, 4
      %v1345 = vrot.slane %v1286, 5
      %v1346 = vsel %vm777, %v1344, %v1345
      %v1347 = vrot.slane %v1287, 5
      %v1348 = vrot.slane %v1347, 4
      %v1349 = vrot.slane %v1288, 5
      %v1350 = vsel %vm777, %v1348, %v1349
      %v1351 = vrot.slane %v1349, 4
      %v1352 = vrot.slane %v1289, 5
      %v1353 = vsel %vm777, %v1351, %v1352
      %v1354 = vrot.slane %v1290, 5
      %v1355 = vrot.slane %v1354, 4
      %v1356 = vrot.slane %v1291, 5
      %v1357 = vsel %vm777, %v1355, %v1356
      %v1358 = vrot.slane %v1356, 4
      %v1359 = vrot.slane %v1292, 5
      %v1360 = vsel %vm777, %v1358, %v1359
      %v1361 = vrot.slane %v1293, 5
      %v1362 = vrot.slane %v1361, 4
      %v1363 = vrot.slane %v1294, 5
      %v1364 = vsel %vm777, %v1362, %v1363
      %v1365 = vrot.slane %v1363, 4
      %v1366 = vrot.slane %v1295, 5
      %v1367 = vsel %vm777, %v1365, %v1366
      %v1368 = vrot.slane %v1296, 5
      %v1369 = vrot.slane %v1368, 4
      %v1370 = vrot.slane %v1297, 5
      %v1371 = vsel %vm777, %v1369, %v1370
      %v1372 = vrot.slane %v1370, 4
      %v1373 = vrot.slane %v1298, 5
      %v1374 = vsel %vm777, %v1372, %v1373
      %v1375 = vrot.slane %v1299, 5
      %v1376 = vrot.slane %v1375, 4
      %v1377 = vrot.slane %v1300, 5
      %v1378 = vsel %vm777, %v1376, %v1377
      %v1379 = vrot.slane %v1377, 4
      %v1380 = vrot.slane %v1301, 5
      %v1381 = vsel %vm777, %v1379, %v1380
      %1382 = vrot.lane.b32.xlu0 %v1329, 20
      %v1383 = vpop.permute.xlu0 %1382
      %1384 = vrot.lane.b32.xlu0 %v1332, 20
      %v1385 = vpop.permute.xlu0 %1384
      %1386 = vrot.lane.b32.xlu0 %v1336, 20
      %v1387 = vpop.permute.xlu0 %1386
      %1388 = vrot.lane.b32.xlu0 %v1339, 20
      %v1389 = vpop.permute.xlu0 %1388
      %1390 = vrot.lane.b32.xlu0 %v1343, 20
      %v1391 = vpop.permute.xlu0 %1390
      %1392 = vrot.lane.b32.xlu0 %v1346, 20
      %v1393 = vpop.permute.xlu0 %1392
      %1394 = vrot.lane.b32.xlu0 %v1350, 20
      %v1395 = vpop.permute.xlu0 %1394
      %1396 = vrot.lane.b32.xlu0 %v1353, 20
      %v1397 = vpop.permute.xlu0 %1396
      %1398 = vrot.lane.b32.xlu0 %v1357, 20
      %v1399 = vpop.permute.xlu0 %1398
      %1400 = vrot.lane.b32.xlu0 %v1360, 20
      %v1401 = vpop.permute.xlu0 %1400
      %1402 = vrot.lane.b32.xlu0 %v1364, 20
      %v1403 = vpop.permute.xlu0 %1402
      %1404 = vrot.lane.b32.xlu0 %v1367, 20
      %v1405 = vpop.permute.xlu0 %1404
      %1406 = vrot.lane.b32.xlu0 %v1371, 20
      %v1407 = vpop.permute.xlu0 %1406
      %1408 = vrot.lane.b32.xlu0 %v1374, 20
      %v1409 = vpop.permute.xlu0 %1408
      %1410 = vrot.lane.b32.xlu0 %v1378, 20
      %v1411 = vpop.permute.xlu0 %1410
      %1412 = vrot.lane.b32.xlu0 %v1381, 20
      %v1413 = vpop.permute.xlu0 %1412
      %vm1430 = vcmask 191648
      %1431 = vst.msk [vmem:[#allocation3] sm:$0xf] %vm1430, %v1383
      %1432 = vst.msk [vmem:[#allocation3 + $0x4] sm:$0xf] %vm1430, %v1385
      %1433 = vst.msk [vmem:[#allocation3 + $0x8] sm:$0xf] %vm1430, %v1387
      %1434 = vst.msk [vmem:[#allocation3 + $0xc] sm:$0xf] %vm1430, %v1389
      %1435 = vst.msk [vmem:[#allocation3 + $0x10] sm:$0xf] %vm1430, %v1391
      %1436 = vst.msk [vmem:[#allocation3 + $0x14] sm:$0xf] %vm1430, %v1393
      %1437 = vst.msk [vmem:[#allocation3 + $0x18] sm:$0xf] %vm1430, %v1395
      %1438 = vst.msk [vmem:[#allocation3 + $0x1c] sm:$0xf] %vm1430, %v1397
      %1439 = vst.msk [vmem:[#allocation3 + $0x20] sm:$0xf] %vm1430, %v1399
      %1440 = vst.msk [vmem:[#allocation3 + $0x24] sm:$0xf] %vm1430, %v1401
      %1441 = vst.msk [vmem:[#allocation3 + $0x28] sm:$0xf] %vm1430, %v1403
      %1442 = vst.msk [vmem:[#allocation3 + $0x2c] sm:$0xf] %vm1430, %v1405
      %1443 = vst.msk [vmem:[#allocation3 + $0x30] sm:$0xf] %vm1430, %v1407
      %1444 = vst.msk [vmem:[#allocation3 + $0x34] sm:$0xf] %vm1430, %v1409
      %1445 = vst.msk [vmem:[#allocation3 + $0x38] sm:$0xf] %vm1430, %v1411
      %1446 = vst.msk [vmem:[#allocation3 + $0x3c] sm:$0xf] %vm1430, %v1413
      %s1447 = scalar_lea.vmem [#allocation2], 24
      %v1448 = vld [vmem:[%s1447] sm:$0xf]
      %v1449 = vld [vmem:[%s1447 + $0x4] sm:$0xf]
      %v1450 = vld [vmem:[%s1447 + $0xc] sm:$0xf]
      %v1451 = vld [vmem:[%s1447 + $0x10] sm:$0xf]
      %v1452 = vld [vmem:[%s1447 + $0x18] sm:$0xf]
      %v1453 = vld [vmem:[%s1447 + $0x1c] sm:$0xf]
      %v1454 = vld [vmem:[%s1447 + $0x24] sm:$0xf]
      %v1455 = vld [vmem:[%s1447 + $0x28] sm:$0xf]
      %v1456 = vld [vmem:[%s1447 + $0x30] sm:$0xf]
      %v1457 = vld [vmem:[%s1447 + $0x34] sm:$0xf]
      %v1458 = vld [vmem:[%s1447 + $0x3c] sm:$0xf]
      %v1459 = vld [vmem:[%s1447 + $0x40] sm:$0xf]
      %v1460 = vld [vmem:[%s1447 + $0x48] sm:$0xf]
      %v1461 = vld [vmem:[%s1447 + $0x4c] sm:$0xf]
      %v1462 = vld [vmem:[%s1447 + $0x54] sm:$0xf]
      %v1463 = vld [vmem:[%s1447 + $0x58] sm:$0xf]
      %1480 = vrot.lane.b32.xlu0 %v1448, 24
      %v1481 = vpop.permute.xlu0 %1480
      %1482 = vrot.lane.b32.xlu0 %v1449, 24
      %v1483 = vpop.permute.xlu0 %1482
      %1484 = vrot.lane.b32.xlu0 %v1450, 24
      %v1485 = vpop.permute.xlu0 %1484
      %1486 = vrot.lane.b32.xlu0 %v1451, 24
      %v1487 = vpop.permute.xlu0 %1486
      %1488 = vrot.lane.b32.xlu0 %v1452, 24
      %v1489 = vpop.permute.xlu0 %1488
      %1490 = vrot.lane.b32.xlu0 %v1453, 24
      %v1491 = vpop.permute.xlu0 %1490
      %1492 = vrot.lane.b32.xlu0 %v1454, 24
      %v1493 = vpop.permute.xlu0 %1492
      %1494 = vrot.lane.b32.xlu0 %v1455, 24
      %v1495 = vpop.permute.xlu0 %1494
      %1496 = vrot.lane.b32.xlu0 %v1456, 24
      %v1497 = vpop.permute.xlu0 %1496
      %1498 = vrot.lane.b32.xlu0 %v1457, 24
      %v1499 = vpop.permute.xlu0 %1498
      %1500 = vrot.lane.b32.xlu0 %v1458, 24
      %v1501 = vpop.permute.xlu0 %1500
      %1502 = vrot.lane.b32.xlu0 %v1459, 24
      %v1503 = vpop.permute.xlu0 %1502
      %1504 = vrot.lane.b32.xlu0 %v1460, 24
      %v1505 = vpop.permute.xlu0 %1504
      %1506 = vrot.lane.b32.xlu0 %v1461, 24
      %v1507 = vpop.permute.xlu0 %1506
      %1508 = vrot.lane.b32.xlu0 %v1462, 24
      %v1509 = vpop.permute.xlu0 %1508
      %1510 = vrot.lane.b32.xlu0 %v1463, 24
      %v1511 = vpop.permute.xlu0 %1510
      %vm1528 = vcmask 224448
      %1529 = vst.msk [vmem:[#allocation3] sm:$0xf] %vm1528, %v1481
      %1530 = vst.msk [vmem:[#allocation3 + $0x4] sm:$0xf] %vm1528, %v1483
      %1531 = vst.msk [vmem:[#allocation3 + $0x8] sm:$0xf] %vm1528, %v1485
      %1532 = vst.msk [vmem:[#allocation3 + $0xc] sm:$0xf] %vm1528, %v1487
      %1533 = vst.msk [vmem:[#allocation3 + $0x10] sm:$0xf] %vm1528, %v1489
      %1534 = vst.msk [vmem:[#allocation3 + $0x14] sm:$0xf] %vm1528, %v1491
      %1535 = vst.msk [vmem:[#allocation3 + $0x18] sm:$0xf] %vm1528, %v1493
      %1536 = vst.msk [vmem:[#allocation3 + $0x1c] sm:$0xf] %vm1528, %v1495
      %1537 = vst.msk [vmem:[#allocation3 + $0x20] sm:$0xf] %vm1528, %v1497
      %1538 = vst.msk [vmem:[#allocation3 + $0x24] sm:$0xf] %vm1528, %v1499
      %1539 = vst.msk [vmem:[#allocation3 + $0x28] sm:$0xf] %vm1528, %v1501
      %1540 = vst.msk [vmem:[#allocation3 + $0x2c] sm:$0xf] %vm1528, %v1503
      %1541 = vst.msk [vmem:[#allocation3 + $0x30] sm:$0xf] %vm1528, %v1505
      %1542 = vst.msk [vmem:[#allocation3 + $0x34] sm:$0xf] %vm1528, %v1507
      %1543 = vst.msk [vmem:[#allocation3 + $0x38] sm:$0xf] %vm1528, %v1509
      %1544 = vst.msk [vmem:[#allocation3 + $0x3c] sm:$0xf] %vm1528, %v1511
      %v1545 = vld [vmem:[%s1447] sm:$0xf]
      %v1546 = vld [vmem:[%s1447 + $0x4] sm:$0xf]
      %v1547 = vld [vmem:[%s1447 + $0x8] sm:$0x1]
      %v1548 = vld [vmem:[%s1447 + $0xc] sm:$0xf]
      %v1549 = vld [vmem:[%s1447 + $0x10] sm:$0xf]
      %v1550 = vld [vmem:[%s1447 + $0x14] sm:$0x1]
      %v1551 = vld [vmem:[%s1447 + $0x18] sm:$0xf]
      %v1552 = vld [vmem:[%s1447 + $0x1c] sm:$0xf]
      %v1553 = vld [vmem:[%s1447 + $0x20] sm:$0x1]
      %v1554 = vld [vmem:[%s1447 + $0x24] sm:$0xf]
      %v1555 = vld [vmem:[%s1447 + $0x28] sm:$0xf]
      %v1556 = vld [vmem:[%s1447 + $0x2c] sm:$0x1]
      %v1557 = vld [vmem:[%s1447 + $0x30] sm:$0xf]
      %v1558 = vld [vmem:[%s1447 + $0x34] sm:$0xf]
      %v1559 = vld [vmem:[%s1447 + $0x38] sm:$0x1]
      %v1560 = vld [vmem:[%s1447 + $0x3c] sm:$0xf]
      %v1561 = vld [vmem:[%s1447 + $0x40] sm:$0xf]
      %v1562 = vld [vmem:[%s1447 + $0x44] sm:$0x1]
      %v1563 = vld [vmem:[%s1447 + $0x48] sm:$0xf]
      %v1564 = vld [vmem:[%s1447 + $0x4c] sm:$0xf]
      %v1565 = vld [vmem:[%s1447 + $0x50] sm:$0x1]
      %v1566 = vld [vmem:[%s1447 + $0x54] sm:$0xf]
      %v1567 = vld [vmem:[%s1447 + $0x58] sm:$0xf]
      %v1568 = vld [vmem:[%s1447 + $0x5c] sm:$0x1]
      %v1570 = vshrl.u32 %v1545, 16
      %v1572 = vrot.slane %v1570, 4
      %v1573 = vshll.u32 %v1545, 16
      %v1575 = vrot.slane %v1573, 5
      %v1576 = vor.u32 %v1572, %v1575
      %v1577 = vrot.slane %v1576, 4
      %v1579 = vshll.u32 %v1546, 16
      %v1581 = vrot.slane %v1579, 5
      %v1582 = vsel %vm469, %v1577, %v1581
      %v1583 = vshrl.u32 %v1546, 16
      %v1585 = vrot.slane %v1583, 4
      %v1586 = vor.u32 %v1585, %v1581
      %v1587 = vrot.slane %v1586, 4
      %v1589 = vshll.u32 %v1547, 16
      %v1591 = vrot.slane %v1589, 5
      %v1592 = vsel %vm469, %v1587, %v1591
      %v1594 = vshrl.u32 %v1548, 16
      %v1596 = vrot.slane %v1594, 4
      %v1597 = vshll.u32 %v1548, 16
      %v1599 = vrot.slane %v1597, 5
      %v1600 = vor.u32 %v1596, %v1599
      %v1601 = vrot.slane %v1600, 4
      %v1603 = vshll.u32 %v1549, 16
      %v1605 = vrot.slane %v1603, 5
      %v1606 = vsel %vm469, %v1601, %v1605
      %v1607 = vshrl.u32 %v1549, 16
      %v1609 = vrot.slane %v1607, 4
      %v1610 = vor.u32 %v1609, %v1605
      %v1611 = vrot.slane %v1610, 4
      %v1613 = vshll.u32 %v1550, 16
      %v1615 = vrot.slane %v1613, 5
      %v1616 = vsel %vm469, %v1611, %v1615
      %v1618 = vshrl.u32 %v1551, 16
      %v1620 = vrot.slane %v1618, 4
      %v1621 = vshll.u32 %v1551, 16
      %v1623 = vrot.slane %v1621, 5
      %v1624 = vor.u32 %v1620, %v1623
      %v1625 = vrot.slane %v1624, 4
      %v1627 = vshll.u32 %v1552, 16
      %v1629 = vrot.slane %v1627, 5
      %v1630 = vsel %vm469, %v1625, %v1629
      %v1631 = vshrl.u32 %v1552, 16
      %v1633 = vrot.slane %v1631, 4
      %v1634 = vor.u32 %v1633, %v1629
      %v1635 = vrot.slane %v1634, 4
      %v1637 = vshll.u32 %v1553, 16
      %v1639 = vrot.slane %v1637, 5
      %v1640 = vsel %vm469, %v1635, %v1639
      %v1642 = vshrl.u32 %v1554, 16
      %v1644 = vrot.slane %v1642, 4
      %v1645 = vshll.u32 %v1554, 16
      %v1647 = vrot.slane %v1645, 5
      %v1648 = vor.u32 %v1644, %v1647
      %v1649 = vrot.slane %v1648, 4
      %v1651 = vshll.u32 %v1555, 16
      %v1653 = vrot.slane %v1651, 5
      %v1654 = vsel %vm469, %v1649, %v1653
      %v1655 = vshrl.u32 %v1555, 16
      %v1657 = vrot.slane %v1655, 4
      %v1658 = vor.u32 %v1657, %v1653
      %v1659 = vrot.slane %v1658, 4
      %v1661 = vshll.u32 %v1556, 16
      %v1663 = vrot.slane %v1661, 5
      %v1664 = vsel %vm469, %v1659, %v1663
      %v1666 = vshrl.u32 %v1557, 16
      %v1668 = vrot.slane %v1666, 4
      %v1669 = vshll.u32 %v1557, 16
      %v1671 = vrot.slane %v1669, 5
      %v1672 = vor.u32 %v1668, %v1671
      %v1673 = vrot.slane %v1672, 4
      %v1675 = vshll.u32 %v1558, 16
      %v1677 = vrot.slane %v1675, 5
      %v1678 = vsel %vm469, %v1673, %v1677
      %v1679 = vshrl.u32 %v1558, 16
      %v1681 = vrot.slane %v1679, 4
      %v1682 = vor.u32 %v1681, %v1677
      %v1683 = vrot.slane %v1682, 4
      %v1685 = vshll.u32 %v1559, 16
      %v1687 = vrot.slane %v1685, 5
      %v1688 = vsel %vm469, %v1683, %v1687
      %v1690 = vshrl.u32 %v1560, 16
      %v1692 = vrot.slane %v1690, 4
      %v1693 = vshll.u32 %v1560, 16
      %v1695 = vrot.slane %v1693, 5
      %v1696 = vor.u32 %v1692, %v1695
      %v1697 = vrot.slane %v1696, 4
      %v1699 = vshll.u32 %v1561, 16
      %v1701 = vrot.slane %v1699, 5
      %v1702 = vsel %vm469, %v1697, %v1701
      %v1703 = vshrl.u32 %v1561, 16
      %v1705 = vrot.slane %v1703, 4
      %v1706 = vor.u32 %v1705, %v1701
      %v1707 = vrot.slane %v1706, 4
      %v1709 = vshll.u32 %v1562, 16
      %v1711 = vrot.slane %v1709, 5
      %v1712 = vsel %vm469, %v1707, %v1711
      %v1714 = vshrl.u32 %v1563, 16
      %v1716 = vrot.slane %v1714, 4
      %v1717 = vshll.u32 %v1563, 16
      %v1719 = vrot.slane %v1717, 5
      %v1720 = vor.u32 %v1716, %v1719
      %v1721 = vrot.slane %v1720, 4
      %v1723 = vshll.u32 %v1564, 16
      %v1725 = vrot.slane %v1723, 5
      %v1726 = vsel %vm469, %v1721, %v1725
      %v1727 = vshrl.u32 %v1564, 16
      %v1729 = vrot.slane %v1727, 4
      %v1730 = vor.u32 %v1729, %v1725
      %v1731 = vrot.slane %v1730, 4
      %v1733 = vshll.u32 %v1565, 16
      %v1735 = vrot.slane %v1733, 5
      %v1736 = vsel %vm469, %v1731, %v1735
      %v1738 = vshrl.u32 %v1566, 16
      %v1740 = vrot.slane %v1738, 4
      %v1741 = vshll.u32 %v1566, 16
      %v1743 = vrot.slane %v1741, 5
      %v1744 = vor.u32 %v1740, %v1743
      %v1745 = vrot.slane %v1744, 4
      %v1747 = vshll.u32 %v1567, 16
      %v1749 = vrot.slane %v1747, 5
      %v1750 = vsel %vm469, %v1745, %v1749
      %v1751 = vshrl.u32 %v1567, 16
      %v1753 = vrot.slane %v1751, 4
      %v1754 = vor.u32 %v1753, %v1749
      %v1755 = vrot.slane %v1754, 4
      %v1757 = vshll.u32 %v1568, 16
      %v1759 = vrot.slane %v1757, 5
      %v1760 = vsel %vm469, %v1755, %v1759
      %1761 = vrot.lane.b32.xlu0 %v1582, 28
      %v1762 = vpop.permute.xlu0 %1761
      %1763 = vrot.lane.b32.xlu0 %v1592, 28
      %v1764 = vpop.permute.xlu0 %1763
      %1765 = vrot.lane.b32.xlu0 %v1606, 28
      %v1766 = vpop.permute.xlu0 %1765
      %1767 = vrot.lane.b32.xlu0 %v1616, 28
      %v1768 = vpop.permute.xlu0 %1767
      %1769 = vrot.lane.b32.xlu0 %v1630, 28
      %v1770 = vpop.permute.xlu0 %1769
      %1771 = vrot.lane.b32.xlu0 %v1640, 28
      %v1772 = vpop.permute.xlu0 %1771
      %1773 = vrot.lane.b32.xlu0 %v1654, 28
      %v1774 = vpop.permute.xlu0 %1773
      %1775 = vrot.lane.b32.xlu0 %v1664, 28
      %v1776 = vpop.permute.xlu0 %1775
      %1777 = vrot.lane.b32.xlu0 %v1678, 28
      %v1778 = vpop.permute.xlu0 %1777
      %1779 = vrot.lane.b32.xlu0 %v1688, 28
      %v1780 = vpop.permute.xlu0 %1779
      %1781 = vrot.lane.b32.xlu0 %v1702, 28
      %v1782 = vpop.permute.xlu0 %1781
      %1783 = vrot.lane.b32.xlu0 %v1712, 28
      %v1784 = vpop.permute.xlu0 %1783
      %1785 = vrot.lane.b32.xlu0 %v1726, 28
      %v1786 = vpop.permute.xlu0 %1785
      %1787 = vrot.lane.b32.xlu0 %v1736, 28
      %v1788 = vpop.permute.xlu0 %1787
      %1789 = vrot.lane.b32.xlu0 %v1750, 28
      %v1790 = vpop.permute.xlu0 %1789
      %1791 = vrot.lane.b32.xlu0 %v1760, 28
      %v1792 = vpop.permute.xlu0 %1791
      %vm1809 = vcmask 257248
      %1810 = vst.msk [vmem:[#allocation3] sm:$0xf] %vm1809, %v1762
      %1811 = vst.msk [vmem:[#allocation3 + $0x4] sm:$0xf] %vm1809, %v1764
      %1812 = vst.msk [vmem:[#allocation3 + $0x8] sm:$0xf] %vm1809, %v1766
      %1813 = vst.msk [vmem:[#allocation3 + $0xc] sm:$0xf] %vm1809, %v1768
      %1814 = vst.msk [vmem:[#allocation3 + $0x10] sm:$0xf] %vm1809, %v1770
      %1815 = vst.msk [vmem:[#allocation3 + $0x14] sm:$0xf] %vm1809, %v1772
      %1816 = vst.msk [vmem:[#allocation3 + $0x18] sm:$0xf] %vm1809, %v1774
      %1817 = vst.msk [vmem:[#allocation3 + $0x1c] sm:$0xf] %vm1809, %v1776
      %1818 = vst.msk [vmem:[#allocation3 + $0x20] sm:$0xf] %vm1809, %v1778
      %1819 = vst.msk [vmem:[#allocation3 + $0x24] sm:$0xf] %vm1809, %v1780
      %1820 = vst.msk [vmem:[#allocation3 + $0x28] sm:$0xf] %vm1809, %v1782
      %1821 = vst.msk [vmem:[#allocation3 + $0x2c] sm:$0xf] %vm1809, %v1784
      %1822 = vst.msk [vmem:[#allocation3 + $0x30] sm:$0xf] %vm1809, %v1786
      %1823 = vst.msk [vmem:[#allocation3 + $0x34] sm:$0xf] %vm1809, %v1788
      %1824 = vst.msk [vmem:[#allocation3 + $0x38] sm:$0xf] %vm1809, %v1790
      %1825 = vst.msk [vmem:[#allocation3 + $0x3c] sm:$0xf] %vm1809, %v1792
      %v1826 = vld [vmem:[%s1447] sm:$0xe]
      %v1827 = vld [vmem:[%s1447 + $0x4] sm:$0xf]
      %v1828 = vld [vmem:[%s1447 + $0x8] sm:$0x1]
      %v1829 = vld [vmem:[%s1447 + $0xc] sm:$0xe]
      %v1830 = vld [vmem:[%s1447 + $0x10] sm:$0xf]
      %v1831 = vld [vmem:[%s1447 + $0x14] sm:$0x1]
      %v1832 = vld [vmem:[%s1447 + $0x18] sm:$0xe]
      %v1833 = vld [vmem:[%s1447 + $0x1c] sm:$0xf]
      %v1834 = vld [vmem:[%s1447 + $0x20] sm:$0x1]
      %v1835 = vld [vmem:[%s1447 + $0x24] sm:$0xe]
      %v1836 = vld [vmem:[%s1447 + $0x28] sm:$0xf]
      %v1837 = vld [vmem:[%s1447 + $0x2c] sm:$0x1]
      %v1838 = vld [vmem:[%s1447 + $0x30] sm:$0xe]
      %v1839 = vld [vmem:[%s1447 + $0x34] sm:$0xf]
      %v1840 = vld [vmem:[%s1447 + $0x38] sm:$0x1]
      %v1841 = vld [vmem:[%s1447 + $0x3c] sm:$0xe]
      %v1842 = vld [vmem:[%s1447 + $0x40] sm:$0xf]
      %v1843 = vld [vmem:[%s1447 + $0x44] sm:$0x1]
      %v1844 = vld [vmem:[%s1447 + $0x48] sm:$0xe]
      %v1845 = vld [vmem:[%s1447 + $0x4c] sm:$0xf]
      %v1846 = vld [vmem:[%s1447 + $0x50] sm:$0x1]
      %v1847 = vld [vmem:[%s1447 + $0x54] sm:$0xe]
      %v1848 = vld [vmem:[%s1447 + $0x58] sm:$0xf]
      %v1849 = vld [vmem:[%s1447 + $0x5c] sm:$0x1]
      %v1874 = vrot.slane %v1826, 5
      %v1875 = vrot.slane %v1874, 4
      %v1876 = vrot.slane %v1827, 5
      %v1877 = vsel %vm777, %v1875, %v1876
      %v1878 = vrot.slane %v1876, 4
      %v1879 = vrot.slane %v1828, 5
      %v1880 = vsel %vm777, %v1878, %v1879
      %v1881 = vrot.slane %v1829, 5
      %v1882 = vrot.slane %v1881, 4
      %v1883 = vrot.slane %v1830, 5
      %v1884 = vsel %vm777, %v1882, %v1883
      %v1885 = vrot.slane %v1883, 4
      %v1886 = vrot.slane %v1831, 5
      %v1887 = vsel %vm777, %v1885, %v1886
      %v1888 = vrot.slane %v1832, 5
      %v1889 = vrot.slane %v1888, 4
      %v1890 = vrot.slane %v1833, 5
      %v1891 = vsel %vm777, %v1889, %v1890
      %v1892 = vrot.slane %v1890, 4
      %v1893 = vrot.slane %v1834, 5
      %v1894 = vsel %vm777, %v1892, %v1893
      %v1895 = vrot.slane %v1835, 5
      %v1896 = vrot.slane %v1895, 4
      %v1897 = vrot.slane %v1836, 5
      %v1898 = vsel %vm777, %v1896, %v1897
      %v1899 = vrot.slane %v1897, 4
      %v1900 = vrot.slane %v1837, 5
      %v1901 = vsel %vm777, %v1899, %v1900
      %v1902 = vrot.slane %v1838, 5
      %v1903 = vrot.slane %v1902, 4
      %v1904 = vrot.slane %v1839, 5
      %v1905 = vsel %vm777, %v1903, %v1904
      %v1906 = vrot.slane %v1904, 4
      %v1907 = vrot.slane %v1840, 5
      %v1908 = vsel %vm777, %v1906, %v1907
      %v1909 = vrot.slane %v1841, 5
      %v1910 = vrot.slane %v1909, 4
      %v1911 = vrot.slane %v1842, 5
      %v1912 = vsel %vm777, %v1910, %v1911
      %v1913 = vrot.slane %v1911, 4
      %v1914 = vrot.slane %v1843, 5
      %v1915 = vsel %vm777, %v1913, %v1914
      %v1916 = vrot.slane %v1844, 5
      %v1917 = vrot.slane %v1916, 4
      %v1918 = vrot.slane %v1845, 5
      %v1919 = vsel %vm777, %v1917, %v1918
      %v1920 = vrot.slane %v1918, 4
      %v1921 = vrot.slane %v1846, 5
      %v1922 = vsel %vm777, %v1920, %v1921
      %v1923 = vrot.slane %v1847, 5
      %v1924 = vrot.slane %v1923, 4
      %v1925 = vrot.slane %v1848, 5
      %v1926 = vsel %vm777, %v1924, %v1925
      %v1927 = vrot.slane %v1925, 4
      %v1928 = vrot.slane %v1849, 5
      %v1929 = vsel %vm777, %v1927, %v1928
      %1930 = vrot.lane.b32.xlu0 %v1877, 32
      %v1931 = vpop.permute.xlu0 %1930
      %1932 = vrot.lane.b32.xlu0 %v1880, 32
      %v1933 = vpop.permute.xlu0 %1932
      %1934 = vrot.lane.b32.xlu0 %v1884, 32
      %v1935 = vpop.permute.xlu0 %1934
      %1936 = vrot.lane.b32.xlu0 %v1887, 32
      %v1937 = vpop.permute.xlu0 %1936
      %1938 = vrot.lane.b32.xlu0 %v1891, 32
      %v1939 = vpop.permute.xlu0 %1938
      %1940 = vrot.lane.b32.xlu0 %v1894, 32
      %v1941 = vpop.permute.xlu0 %1940
      %1942 = vrot.lane.b32.xlu0 %v1898, 32
      %v1943 = vpop.permute.xlu0 %1942
      %1944 = vrot.lane.b32.xlu0 %v1901, 32
      %v1945 = vpop.permute.xlu0 %1944
      %1946 = vrot.lane.b32.xlu0 %v1905, 32
      %v1947 = vpop.permute.xlu0 %1946
      %1948 = vrot.lane.b32.xlu0 %v1908, 32
      %v1949 = vpop.permute.xlu0 %1948
      %1950 = vrot.lane.b32.xlu0 %v1912, 32
      %v1951 = vpop.permute.xlu0 %1950
      %1952 = vrot.lane.b32.xlu0 %v1915, 32
      %v1953 = vpop.permute.xlu0 %1952
      %1954 = vrot.lane.b32.xlu0 %v1919, 32
      %v1955 = vpop.permute.xlu0 %1954
      %1956 = vrot.lane.b32.xlu0 %v1922, 32
      %v1957 = vpop.permute.xlu0 %1956
      %1958 = vrot.lane.b32.xlu0 %v1926, 32
      %v1959 = vpop.permute.xlu0 %1958
      %1960 = vrot.lane.b32.xlu0 %v1929, 32
      %v1961 = vpop.permute.xlu0 %1960
      %vm1978 = vcmask 290048
      %1979 = vst.msk [vmem:[#allocation3] sm:$0xf] %vm1978, %v1931
      %1980 = vst.msk [vmem:[#allocation3 + $0x4] sm:$0xf] %vm1978, %v1933
      %1981 = vst.msk [vmem:[#allocation3 + $0x8] sm:$0xf] %vm1978, %v1935
      %1982 = vst.msk [vmem:[#allocation3 + $0xc] sm:$0xf] %vm1978, %v1937
      %1983 = vst.msk [vmem:[#allocation3 + $0x10] sm:$0xf] %vm1978, %v1939
      %1984 = vst.msk [vmem:[#allocation3 + $0x14] sm:$0xf] %vm1978, %v1941
      %1985 = vst.msk [vmem:[#allocation3 + $0x18] sm:$0xf] %vm1978, %v1943
      %1986 = vst.msk [vmem:[#allocation3 + $0x1c] sm:$0xf] %vm1978, %v1945
      %1987 = vst.msk [vmem:[#allocation3 + $0x20] sm:$0xf] %vm1978, %v1947
      %1988 = vst.msk [vmem:[#allocation3 + $0x24] sm:$0xf] %vm1978, %v1949
      %1989 = vst.msk [vmem:[#allocation3 + $0x28] sm:$0xf] %vm1978, %v1951
      %1990 = vst.msk [vmem:[#allocation3 + $0x2c] sm:$0xf] %vm1978, %v1953
      %1991 = vst.msk [vmem:[#allocation3 + $0x30] sm:$0xf] %vm1978, %v1955
      %1992 = vst.msk [vmem:[#allocation3 + $0x34] sm:$0xf] %vm1978, %v1957
      %1993 = vst.msk [vmem:[#allocation3 + $0x38] sm:$0xf] %vm1978, %v1959
      %1994 = vst.msk [vmem:[#allocation3 + $0x3c] sm:$0xf] %vm1978, %v1961
      %v1995 = vld [vmem:[#allocation3] sm:$0xf]
      %v1996 = vld [vmem:[#allocation3 + $0x4] sm:$0xf]
      %v1997 = vld [vmem:[#allocation3 + $0x8] sm:$0xf]
      %v1998 = vld [vmem:[#allocation3 + $0xc] sm:$0xf]
      %v1999 = vld [vmem:[#allocation3 + $0x10] sm:$0xf]
      %v2000 = vld [vmem:[#allocation3 + $0x14] sm:$0xf]
      %v2001 = vld [vmem:[#allocation3 + $0x18] sm:$0xf]
      %v2002 = vld [vmem:[#allocation3 + $0x1c] sm:$0xf]
      %v2003 = vld [vmem:[#allocation3 + $0x20] sm:$0xf]
      %v2004 = vld [vmem:[#allocation3 + $0x24] sm:$0xf]
      %v2005 = vld [vmem:[#allocation3 + $0x28] sm:$0xf]
      %v2006 = vld [vmem:[#allocation3 + $0x2c] sm:$0xf]
      %v2007 = vld [vmem:[#allocation3 + $0x30] sm:$0xf]
      %v2008 = vld [vmem:[#allocation3 + $0x34] sm:$0xf]
      %v2009 = vld [vmem:[#allocation3 + $0x38] sm:$0xf]
      %v2010 = vld [vmem:[#allocation3 + $0x3c] sm:$0xf]
      %v2011 = vld [vmem:[%s2] sm:$0xf]
      %v2012 = vld [vmem:[%s2 + $0x4] sm:$0xf]
      %v2013 = vld [vmem:[%s2 + $0x8] sm:$0xf]
      %v2014 = vld [vmem:[%s2 + $0xc] sm:$0xf]
      %v2015 = vld [vmem:[%s2 + $0x10] sm:$0x3]
      %v2032 = vunpack.c.l.b16 %v1995
      %v2033 = vunpack.c.l.b16 %v1996
      %v2034 = vunpack.c.l.b16 %v1997
      %v2035 = vunpack.c.l.b16 %v1998
      %v2036 = vunpack.c.l.b16 %v1999
      %v2037 = vunpack.c.l.b16 %v2000
      %v2038 = vunpack.c.l.b16 %v2001
      %v2039 = vunpack.c.l.b16 %v2002
      %v2040 = vunpack.c.l.b16 %v2003
      %v2041 = vunpack.c.l.b16 %v2004
      %v2042 = vunpack.c.l.b16 %v2005
      %v2043 = vunpack.c.l.b16 %v2006
      %v2044 = vunpack.c.l.b16 %v2007
      %v2045 = vunpack.c.l.b16 %v2008
      %v2046 = vunpack.c.l.b16 %v2009
      %v2047 = vunpack.c.l.b16 %v2010
      %v2048 = vpack.c.b16 %v2033, %v2032
      %v2049 = vpack.c.b16 %v2035, %v2034
      %v2050 = vpack.c.b16 %v2037, %v2036
      %v2051 = vpack.c.b16 %v2039, %v2038
      %v2052 = vpack.c.b16 %v2041, %v2040
      %v2053 = vpack.c.b16 %v2043, %v2042
      %v2054 = vpack.c.b16 %v2045, %v2044
      %v2055 = vpack.c.b16 %v2047, %v2046
      %v2061 = vunpack.c.l.b16 %v2011
      %v2062 = vunpack.c.l.b16 %v2012
      %v2063 = vunpack.c.l.b16 %v2013
      %v2064 = vunpack.c.l.b16 %v2014
      %v2065 = vunpack.c.l.b16 %v2015
      %v2066 = vpack.c.b16 %v2062, %v2061
      %v2067 = vpack.c.b16 %v2064, %v2063
      %v2068 = vpack.c.b16 %v2065, %v2065
      %vm2071 = vcmask 293888
      %v2073 = vsel %vm2071, %v2048, 0
      %v2076 = vsel %vm2071, %v2049, 0
      %v2079 = vsel %vm2071, %v2050, 0
      %v2082 = vsel %vm2071, %v2051, 0
      %v2085 = vsel %vm2071, %v2052, 0
      %v2088 = vsel %vm2071, %v2053, 0
      %v2091 = vsel %vm2071, %v2054, 0
      %v2094 = vsel %vm2071, %v2055, 0
      %vm2096 = vcmask 1041408
      %v2098 = vsel %vm2096, %v2068, 0
      %2100 = vmatpush.bf16.msra.mxu0 0
      %2101 = vmatpush.bf16.msra.mxu0 0
      %2102 = vmatpush.bf16.msra.mxu0 0
      %2103 = vmatpush.bf16.msra.mxu0 0
      %2104 = vmatpush.bf16.msra.mxu0 0
      %2105 = vmatpush.bf16.msra.mxu0 %v2098
      %2106 = vmatpush.bf16.msra.mxu0 %v2067
      %2107 = vmatpush.bf16.msra.mxu0 %v2066
      %2108 = vmatmul.bf16.gmra.mxu0 %v2073
      %v2109 = vpop.f32.mrf.mxu0
      %v2110 = vadd.f32 0.0, %v2109
      %v2111 = vpop.f32.mrf.mxu0
      %v2112 = vadd.f32 0.0, %v2111
      %2113 = vmatmul.bf16.gmra.mxu0 %v2076
      %v2114 = vpop.f32.mrf.mxu0
      %v2115 = vadd.f32 0.0, %v2114
      %v2116 = vpop.f32.mrf.mxu0
      %v2117 = vadd.f32 0.0, %v2116
      %2118 = vmatmul.bf16.gmra.mxu0 %v2079
      %v2119 = vpop.f32.mrf.mxu0
      %v2120 = vadd.f32 0.0, %v2119
      %v2121 = vpop.f32.mrf.mxu0
      %v2122 = vadd.f32 0.0, %v2121
      %2123 = vmatmul.bf16.gmra.mxu0 %v2082
      %v2124 = vpop.f32.mrf.mxu0
      %v2125 = vadd.f32 0.0, %v2124
      %v2126 = vpop.f32.mrf.mxu0
      %v2127 = vadd.f32 0.0, %v2126
      %2128 = vmatmul.bf16.gmra.mxu0 %v2085
      %v2129 = vpop.f32.mrf.mxu0
      %v2130 = vadd.f32 0.0, %v2129
      %v2131 = vpop.f32.mrf.mxu0
      %v2132 = vadd.f32 0.0, %v2131
      %2133 = vmatmul.bf16.gmra.mxu0 %v2088
      %v2134 = vpop.f32.mrf.mxu0
      %v2135 = vadd.f32 0.0, %v2134
      %v2136 = vpop.f32.mrf.mxu0
      %v2137 = vadd.f32 0.0, %v2136
      %2138 = vmatmul.bf16.gmra.mxu0 %v2091
      %v2139 = vpop.f32.mrf.mxu0
      %v2140 = vadd.f32 0.0, %v2139
      %v2141 = vpop.f32.mrf.mxu0
      %v2142 = vadd.f32 0.0, %v2141
      %2143 = vmatmul.bf16.gmra.mxu0 %v2094
      %v2144 = vpop.f32.mrf.mxu0
      %v2145 = vadd.f32 0.0, %v2144
      %v2146 = vpop.f32.mrf.mxu0
      %v2147 = vadd.f32 0.0, %v2146
      %2148 = vdwg.mxu0
      %v2149 = vld [vmem:[%s3] sm:$0x1]
      %v2151 = vperm.slane %v2149, 0
      %v2153 = vmul.f32 %v2110, %v2151
      %v2154 = vmul.f32 %v2112, %v2151
      %v2155 = vmul.f32 %v2115, %v2151
      %v2156 = vmul.f32 %v2117, %v2151
      %v2157 = vmul.f32 %v2120, %v2151
      %v2158 = vmul.f32 %v2122, %v2151
      %v2159 = vmul.f32 %v2125, %v2151
      %v2160 = vmul.f32 %v2127, %v2151
      %v2161 = vmul.f32 %v2130, %v2151
      %v2162 = vmul.f32 %v2132, %v2151
      %v2163 = vmul.f32 %v2135, %v2151
      %v2164 = vmul.f32 %v2137, %v2151
      %v2165 = vmul.f32 %v2140, %v2151
      %v2166 = vmul.f32 %v2142, %v2151
      %v2167 = vmul.f32 %v2145, %v2151
      %v2168 = vmul.f32 %v2147, %v2151
      %v2169 = vld [vmem:[%s4] sm:$0x1]
      %v2171 = vperm.slane %v2169, 0
      %v2173 = vadd.f32 %v2153, %v2171
      %v2174 = vadd.f32 %v2154, %v2171
      %v2175 = vadd.f32 %v2155, %v2171
      %v2176 = vadd.f32 %v2156, %v2171
      %v2177 = vadd.f32 %v2157, %v2171
      %v2178 = vadd.f32 %v2158, %v2171
      %v2179 = vadd.f32 %v2159, %v2171
      %v2180 = vadd.f32 %v2160, %v2171
      %v2181 = vadd.f32 %v2161, %v2171
      %v2182 = vadd.f32 %v2162, %v2171
      %v2183 = vadd.f32 %v2163, %v2171
      %v2184 = vadd.f32 %v2164, %v2171
      %v2185 = vadd.f32 %v2165, %v2171
      %v2186 = vadd.f32 %v2166, %v2171
      %v2187 = vadd.f32 %v2167, %v2171
      %v2188 = vadd.f32 %v2168, %v2171
      %vm2189 = vcmask 64512
      %2190 = vst.msk [vmem:[%s345] sm:$0xff] %vm2189, %v2173
      %2191 = vst.msk [vmem:[%s345 + $0x8] sm:$0xff] %vm2189, %v2174
      %2192 = vst.msk [vmem:[%s345 + $0x10] sm:$0xff] %vm2189, %v2175
      %2193 = vst.msk [vmem:[%s345 + $0x18] sm:$0xff] %vm2189, %v2176
      %2194 = vst.msk [vmem:[%s345 + $0x20] sm:$0xff] %vm2189, %v2177
      %2195 = vst.msk [vmem:[%s345 + $0x28] sm:$0xff] %vm2189, %v2178
      %2196 = vst.msk [vmem:[%s345 + $0x30] sm:$0xff] %vm2189, %v2179
      %2197 = vst.msk [vmem:[%s345 + $0x38] sm:$0xff] %vm2189, %v2180
      %2198 = vst.msk [vmem:[%s345 + $0x40] sm:$0xff] %vm2189, %v2181
      %2199 = vst.msk [vmem:[%s345 + $0x48] sm:$0xff] %vm2189, %v2182
      %2200 = vst.msk [vmem:[%s345 + $0x50] sm:$0xff] %vm2189, %v2183
      %2201 = vst.msk [vmem:[%s345 + $0x58] sm:$0xff] %vm2189, %v2184
      %2202 = vst.msk [vmem:[%s345 + $0x60] sm:$0xff] %vm2189, %v2185
      %2203 = vst.msk [vmem:[%s345 + $0x68] sm:$0xff] %vm2189, %v2186
      %2204 = vst.msk [vmem:[%s345 + $0x70] sm:$0xff] %vm2189, %v2187
      %2205 = vst.msk [vmem:[%s345 + $0x78] sm:$0xff] %vm2189, %v2188
      %s2206 = smul.u32 8, %s21
      %p2207 = scmp.lt.s32.totalorder %s20, 1
      %s2208 = scalar_select %p2207, %s20, 1
      %p2209 = scmp.lt.s32.totalorder %s2206, 15
      %s2210 = scalar_select %p2209, %s2206, 15
      %s2211 = smul.addr %s2210, 2
      %s2212 = smul.addr %s2208, 32
      %s2213 = sadd.s32 %s2211, %s2212
      %s2214 = smul.addr %s2213, 8
      %s2215 = scalar_lea.vmem %s5, %s2214
      // Predicated region
      $region41: #{rescale_layer_forward.3} parent=39 // pred_check
        %p2216 = pneg %p171
      $region42: #{rescale_layer_forward.3} parent=39 // pred_check_branch
        %2218 = sbr.rel (%p2216) target = $region44
      $region43: #{rescale_layer_forward.3} parent=39 // pred_region
        %s2219 = smul.u32 8, %s21
      $region44: #{rescale_layer_forward.3} parent=39 // pred_fallthru
        _
    $region40: #{rescale_layer_forward.3} parent=5 // pred_fallthru
      _
    %p2220 = scmp.le.s32.totalorder 2, %s11
    // Predicated region
    $region45: #{rescale_layer_forward.3} parent=5 // pred_check
      %p2221 = pneg %p2220
    $region46: #{rescale_layer_forward.3} parent=5 // pred_check_branch
      %2223 = sbr.rel (%p2221) target = $region48
    $region47: #{rescale_layer_forward.3} parent=5 // pred_region
      %s2224 = ssub.s32 %s11, 2
      // Predicated region
      $region49: #{rescale_layer_forward.3} parent=47 // pred_check
        %p2225 = pneg %p177
      $region50: #{rescale_layer_forward.3} parent=47 // pred_check_branch
        %2227 = sbr.rel (%p2225) target = $region52
      $region51: #{rescale_layer_forward.3} parent=47 // pred_region
        %s2228 = smul.u32 8, %s23
        %p2229 = scmp.lt.s32.totalorder %s22, 1
        %s2230 = scalar_select %p2229, %s22, 1
        %p2231 = scmp.lt.s32.totalorder %s2228, 15
        %s2232 = scalar_select %p2231, %s2228, 15
        %s2233 = smul.addr %s2232, 2
        %s2234 = smul.addr %s2230, 32
        %s2235 = sadd.s32 %s2233, %s2234
        %s2236 = smul.addr %s2235, 8
        %s2237 = scalar_lea.vmem %s5, %s2236
      $region52: #{rescale_layer_forward.3} parent=47 // pred_fallthru
        _
    $region48: #{rescale_layer_forward.3} parent=5 // pred_fallthru
      _
  $region6: #{rescale_layer_forward.3} parent=0 // loop_footer
    %s15 = sadd.s32 1, %s11
  $region7: #{rescale_layer_forward.3} parent=0 // loop_footer_branch
    %10 = sbr.rel target = $region3
  $region8: #{rescale_layer_forward.3} parent=0 // loop_exit
    _

</llo_original>
